<compile_context>
chip_gen: v7x
topology: tpu7x:2x2x1
jax: 0.10.0
libtpu: 0.0.40
codegen_flags: <defaults>
</compile_context>

<pallas_src>
import functools

import jax
import jax.numpy as jnp
from jax import lax
from jax.experimental import pallas as pl
from jax.experimental.pallas import tpu as pltpu


_VMEM_LIMIT = 48 * 1024 * 1024   # below v7x's 64 MiB/TC and v5e/v6e physical


def _round_up(x, m):
    return ((x + m - 1) // m) * m


def _lane_pad(c):
    return _round_up(max(c, 128), 128)


def _bn_fold(gamma, beta, mean, var, eps=1e-5):
    scale = gamma / jnp.sqrt(var + eps)
    bias = beta - mean * scale
    return scale, bias


# ----------------------------------------------------------------------------
# Fused 1x1-conv GEMM kernels:  out = act( x @ w + bias [+ residual] )
#   BN scale is pre-folded into w; bias is the folded BN bias.
# ----------------------------------------------------------------------------
def _gemm_bn_act_kernel(x_ref, w_ref, bias_ref, o_ref, acc_ref, *, relu):
    @pl.when(pl.program_id(2) == 0)
    def _():
        acc_ref[...] = jnp.zeros_like(acc_ref)

    acc_ref[...] += jnp.dot(x_ref[...], w_ref[...],
                            preferred_element_type=jnp.float32)

    @pl.when(pl.program_id(2) == pl.num_programs(2) - 1)
    def _():
        out = acc_ref[...] + bias_ref[...]
        if relu:
            out = jnp.maximum(out, 0.0)
        o_ref[...] = out.astype(o_ref.dtype)


def _gemm_bn_res_relu_kernel(x_ref, w_ref, bias_ref, res_ref, o_ref, acc_ref):
    @pl.when(pl.program_id(2) == 0)
    def _():
        acc_ref[...] = jnp.zeros_like(acc_ref)

    acc_ref[...] += jnp.dot(x_ref[...], w_ref[...],
                            preferred_element_type=jnp.float32)

    @pl.when(pl.program_id(2) == pl.num_programs(2) - 1)
    def _():
        out = acc_ref[...] + bias_ref[...] + res_ref[...].astype(jnp.float32)
        o_ref[...] = jnp.maximum(out, 0.0).astype(o_ref.dtype)


def fused_gemm_bn(x, w, bias, *, relu, residual=None,
                  tm=256, tn=256, tk_max=512):
    """x: [M, K] bf16, w: [K, Np] bf16 (BN scale folded), bias: [Np] f32."""
    M, K = x.shape
    K2, Np = w.shape
    assert K == K2
    tm = min(tm, _round_up(M, 8))
    tn = min(tn, Np)
    if K <= tk_max:
        tk = K                      # single full-K block
    else:                           # K grid axis must divide exactly
        tk = next((t for t in (512, 256, 128) if K % t == 0), K)
    grid = (pl.cdiv(M, tm), pl.cdiv(Np, tn), K // tk)

    bias2 = bias.reshape(1, Np).astype(jnp.float32)

    in_specs = [
        pl.BlockSpec((tm, tk), lambda i, j, k: (i, k)),
        pl.BlockSpec((tk, tn), lambda i, j, k: (k, j)),
        pl.BlockSpec((1, tn), lambda i, j, k: (0, j)),
    ]
    args = [x, w, bias2]
    if residual is None:
        kernel = functools.partial(_gemm_bn_act_kernel, relu=relu)
    else:
        kernel = _gemm_bn_res_relu_kernel
        in_specs.append(pl.BlockSpec((tm, tn), lambda i, j, k: (i, j)))
        args.append(residual)

    return pl.pallas_call(
        kernel,
        out_shape=jax.ShapeDtypeStruct((M, Np), jnp.bfloat16),
        grid=grid,
        in_specs=in_specs,
        out_specs=pl.BlockSpec((tm, tn), lambda i, j, k: (i, j)),
        scratch_shapes=[pltpu.VMEM((tm, tn), jnp.float32)],
        compiler_params=pltpu.CompilerParams(
            dimension_semantics=("parallel", "parallel", "arbitrary"),
            vmem_limit_bytes=_VMEM_LIMIT),
    )(*args)


def conv1x1_bn(x_rows, w_oihw, bn, *, relu, residual=None):
    """x_rows: [M, K] bf16 (K may be wider than the conv's Cin, zero-padded)."""
    Cout, Cin = w_oihw.shape[0], w_oihw.shape[1]
    K = x_rows.shape[-1]
    Np = _lane_pad(Cout)
    scale, bias = _bn_fold(*bn)
    w = w_oihw[:, :, 0, 0].T * scale[None, :]            # (Cin, Cout), BN folded
    w = jnp.pad(w, ((0, K - Cin), (0, Np - Cout))).astype(jnp.bfloat16)
    bias_p = jnp.pad(bias, (0, Np - Cout)).astype(jnp.float32)
    return fused_gemm_bn(x_rows, w, bias_p, relu=relu, residual=residual)


# ----------------------------------------------------------------------------
# Fused 3x3 conv + BN + ReLU with in-kernel im2col (9 accumulated taps).
# ----------------------------------------------------------------------------
def _conv3x3_bn_relu_kernel(x_ref, w_ref, bias_ref, o_ref, *, stride, Ho, Wo):
    """x_ref: (s*s, Ho+2, Wo+2, Cp) parity-split padded image.
       w_ref: (9, Cp, tn); bias_ref: (1, tn); o_ref: (Ho*Wo, tn)."""
    s = stride
    Cp = x_ref.shape[-1]
    acc = jnp.zeros((Ho * Wo, o_ref.shape[-1]), jnp.float32)
    for kh in range(3):              # 9 taps, fully unrolled: the im2col
        for kw in range(3):          # matrix never materializes in HBM
            pi = (kh % s) * s + (kw % s)
            oh, ow = kh // s, kw // s
            win = x_ref[pi, oh:oh + Ho, ow:ow + Wo, :]
            acc = acc + jnp.dot(win.reshape(Ho * Wo, Cp),
                                w_ref[kh * 3 + kw],
                                preferred_element_type=jnp.float32)
    out = acc + bias_ref[...]
    o_ref[...] = jnp.maximum(out, 0.0).astype(o_ref.dtype)


def conv3x3_bn_relu(x_rows, N, H, W, w_oihw, bn, *, stride):
    """x_rows: [N*H*W, Cp] bf16 -> ([N*Ho*Wo, Np] bf16, Ho, Wo)."""
    Cp = x_rows.shape[-1]
    Cout, Cin = w_oihw.shape[0], w_oihw.shape[1]
    Np = _lane_pad(Cout)
    s = stride
    Ho = (H - 1) // s + 1
    Wo = (W - 1) // s + 1
    Hs, Ws = Ho + 2, Wo + 2

    # Zero-pad spatially (conv pad=1 plus filler so the parity split is
    # uniform), then split into s*s parity grids so each tap (kh, kw) becomes
    # a contiguous (Ho, Wo) window:  xs[n, p*s+q, i, j] = xpad[n, i*s+p, j*s+q].
    x = x_rows.reshape(N, H, W, Cp)
    xp = jnp.pad(x, ((0, 0), (1, s * Hs - H - 1), (1, s * Ws - W - 1), (0, 0)))
    xs = xp.reshape(N, Hs, s, Ws, s, Cp).transpose(0, 2, 4, 1, 3, 5)
    xs = xs.reshape(N * s * s, Hs, Ws, Cp)

    # Weights: OIHW -> (9, Cp, Np), BN scale folded, zero-padded channels.
    scale, bias = _bn_fold(*bn)
    w = jnp.transpose(w_oihw, (2, 3, 1, 0)).reshape(9, Cin, Cout)
    w = w * scale[None, None, :]
    w = jnp.pad(w, ((0, 0), (0, Cp - Cin), (0, Np - Cout))).astype(jnp.bfloat16)
    bias_p = jnp.pad(bias, (0, Np - Cout)).reshape(1, Np).astype(jnp.float32)

    tn = min(256, Np)
    grid = (N, pl.cdiv(Np, tn))
    out = pl.pallas_call(
        functools.partial(_conv3x3_bn_relu_kernel, stride=s, Ho=Ho, Wo=Wo),
        out_shape=jax.ShapeDtypeStruct((N * Ho * Wo, Np), jnp.bfloat16),
        grid=grid,
        in_specs=[
            pl.BlockSpec((s * s, Hs, Ws, Cp), lambda b, j: (b, 0, 0, 0)),
            pl.BlockSpec((9, Cp, tn), lambda b, j: (0, 0, j)),
            pl.BlockSpec((1, tn), lambda b, j: (0, j)),
        ],
        out_specs=pl.BlockSpec((Ho * Wo, tn), lambda b, j: (b, j)),
        compiler_params=pltpu.CompilerParams(
            dimension_semantics=("parallel", "parallel"),
            vmem_limit_bytes=_VMEM_LIMIT),
    )(xs, w, bias_p)
    return out, Ho, Wo


# ----------------------------------------------------------------------------
# Bottleneck forward
# ----------------------------------------------------------------------------
def bottleneck_forward(x_nchw, params, *, stride=1, stride_at_1x1=False):
    s1, s3 = (stride, 1) if stride_at_1x1 else (1, stride)
    N, Cin, H, W = x_nchw.shape
    out_chan = params["conv3_w"].shape[0]
    out_p = _lane_pad(out_chan)
    has_down = params.get("down_w") is not None
    assert has_down or (stride == 1 and Cin == out_chan)

    x = jnp.transpose(x_nchw, (0, 2, 3, 1)).astype(jnp.bfloat16)   # NHWC bf16

    # conv1 (1x1, stride s1) + bn1 + relu
    x1 = x[:, ::s1, ::s1, :] if s1 > 1 else x
    _, H1, W1, _ = x1.shape
    out = conv1x1_bn(x1.reshape(N * H1 * W1, Cin),
                     params["conv1_w"], params["bn1"], relu=True)

    # conv2 (3x3, stride s3, pad 1) + bn2 + relu — im2col fused in-kernel
    out, Ho, Wo = conv3x3_bn_relu(out, N, H1, W1,
                                  params["conv2_w"], params["bn2"], stride=s3)

    # residual path (rows laid out identically to the conv3 output)
    if has_down:
        xd = x[:, ::stride, ::stride, :] if stride > 1 else x
        res = conv1x1_bn(xd.reshape(N * Ho * Wo, Cin),
                         params["down_w"], params["down_bn"], relu=False)
    else:
        # TODO(synk): identity residual could be read directly inside the
        # conv3 kernel (extra input) to avoid this channel-pad copy.
        res = jnp.pad(x.reshape(N * H * W, Cin), ((0, 0), (0, out_p - Cin)))

    # conv3 + bn3 + residual add + final relu, all fused in one kernel
    out = conv1x1_bn(out, params["conv3_w"], params["bn3"],
                     relu=True, residual=res)

    out = out.reshape(N, Ho, Wo, out_p)[:, :, :, :out_chan].astype(jnp.float32)
    return jnp.transpose(out, (0, 3, 1, 2))                        # NHWC->NCHW


_bottleneck_jit = jax.jit(bottleneck_forward,
                          static_argnames=("stride", "stride_at_1x1"))


# ----------------------------------------------------------------------------
# Pure-JAX reference (lax.conv) for validation
# ----------------------------------------------------------------------------
def _ref_bn(x, gamma, beta, mean, var, eps=1e-5):
    s = gamma / jnp.sqrt(var + eps)
    b = beta - mean * s
    return x * s[None, :, None, None] + b[None, :, None, None]


def bottleneck_ref(x, p, *, stride=1, stride_at_1x1=False):
    s1, s3 = (stride, 1) if stride_at_1x1 else (1, stride)
    dn = ("NCHW", "OIHW", "NCHW")
    out = lax.conv_general_dilated(x, p["conv1_w"], (s1, s1), "VALID",
                                   dimension_numbers=dn)
    out = jnp.maximum(_ref_bn(out, *p["bn1"]), 0.0)
    out = lax.conv_general_dilated(out, p["conv2_w"], (s3, s3),
                                   ((1, 1), (1, 1)), dimension_numbers=dn)
    out = jnp.maximum(_ref_bn(out, *p["bn2"]), 0.0)
    out = lax.conv_general_dilated(out, p["conv3_w"], (1, 1), "VALID",
                                   dimension_numbers=dn)
    out = _ref_bn(out, *p["bn3"])
    if p.get("down_w") is not None:
        res = lax.conv_general_dilated(x, p["down_w"], (stride, stride),
                                       "VALID", dimension_numbers=dn)
        res = _ref_bn(res, *p["down_bn"])
    else:
        res = x
    return jnp.maximum(out + res, 0.0)


# ----------------------------------------------------------------------------
def make_params(key, in_chan, mid_chan, stride):
    out_chan = 4 * mid_chan
    ks = jax.random.split(key, 16)

    def conv_w(k, o, i, kh, kw):
        return jax.random.normal(k, (o, i, kh, kw), jnp.float32) * 0.1

    def bn_p(k, c):
        k1, k2, k3, k4 = jax.random.split(k, 4)
        gamma = 1.0 + 0.1 * jax.random.normal(k1, (c,), jnp.float32)
        beta = 0.1 * jax.random.normal(k2, (c,), jnp.float32)
        mean = 0.1 * jax.random.normal(k3, (c,), jnp.float32)
        var = 0.5 + jnp.abs(jax.random.normal(k4, (c,), jnp.float32))
        return (gamma, beta, mean, var)

    p = {
        "conv1_w": conv_w(ks[0], mid_chan, in_chan, 1, 1),
        "bn1": bn_p(ks[1], mid_chan),
        "conv2_w": conv_w(ks[2], mid_chan, mid_chan, 3, 3),
        "bn2": bn_p(ks[3], mid_chan),
        "conv3_w": conv_w(ks[4], out_chan, mid_chan, 1, 1),
        "bn3": bn_p(ks[5], out_chan),
        "down_w": None,
        "down_bn": None,
    }
    if in_chan != out_chan or stride != 1:
        p["down_w"] = conv_w(ks[6], out_chan, in_chan, 1, 1)
        p["down_bn"] = bn_p(ks[7], out_chan)
    return p


def _check(key, *, N, in_chan, H, W, mid, stride):
    k_x, k_p = jax.random.split(key)
    x = jax.random.normal(k_x, (N, in_chan, H, W), jnp.float32)
    params = make_params(k_p, in_chan, mid, stride)

    out = jax.block_until_ready(_bottleneck_jit(x, params, stride=stride))
    ref = jax.block_until_ready(bottleneck_ref(x, params, stride=stride))

    Ho = (H - 1) // stride + 1
    assert out.shape == (N, 4 * mid, Ho, Ho), out.shape
    # bf16 matmul inputs / intermediates -> compare with relaxed tolerance.
    err = float(jnp.max(jnp.abs(out - ref)) / (jnp.max(jnp.abs(ref)) + 1e-6))
    assert err < 2.5e-2, f"relative error too large: {err}"


if __name__ == "__main__":
    key = jax.random.PRNGKey(0)
    k1, k2 = jax.random.split(key)
    # stride-2 block with projection (downsample) shortcut
    _check(k1, N=2, in_chan=16, H=16, W=16, mid=8, stride=2)
    # stride-1 block with identity shortcut (in_chan == 4*mid)
    _check(k2, N=2, in_chan=32, H=16, W=16, mid=8, stride=1)
    print("KERNEL_OK")
</pallas_src>

<mosaic_0001>
module attributes {stable_mosaic.version = 11 : i64} {
  func.func @_gemm_bn_act_kernel(%arg0: i32, %arg1: i32, %arg2: i32, %arg3: memref<128x16xbf16, #tpu.memory_space<vmem>>, %arg4: memref<16x128xbf16, #tpu.memory_space<vmem>>, %arg5: memref<1x128xf32, #tpu.memory_space<vmem>>, %arg6: memref<128x128xbf16, #tpu.memory_space<vmem>>, %arg7: memref<128x128xf32, #tpu.memory_space<vmem>>) attributes {dimension_semantics = [#tpu.dimension_semantics<parallel>, #tpu.dimension_semantics<parallel>, #tpu.dimension_semantics<arbitrary>], iteration_bounds = array<i64: 1, 1, 1>, scalar_prefetch = 0 : i64, scratch_operands = 1 : i64, tpu.core_type = #tpu.core_type<tc>, window_params = [{transform_indices = @transform_0, window_bounds = array<i64: 128, 16>}, {transform_indices = @transform_1, window_bounds = array<i64: 16, 128>}, {transform_indices = @transform_2, window_bounds = array<i64: 1, 128>}, {transform_indices = @transform_3, window_bounds = array<i64: 128, 128>}]} {
    %c0_i32 = arith.constant 0 : i32
    %0 = arith.cmpi eq, %arg2, %c0_i32 : i32
    %1 = arith.extui %0 : i1 to i32
    %c0_i32_0 = arith.constant 0 : i32
    %2 = arith.cmpi ne, %1, %c0_i32_0 : i32
    scf.if %2 {
      %cst_10 = arith.constant 0.000000e+00 : f32
      %12 = vector.broadcast %cst_10 : f32 to vector<128x128xf32>
      %c0_11 = arith.constant 0 : index
      %c0_12 = arith.constant 0 : index
      %13 = vector.load %arg7[%c0_11, %c0_12] : memref<128x128xf32, #tpu.memory_space<vmem>>, vector<128x128xf32>
      tpu.vector_store %arg7[%c0_11, %c0_12], %12 {strides = array<i32>} : memref<128x128xf32, #tpu.memory_space<vmem>>, vector<128x128xf32>,
    } else {
    }
    %c0 = arith.constant 0 : index
    %c0_1 = arith.constant 0 : index
    %3 = vector.load %arg7[%c0, %c0_1] : memref<128x128xf32, #tpu.memory_space<vmem>>, vector<128x128xf32>
    %c0_2 = arith.constant 0 : index
    %c0_3 = arith.constant 0 : index
    %4 = vector.load %arg3[%c0_2, %c0_3] : memref<128x16xbf16, #tpu.memory_space<vmem>>, vector<128x16xbf16>
    %c0_4 = arith.constant 0 : index
    %c0_5 = arith.constant 0 : index
    %5 = vector.load %arg4[%c0_4, %c0_5] : memref<16x128xbf16, #tpu.memory_space<vmem>>, vector<16x128xbf16>
    %cst = arith.constant dense<0.000000e+00> : vector<128x128xf32>
    %6 = tpu.matmul %4, %5, %cst {dimension_numbers = #tpu.dot_dimension_numbers<[1], [0], [0], [1], [0, 0, 1, 1], [], []>} : vector<128x16xbf16>, vector<16x128xbf16>, vector<128x128xf32> -> vector<128x128xf32>
    %7 = arith.addf %3, %6 : vector<128x128xf32>
    %c0_6 = arith.constant 0 : index
    %c0_7 = arith.constant 0 : index
    %8 = vector.load %arg7[%c0_6, %c0_7] : memref<128x128xf32, #tpu.memory_space<vmem>>, vector<128x128xf32>
    tpu.vector_store %arg7[%c0_6, %c0_7], %7 {strides = array<i32>} : memref<128x128xf32, #tpu.memory_space<vmem>>, vector<128x128xf32>,
    %c0_i32_8 = arith.constant 0 : i32
    %9 = arith.cmpi eq, %arg2, %c0_i32_8 : i32
    %10 = arith.extui %9 : i1 to i32
    %c0_i32_9 = arith.constant 0 : i32
    %11 = arith.cmpi ne, %10, %c0_i32_9 : i32
    scf.if %11 {
      %c0_10 = arith.constant 0 : index
      %c0_11 = arith.constant 0 : index
      %12 = vector.load %arg7[%c0_10, %c0_11] : memref<128x128xf32, #tpu.memory_space<vmem>>, vector<128x128xf32>
      %c0_12 = arith.constant 0 : index
      %c0_13 = arith.constant 0 : index
      %13 = vector.load %arg5[%c0_12, %c0_13] : memref<1x128xf32, #tpu.memory_space<vmem>>, vector<1x128xf32>
      %14 = vector.broadcast %13 : vector<1x128xf32> to vector<128x128xf32>
      %15 = arith.addf %12, %14 : vector<128x128xf32>
      %16 = arith.truncf %15 : vector<128x128xf32> to vector<128x128xbf16>
      %c0_14 = arith.constant 0 : index
      %c0_15 = arith.constant 0 : index
      %17 = vector.load %arg6[%c0_14, %c0_15] : memref<128x128xbf16, #tpu.memory_space<vmem>>, vector<128x128xbf16>
      tpu.vector_store %arg6[%c0_14, %c0_15], %16 {strides = array<i32>} : memref<128x128xbf16, #tpu.memory_space<vmem>>, vector<128x128xbf16>,
    } else {
    }
    return
  }
  func.func @transform_0(%arg0: i32, %arg1: i32, %arg2: i32) -> (i32, i32) {
    %c0_i32 = arith.constant 0 : i32
    return %arg0, %arg2 : i32, i32
  }
  func.func @transform_1(%arg0: i32, %arg1: i32, %arg2: i32) -> (i32, i32) {
    %c0_i32 = arith.constant 0 : i32
    return %arg2, %arg1 : i32, i32
  }
  func.func @transform_2(%arg0: i32, %arg1: i32, %arg2: i32) -> (i32, i32) {
    %c0_i32 = arith.constant 0 : i32
    %c0_i32_0 = arith.constant 0 : i32
    return %c0_i32, %arg1 : i32, i32
  }
  func.func @transform_3(%arg0: i32, %arg1: i32, %arg2: i32) -> (i32, i32) {
    %c0_i32 = arith.constant 0 : i32
    return %arg0, %arg1 : i32, i32
  }
}

module attributes {stable_mosaic.version = 11 : i64} {
  func.func @_gemm_bn_act_kernel(%arg0: i32, %arg1: i32, %arg2: i32, %arg3: memref<256x16xbf16, #tpu.memory_space<vmem>>, %arg4: memref<16x128xbf16, #tpu.memory_space<vmem>>, %arg5: memref<1x128xf32, #tpu.memory_space<vmem>>, %arg6: memref<256x128xbf16, #tpu.memory_space<vmem>>, %arg7: memref<256x128xf32, #tpu.memory_space<vmem>>) attributes {dimension_semantics = [#tpu.dimension_semantics<parallel>, #tpu.dimension_semantics<parallel>, #tpu.dimension_semantics<arbitrary>], iteration_bounds = array<i64: 2, 1, 1>, scalar_prefetch = 0 : i64, scratch_operands = 1 : i64, tpu.core_type = #tpu.core_type<tc>, window_params = [{transform_indices = @transform_0, window_bounds = array<i64: 256, 16>}, {transform_indices = @transform_1, window_bounds = array<i64: 16, 128>}, {transform_indices = @transform_2, window_bounds = array<i64: 1, 128>}, {transform_indices = @transform_3, window_bounds = array<i64: 256, 128>}]} {
    %c0_i32 = arith.constant 0 : i32
    %0 = arith.cmpi eq, %arg2, %c0_i32 : i32
    %1 = arith.extui %0 : i1 to i32
    %c0_i32_0 = arith.constant 0 : i32
    %2 = arith.cmpi ne, %1, %c0_i32_0 : i32
    scf.if %2 {
      %cst_10 = arith.constant 0.000000e+00 : f32
      %12 = vector.broadcast %cst_10 : f32 to vector<256x128xf32>
      %c0_11 = arith.constant 0 : index
      %c0_12 = arith.constant 0 : index
      %13 = vector.load %arg7[%c0_11, %c0_12] : memref<256x128xf32, #tpu.memory_space<vmem>>, vector<256x128xf32>
      tpu.vector_store %arg7[%c0_11, %c0_12], %12 {strides = array<i32>} : memref<256x128xf32, #tpu.memory_space<vmem>>, vector<256x128xf32>,
    } else {
    }
    %c0 = arith.constant 0 : index
    %c0_1 = arith.constant 0 : index
    %3 = vector.load %arg7[%c0, %c0_1] : memref<256x128xf32, #tpu.memory_space<vmem>>, vector<256x128xf32>
    %c0_2 = arith.constant 0 : index
    %c0_3 = arith.constant 0 : index
    %4 = vector.load %arg3[%c0_2, %c0_3] : memref<256x16xbf16, #tpu.memory_space<vmem>>, vector<256x16xbf16>
    %c0_4 = arith.constant 0 : index
    %c0_5 = arith.constant 0 : index
    %5 = vector.load %arg4[%c0_4, %c0_5] : memref<16x128xbf16, #tpu.memory_space<vmem>>, vector<16x128xbf16>
    %cst = arith.constant dense<0.000000e+00> : vector<256x128xf32>
    %6 = tpu.matmul %4, %5, %cst {dimension_numbers = #tpu.dot_dimension_numbers<[1], [0], [0], [1], [0, 0, 1, 1], [], []>} : vector<256x16xbf16>, vector<16x128xbf16>, vector<256x128xf32> -> vector<256x128xf32>
    %7 = arith.addf %3, %6 : vector<256x128xf32>
    %c0_6 = arith.constant 0 : index
    %c0_7 = arith.constant 0 : index
    %8 = vector.load %arg7[%c0_6, %c0_7] : memref<256x128xf32, #tpu.memory_space<vmem>>, vector<256x128xf32>
    tpu.vector_store %arg7[%c0_6, %c0_7], %7 {strides = array<i32>} : memref<256x128xf32, #tpu.memory_space<vmem>>, vector<256x128xf32>,
    %c0_i32_8 = arith.constant 0 : i32
    %9 = arith.cmpi eq, %arg2, %c0_i32_8 : i32
    %10 = arith.extui %9 : i1 to i32
    %c0_i32_9 = arith.constant 0 : i32
    %11 = arith.cmpi ne, %10, %c0_i32_9 : i32
    scf.if %11 {
      %c0_10 = arith.constant 0 : index
      %c0_11 = arith.constant 0 : index
      %12 = vector.load %arg7[%c0_10, %c0_11] : memref<256x128xf32, #tpu.memory_space<vmem>>, vector<256x128xf32>
      %c0_12 = arith.constant 0 : index
      %c0_13 = arith.constant 0 : index
      %13 = vector.load %arg5[%c0_12, %c0_13] : memref<1x128xf32, #tpu.memory_space<vmem>>, vector<1x128xf32>
      %14 = vector.broadcast %13 : vector<1x128xf32> to vector<256x128xf32>
      %15 = arith.addf %12, %14 : vector<256x128xf32>
      %cst_14 = arith.constant 0.000000e+00 : f32
      %16 = vector.broadcast %cst_14 : f32 to vector<256x128xf32>
      %17 = arith.maximumf %15, %16 : vector<256x128xf32>
      %18 = arith.truncf %17 : vector<256x128xf32> to vector<256x128xbf16>
      %c0_15 = arith.constant 0 : index
      %c0_16 = arith.constant 0 : index
      %19 = vector.load %arg6[%c0_15, %c0_16] : memref<256x128xbf16, #tpu.memory_space<vmem>>, vector<256x128xbf16>
      tpu.vector_store %arg6[%c0_15, %c0_16], %18 {strides = array<i32>} : memref<256x128xbf16, #tpu.memory_space<vmem>>, vector<256x128xbf16>,
    } else {
    }
    return
  }
  func.func @transform_0(%arg0: i32, %arg1: i32, %arg2: i32) -> (i32, i32) {
    %c0_i32 = arith.constant 0 : i32
    return %arg0, %arg2 : i32, i32
  }
  func.func @transform_1(%arg0: i32, %arg1: i32, %arg2: i32) -> (i32, i32) {
    %c0_i32 = arith.constant 0 : i32
    return %arg2, %arg1 : i32, i32
  }
  func.func @transform_2(%arg0: i32, %arg1: i32, %arg2: i32) -> (i32, i32) {
    %c0_i32 = arith.constant 0 : i32
    %c0_i32_0 = arith.constant 0 : i32
    return %c0_i32, %arg1 : i32, i32
  }
  func.func @transform_3(%arg0: i32, %arg1: i32, %arg2: i32) -> (i32, i32) {
    %c0_i32 = arith.constant 0 : i32
    return %arg0, %arg1 : i32, i32
  }
}

module attributes {stable_mosaic.version = 11 : i64} {
  func.func @_gemm_bn_res_relu_kernel(%arg0: i32, %arg1: i32, %arg2: i32, %arg3: memref<128x128xbf16, #tpu.memory_space<vmem>>, %arg4: memref<128x128xbf16, #tpu.memory_space<vmem>>, %arg5: memref<1x128xf32, #tpu.memory_space<vmem>>, %arg6: memref<128x128xbf16, #tpu.memory_space<vmem>>, %arg7: memref<128x128xbf16, #tpu.memory_space<vmem>>, %arg8: memref<128x128xf32, #tpu.memory_space<vmem>>) attributes {dimension_semantics = [#tpu.dimension_semantics<parallel>, #tpu.dimension_semantics<parallel>, #tpu.dimension_semantics<arbitrary>], iteration_bounds = array<i64: 1, 1, 1>, scalar_prefetch = 0 : i64, scratch_operands = 1 : i64, tpu.core_type = #tpu.core_type<tc>, window_params = [{transform_indices = @transform_0, window_bounds = array<i64: 128, 128>}, {transform_indices = @transform_1, window_bounds = array<i64: 128, 128>}, {transform_indices = @transform_2, window_bounds = array<i64: 1, 128>}, {transform_indices = @transform_3, window_bounds = array<i64: 128, 128>}, {transform_indices = @transform_4, window_bounds = array<i64: 128, 128>}]} {
    %c0_i32 = arith.constant 0 : i32
    %0 = arith.cmpi eq, %arg2, %c0_i32 : i32
    %1 = arith.extui %0 : i1 to i32
    %c0_i32_0 = arith.constant 0 : i32
    %2 = arith.cmpi ne, %1, %c0_i32_0 : i32
    scf.if %2 {
      %cst_10 = arith.constant 0.000000e+00 : f32
      %12 = vector.broadcast %cst_10 : f32 to vector<128x128xf32>
      %c0_11 = arith.constant 0 : index
      %c0_12 = arith.constant 0 : index
      %13 = vector.load %arg8[%c0_11, %c0_12] : memref<128x128xf32, #tpu.memory_space<vmem>>, vector<128x128xf32>
      tpu.vector_store %arg8[%c0_11, %c0_12], %12 {strides = array<i32>} : memref<128x128xf32, #tpu.memory_space<vmem>>, vector<128x128xf32>,
    } else {
    }
    %c0 = arith.constant 0 : index
    %c0_1 = arith.constant 0 : index
    %3 = vector.load %arg8[%c0, %c0_1] : memref<128x128xf32, #tpu.memory_space<vmem>>, vector<128x128xf32>
    %c0_2 = arith.constant 0 : index
    %c0_3 = arith.constant 0 : index
    %4 = vector.load %arg3[%c0_2, %c0_3] : memref<128x128xbf16, #tpu.memory_space<vmem>>, vector<128x128xbf16>
    %c0_4 = arith.constant 0 : index
    %c0_5 = arith.constant 0 : index
    %5 = vector.load %arg4[%c0_4, %c0_5] : memref<128x128xbf16, #tpu.memory_space<vmem>>, vector<128x128xbf16>
    %cst = arith.constant dense<0.000000e+00> : vector<128x128xf32>
    %6 = tpu.matmul %4, %5, %cst {dimension_numbers = #tpu.dot_dimension_numbers<[1], [0], [0], [1], [0, 0, 1, 1], [], []>} : vector<128x128xbf16>, vector<128x128xbf16>, vector<128x128xf32> -> vector<128x128xf32>
    %7 = arith.addf %3, %6 : vector<128x128xf32>
    %c0_6 = arith.constant 0 : index
    %c0_7 = arith.constant 0 : index
    %8 = vector.load %arg8[%c0_6, %c0_7] : memref<128x128xf32, #tpu.memory_space<vmem>>, vector<128x128xf32>
    tpu.vector_store %arg8[%c0_6, %c0_7], %7 {strides = array<i32>} : memref<128x128xf32, #tpu.memory_space<vmem>>, vector<128x128xf32>,
    %c0_i32_8 = arith.constant 0 : i32
    %9 = arith.cmpi eq, %arg2, %c0_i32_8 : i32
    %10 = arith.extui %9 : i1 to i32
    %c0_i32_9 = arith.constant 0 : i32
    %11 = arith.cmpi ne, %10, %c0_i32_9 : i32
    scf.if %11 {
      %c0_10 = arith.constant 0 : index
      %c0_11 = arith.constant 0 : index
      %12 = vector.load %arg8[%c0_10, %c0_11] : memref<128x128xf32, #tpu.memory_space<vmem>>, vector<128x128xf32>
      %c0_12 = arith.constant 0 : index
      %c0_13 = arith.constant 0 : index
      %13 = vector.load %arg5[%c0_12, %c0_13] : memref<1x128xf32, #tpu.memory_space<vmem>>, vector<1x128xf32>
      %14 = vector.broadcast %13 : vector<1x128xf32> to vector<128x128xf32>
      %15 = arith.addf %12, %14 : vector<128x128xf32>
      %c0_14 = arith.constant 0 : index
      %c0_15 = arith.constant 0 : index
      %16 = vector.load %arg6[%c0_14, %c0_15] : memref<128x128xbf16, #tpu.memory_space<vmem>>, vector<128x128xbf16>
      %17 = arith.extf %16 : vector<128x128xbf16> to vector<128x128xf32>
      %18 = arith.addf %15, %17 : vector<128x128xf32>
      %cst_16 = arith.constant 0.000000e+00 : f32
      %19 = vector.broadcast %cst_16 : f32 to vector<128x128xf32>
      %20 = arith.maximumf %18, %19 : vector<128x128xf32>
      %21 = arith.truncf %20 : vector<128x128xf32> to vector<128x128xbf16>
      %c0_17 = arith.constant 0 : index
      %c0_18 = arith.constant 0 : index
      %22 = vector.load %arg7[%c0_17, %c0_18] : memref<128x128xbf16, #tpu.memory_space<vmem>>, vector<128x128xbf16>
      tpu.vector_store %arg7[%c0_17, %c0_18], %21 {strides = array<i32>} : memref<128x128xbf16, #tpu.memory_space<vmem>>, vector<128x128xbf16>,
    } else {
    }
    return
  }
  func.func @transform_0(%arg0: i32, %arg1: i32, %arg2: i32) -> (i32, i32) {
    %c0_i32 = arith.constant 0 : i32
    return %arg0, %arg2 : i32, i32
  }
  func.func @transform_1(%arg0: i32, %arg1: i32, %arg2: i32) -> (i32, i32) {
    %c0_i32 = arith.constant 0 : i32
    return %arg2, %arg1 : i32, i32
  }
  func.func @transform_2(%arg0: i32, %arg1: i32, %arg2: i32) -> (i32, i32) {
    %c0_i32 = arith.constant 0 : i32
    %c0_i32_0 = arith.constant 0 : i32
    return %c0_i32, %arg1 : i32, i32
  }
  func.func @transform_3(%arg0: i32, %arg1: i32, %arg2: i32) -> (i32, i32) {
    %c0_i32 = arith.constant 0 : i32
    return %arg0, %arg1 : i32, i32
  }
  func.func @transform_4(%arg0: i32, %arg1: i32, %arg2: i32) -> (i32, i32) {
    %c0_i32 = arith.constant 0 : i32
    return %arg0, %arg1 : i32, i32
  }
}

module attributes {stable_mosaic.version = 11 : i64} {
  func.func @_conv3x3_bn_relu_kernel(%arg0: i32, %arg1: i32, %arg2: memref<4x10x10x128xbf16, #tpu.memory_space<vmem>>, %arg3: memref<9x128x128xbf16, #tpu.memory_space<vmem>>, %arg4: memref<1x128xf32, #tpu.memory_space<vmem>>, %arg5: memref<64x128xbf16, #tpu.memory_space<vmem>>) attributes {dimension_semantics = [#tpu.dimension_semantics<parallel>, #tpu.dimension_semantics<parallel>], iteration_bounds = array<i64: 2, 1>, scalar_prefetch = 0 : i64, scratch_operands = 0 : i64, tpu.core_type = #tpu.core_type<tc>, window_params = [{transform_indices = @transform_0, window_bounds = array<i64: 4, 10, 10, 128>}, {transform_indices = @transform_1, window_bounds = array<i64: 9, 128, 128>}, {transform_indices = @transform_2, window_bounds = array<i64: 1, 128>}, {transform_indices = @transform_3, window_bounds = array<i64: 64, 128>}]} {
    %cst = arith.constant 0.000000e+00 : f32
    %0 = vector.broadcast %cst : f32 to vector<64x128xf32>
    %c0 = arith.constant 0 : index
    %c0_0 = arith.constant 0 : index
    %c0_1 = arith.constant 0 : index
    %c0_2 = arith.constant 0 : index
    %1 = vector.load %arg2[%c0, %c0_0, %c0_1, %c0_2] : memref<4x10x10x128xbf16, #tpu.memory_space<vmem>>, vector<1x8x8x128xbf16>
    %2 = vector.shape_cast %1 : vector<1x8x8x128xbf16> to vector<8x8x128xbf16>
    %3 = vector.shape_cast %2 : vector<8x8x128xbf16> to vector<64x128xbf16>
    %c0_3 = arith.constant 0 : index
    %c0_4 = arith.constant 0 : index
    %c0_5 = arith.constant 0 : index
    %4 = vector.load %arg3[%c0_3, %c0_4, %c0_5] : memref<9x128x128xbf16, #tpu.memory_space<vmem>>, vector<1x128x128xbf16>
    %5 = vector.shape_cast %4 : vector<1x128x128xbf16> to vector<128x128xbf16>
    %cst_6 = arith.constant dense<0.000000e+00> : vector<64x128xf32>
    %6 = tpu.matmul %3, %5, %cst_6 {dimension_numbers = #tpu.dot_dimension_numbers<[1], [0], [0], [1], [0, 0, 1, 1], [], []>} : vector<64x128xbf16>, vector<128x128xbf16>, vector<64x128xf32> -> vector<64x128xf32>
    %7 = arith.addf %0, %6 : vector<64x128xf32>
    %c1 = arith.constant 1 : index
    %c0_7 = arith.constant 0 : index
    %c0_8 = arith.constant 0 : index
    %c0_9 = arith.constant 0 : index
    %8 = vector.load %arg2[%c1, %c0_7, %c0_8, %c0_9] : memref<4x10x10x128xbf16, #tpu.memory_space<vmem>>, vector<1x8x8x128xbf16>
    %9 = vector.shape_cast %8 : vector<1x8x8x128xbf16> to vector<8x8x128xbf16>
    %10 = vector.shape_cast %9 : vector<8x8x128xbf16> to vector<64x128xbf16>
    %c1_10 = arith.constant 1 : index
    %c0_11 = arith.constant 0 : index
    %c0_12 = arith.constant 0 : index
    %11 = vector.load %arg3[%c1_10, %c0_11, %c0_12] : memref<9x128x128xbf16, #tpu.memory_space<vmem>>, vector<1x128x128xbf16>
    %12 = vector.shape_cast %11 : vector<1x128x128xbf16> to vector<128x128xbf16>
    %cst_13 = arith.constant dense<0.000000e+00> : vector<64x128xf32>
    %13 = tpu.matmul %10, %12, %cst_13 {dimension_numbers = #tpu.dot_dimension_numbers<[1], [0], [0], [1], [0, 0, 1, 1], [], []>} : vector<64x128xbf16>, vector<128x128xbf16>, vector<64x128xf32> -> vector<64x128xf32>
    %14 = arith.addf %7, %13 : vector<64x128xf32>
    %c0_14 = arith.constant 0 : index
    %c0_15 = arith.constant 0 : index
    %c1_16 = arith.constant 1 : index
    %c0_17 = arith.constant 0 : index
    %15 = vector.load %arg2[%c0_14, %c0_15, %c1_16, %c0_17] : memref<4x10x10x128xbf16, #tpu.memory_space<vmem>>, vector<1x8x8x128xbf16>
    %16 = vector.shape_cast %15 : vector<1x8x8x128xbf16> to vector<8x8x128xbf16>
    %17 = vector.shape_cast %16 : vector<8x8x128xbf16> to vector<64x128xbf16>
    %c2 = arith.constant 2 : index
    %c0_18 = arith.constant 0 : index
    %c0_19 = arith.constant 0 : index
    %18 = vector.load %arg3[%c2, %c0_18, %c0_19] : memref<9x128x128xbf16, #tpu.memory_space<vmem>>, vector<1x128x128xbf16>
    %19 = vector.shape_cast %18 : vector<1x128x128xbf16> to vector<128x128xbf16>
    %cst_20 = arith.constant dense<0.000000e+00> : vector<64x128xf32>
    %20 = tpu.matmul %17, %19, %cst_20 {dimension_numbers = #tpu.dot_dimension_numbers<[1], [0], [0], [1], [0, 0, 1, 1], [], []>} : vector<64x128xbf16>, vector<128x128xbf16>, vector<64x128xf32> -> vector<64x128xf32>
    %21 = arith.addf %14, %20 : vector<64x128xf32>
    %c2_21 = arith.constant 2 : index
    %c0_22 = arith.constant 0 : index
    %c0_23 = arith.constant 0 : index
    %c0_24 = arith.constant 0 : index
    %22 = vector.load %arg2[%c2_21, %c0_22, %c0_23, %c0_24] : memref<4x10x10x128xbf16, #tpu.memory_space<vmem>>, vector<1x8x8x128xbf16>
    %23 = vector.shape_cast %22 : vector<1x8x8x128xbf16> to vector<8x8x128xbf16>
    %24 = vector.shape_cast %23 : vector<8x8x128xbf16> to vector<64x128xbf16>
    %c3 = arith.constant 3 : index
    %c0_25 = arith.constant 0 : index
    %c0_26 = arith.constant 0 : index
    %25 = vector.load %arg3[%c3, %c0_25, %c0_26] : memref<9x128x128xbf16, #tpu.memory_space<vmem>>, vector<1x128x128xbf16>
    %26 = vector.shape_cast %25 : vector<1x128x128xbf16> to vector<128x128xbf16>
    %cst_27 = arith.constant dense<0.000000e+00> : vector<64x128xf32>
    %27 = tpu.matmul %24, %26, %cst_27 {dimension_numbers = #tpu.dot_dimension_numbers<[1], [0], [0], [1], [0, 0, 1, 1], [], []>} : vector<64x128xbf16>, vector<128x128xbf16>, vector<64x128xf32> -> vector<64x128xf32>
    %28 = arith.addf %21, %27 : vector<64x128xf32>
    %c3_28 = arith.constant 3 : index
    %c0_29 = arith.constant 0 : index
    %c0_30 = arith.constant 0 : index
    %c0_31 = arith.constant 0 : index
    %29 = vector.load %arg2[%c3_28, %c0_29, %c0_30, %c0_31] : memref<4x10x10x128xbf16, #tpu.memory_space<vmem>>, vector<1x8x8x128xbf16>
    %30 = vector.shape_cast %29 : vector<1x8x8x128xbf16> to vector<8x8x128xbf16>
    %31 = vector.shape_cast %30 : vector<8x8x128xbf16> to vector<64x128xbf16>
    %c4 = arith.constant 4 : index
    %c0_32 = arith.constant 0 : index
    %c0_33 = arith.constant 0 : index
    %32 = vector.load %arg3[%c4, %c0_32, %c0_33] : memref<9x128x128xbf16, #tpu.memory_space<vmem>>, vector<1x128x128xbf16>
    %33 = vector.shape_cast %32 : vector<1x128x128xbf16> to vector<128x128xbf16>
    %cst_34 = arith.constant dense<0.000000e+00> : vector<64x128xf32>
    %34 = tpu.matmul %31, %33, %cst_34 {dimension_numbers = #tpu.dot_dimension_numbers<[1], [0], [0], [1], [0, 0, 1, 1], [], []>} : vector<64x128xbf16>, vector<128x128xbf16>, vector<64x128xf32> -> vector<64x128xf32>
    %35 = arith.addf %28, %34 : vector<64x128xf32>
    %c2_35 = arith.constant 2 : index
    %c0_36 = arith.constant 0 : index
    %c1_37 = arith.constant 1 : index
    %c0_38 = arith.constant 0 : index
    %36 = vector.load %arg2[%c2_35, %c0_36, %c1_37, %c0_38] : memref<4x10x10x128xbf16, #tpu.memory_space<vmem>>, vector<1x8x8x128xbf16>
    %37 = vector.shape_cast %36 : vector<1x8x8x128xbf16> to vector<8x8x128xbf16>
    %38 = vector.shape_cast %37 : vector<8x8x128xbf16> to vector<64x128xbf16>
    %c5 = arith.constant 5 : index
    %c0_39 = arith.constant 0 : index
    %c0_40 = arith.constant 0 : index
    %39 = vector.load %arg3[%c5, %c0_39, %c0_40] : memref<9x128x128xbf16, #tpu.memory_space<vmem>>, vector<1x128x128xbf16>
    %40 = vector.shape_cast %39 : vector<1x128x128xbf16> to vector<128x128xbf16>
    %cst_41 = arith.constant dense<0.000000e+00> : vector<64x128xf32>
    %41 = tpu.matmul %38, %40, %cst_41 {dimension_numbers = #tpu.dot_dimension_numbers<[1], [0], [0], [1], [0, 0, 1, 1], [], []>} : vector<64x128xbf16>, vector<128x128xbf16>, vector<64x128xf32> -> vector<64x128xf32>
    %42 = arith.addf %35, %41 : vector<64x128xf32>
    %c0_42 = arith.constant 0 : index
    %c1_43 = arith.constant 1 : index
    %c0_44 = arith.constant 0 : index
    %c0_45 = arith.constant 0 : index
    %43 = vector.load %arg2[%c0_42, %c1_43, %c0_44, %c0_45] : memref<4x10x10x128xbf16, #tpu.memory_space<vmem>>, vector<1x8x8x128xbf16>
    %44 = vector.shape_cast %43 : vector<1x8x8x128xbf16> to vector<8x8x128xbf16>
    %45 = vector.shape_cast %44 : vector<8x8x128xbf16> to vector<64x128xbf16>
    %c6 = arith.constant 6 : index
    %c0_46 = arith.constant 0 : index
    %c0_47 = arith.constant 0 : index
    %46 = vector.load %arg3[%c6, %c0_46, %c0_47] : memref<9x128x128xbf16, #tpu.memory_space<vmem>>, vector<1x128x128xbf16>
    %47 = vector.shape_cast %46 : vector<1x128x128xbf16> to vector<128x128xbf16>
    %cst_48 = arith.constant dense<0.000000e+00> : vector<64x128xf32>
    %48 = tpu.matmul %45, %47, %cst_48 {dimension_numbers = #tpu.dot_dimension_numbers<[1], [0], [0], [1], [0, 0, 1, 1], [], []>} : vector<64x128xbf16>, vector<128x128xbf16>, vector<64x128xf32> -> vector<64x128xf32>
    %49 = arith.addf %42, %48 : vector<64x128xf32>
    %c1_49 = arith.constant 1 : index
    %c1_50 = arith.constant 1 : index
    %c0_51 = arith.constant 0 : index
    %c0_52 = arith.constant 0 : index
    %50 = vector.load %arg2[%c1_49, %c1_50, %c0_51, %c0_52] : memref<4x10x10x128xbf16, #tpu.memory_space<vmem>>, vector<1x8x8x128xbf16>
    %51 = vector.shape_cast %50 : vector<1x8x8x128xbf16> to vector<8x8x128xbf16>
    %52 = vector.shape_cast %51 : vector<8x8x128xbf16> to vector<64x128xbf16>
    %c7 = arith.constant 7 : index
    %c0_53 = arith.constant 0 : index
    %c0_54 = arith.constant 0 : index
    %53 = vector.load %arg3[%c7, %c0_53, %c0_54] : memref<9x128x128xbf16, #tpu.memory_space<vmem>>, vector<1x128x128xbf16>
    %54 = vector.shape_cast %53 : vector<1x128x128xbf16> to vector<128x128xbf16>
    %cst_55 = arith.constant dense<0.000000e+00> : vector<64x128xf32>
    %55 = tpu.matmul %52, %54, %cst_55 {dimension_numbers = #tpu.dot_dimension_numbers<[1], [0], [0], [1], [0, 0, 1, 1], [], []>} : vector<64x128xbf16>, vector<128x128xbf16>, vector<64x128xf32> -> vector<64x128xf32>
    %56 = arith.addf %49, %55 : vector<64x128xf32>
    %c0_56 = arith.constant 0 : index
    %c1_57 = arith.constant 1 : index
    %c1_58 = arith.constant 1 : index
    %c0_59 = arith.constant 0 : index
    %57 = vector.load %arg2[%c0_56, %c1_57, %c1_58, %c0_59] : memref<4x10x10x128xbf16, #tpu.memory_space<vmem>>, vector<1x8x8x128xbf16>
    %58 = vector.shape_cast %57 : vector<1x8x8x128xbf16> to vector<8x8x128xbf16>
    %59 = vector.shape_cast %58 : vector<8x8x128xbf16> to vector<64x128xbf16>
    %c8 = arith.constant 8 : index
    %c0_60 = arith.constant 0 : index
    %c0_61 = arith.constant 0 : index
    %60 = vector.load %arg3[%c8, %c0_60, %c0_61] : memref<9x128x128xbf16, #tpu.memory_space<vmem>>, vector<1x128x128xbf16>
    %61 = vector.shape_cast %60 : vector<1x128x128xbf16> to vector<128x128xbf16>
    %cst_62 = arith.constant dense<0.000000e+00> : vector<64x128xf32>
    %62 = tpu.matmul %59, %61, %cst_62 {dimension_numbers = #tpu.dot_dimension_numbers<[1], [0], [0], [1], [0, 0, 1, 1], [], []>} : vector<64x128xbf16>, vector<128x128xbf16>, vector<64x128xf32> -> vector<64x128xf32>
    %63 = arith.addf %56, %62 : vector<64x128xf32>
    %c0_63 = arith.constant 0 : index
    %c0_64 = arith.constant 0 : index
    %64 = vector.load %arg4[%c0_63, %c0_64] : memref<1x128xf32, #tpu.memory_space<vmem>>, vector<1x128xf32>
    %65 = vector.broadcast %64 : vector<1x128xf32> to vector<64x128xf32>
    %66 = arith.addf %63, %65 : vector<64x128xf32>
    %cst_65 = arith.constant 0.000000e+00 : f32
    %67 = vector.broadcast %cst_65 : f32 to vector<64x128xf32>
    %68 = arith.maximumf %66, %67 : vector<64x128xf32>
    %69 = arith.truncf %68 : vector<64x128xf32> to vector<64x128xbf16>
    %c0_66 = arith.constant 0 : index
    %c0_67 = arith.constant 0 : index
    %70 = vector.load %arg5[%c0_66, %c0_67] : memref<64x128xbf16, #tpu.memory_space<vmem>>, vector<64x128xbf16>
    tpu.vector_store %arg5[%c0_66, %c0_67], %69 {strides = array<i32>} : memref<64x128xbf16, #tpu.memory_space<vmem>>, vector<64x128xbf16>,
    return
  }
  func.func @transform_0(%arg0: i32, %arg1: i32) -> (i32, i32, i32, i32) {
    %c0_i32 = arith.constant 0 : i32
    %c0_i32_0 = arith.constant 0 : i32
    %c0_i32_1 = arith.constant 0 : i32
    %c0_i32_2 = arith.constant 0 : i32
    return %arg0, %c0_i32, %c0_i32_0, %c0_i32_1 : i32, i32, i32, i32
  }
  func.func @transform_1(%arg0: i32, %arg1: i32) -> (i32, i32, i32) {
    %c0_i32 = arith.constant 0 : i32
    %c0_i32_0 = arith.constant 0 : i32
    %c0_i32_1 = arith.constant 0 : i32
    return %c0_i32, %c0_i32_0, %arg1 : i32, i32, i32
  }
  func.func @transform_2(%arg0: i32, %arg1: i32) -> (i32, i32) {
    %c0_i32 = arith.constant 0 : i32
    %c0_i32_0 = arith.constant 0 : i32
    return %c0_i32, %arg1 : i32, i32
  }
  func.func @transform_3(%arg0: i32, %arg1: i32) -> (i32, i32) {
    %c0_i32 = arith.constant 0 : i32
    return %arg0, %arg1 : i32, i32
  }
}

</mosaic_0001>

<llo_original>
// kernel: bottleneck_forward.6
$region0: #{bottleneck_forward.6}
  #allocation0 [shape = 'u32[]', space=smem, size = 0x4, offset = 0x4, fixed_abs, tag = 'smem constant byte address 0x4 - core index']
  #allocation1 [shape = 'u32[144,128]{1,0:T(1,128)}', space=vmem, size = 0x12000, scoped, tag = 'internal scratch']
  #allocation2 [shape = 'f32[128,128]{1,0:T(8,128)}', space=vmem, size = 0x10000, scoped, tag = 'scratch operand']
  %s0 = inlined_call_operand.vmem [shape: bf16[128,16], index: 0, kind: input, shape index: {}]
  %s1 = inlined_call_operand.vmem [shape: bf16[16,128], index: 1, kind: input, shape index: {}]
  %s2 = inlined_call_operand.vmem [shape: f32[1,128], index: 2, kind: input, shape index: {}]
  %s3 = inlined_call_operand.vmem [shape: bf16[128,128], index: 3, kind: output, shape index: {}]
  %s4 = sld [smem:[#allocation0]]
  $region30: #{bottleneck_forward.6} parent=0
    _
  %s6 = ssub.s32 1, %s4
  %s7 = scalar_select 0, %s6, %s4
  // Predicated region
  $region2: #{bottleneck_forward.6} parent=0 // pred_check
    _
  $region3: #{bottleneck_forward.6} parent=0 // pred_check_branch
    %9 = sbr.rel (0) target = $region5
  $region4: #{bottleneck_forward.6} parent=0 // pred_region
    _
  $region5: #{bottleneck_forward.6} parent=0 // pred_fallthru
    _
  // Predicated region
  $region6: #{bottleneck_forward.6} parent=0 // pred_check
    _
  $region7: #{bottleneck_forward.6} parent=0 // pred_check_branch
    %11 = sbr.rel (0) target = $region9
  $region8: #{bottleneck_forward.6} parent=0 // pred_region
    _
  $region9: #{bottleneck_forward.6} parent=0 // pred_fallthru
    _
  // Predicated region
  $region10: #{bottleneck_forward.6} parent=0 // pred_check
    _
  $region11: #{bottleneck_forward.6} parent=0 // pred_check_branch
    %13 = sbr.rel (0) target = $region13
  $region12: #{bottleneck_forward.6} parent=0 // pred_region
    _
  $region13: #{bottleneck_forward.6} parent=0 // pred_fallthru
    _
  %p15 = scmp.eq.s32.totalorder 0, 0
  // Predicated region
  $region14: #{bottleneck_forward.6} parent=0 // pred_check
    %p16 = pneg %p15
  $region15: #{bottleneck_forward.6} parent=0 // pred_check_branch
    %18 = sbr.rel (%p16) target = $region17
  $region16: #{bottleneck_forward.6} parent=0 // pred_region
    %19 = vst [vmem:[#allocation2] sm:$0xff] 0.0
    %20 = vst [vmem:[#allocation2 + $0x8] sm:$0xff] 0.0
    %21 = vst [vmem:[#allocation2 + $0x10] sm:$0xff] 0.0
    %22 = vst [vmem:[#allocation2 + $0x18] sm:$0xff] 0.0
    %23 = vst [vmem:[#allocation2 + $0x20] sm:$0xff] 0.0
    %24 = vst [vmem:[#allocation2 + $0x28] sm:$0xff] 0.0
    %25 = vst [vmem:[#allocation2 + $0x30] sm:$0xff] 0.0
    %26 = vst [vmem:[#allocation2 + $0x38] sm:$0xff] 0.0
    %27 = vst [vmem:[#allocation2 + $0x40] sm:$0xff] 0.0
    %28 = vst [vmem:[#allocation2 + $0x48] sm:$0xff] 0.0
    %29 = vst [vmem:[#allocation2 + $0x50] sm:$0xff] 0.0
    %30 = vst [vmem:[#allocation2 + $0x58] sm:$0xff] 0.0
    %31 = vst [vmem:[#allocation2 + $0x60] sm:$0xff] 0.0
    %32 = vst [vmem:[#allocation2 + $0x68] sm:$0xff] 0.0
    %33 = vst [vmem:[#allocation2 + $0x70] sm:$0xff] 0.0
    %34 = vst [vmem:[#allocation2 + $0x78] sm:$0xff] 0.0
  $region17: #{bottleneck_forward.6} parent=0 // pred_fallthru
    _
  %v35 = vld [vmem:[#allocation2] sm:$0xff]
  %v36 = vld [vmem:[#allocation2 + $0x8] sm:$0xff]
  %v37 = vld [vmem:[#allocation2 + $0x10] sm:$0xff]
  %v38 = vld [vmem:[#allocation2 + $0x18] sm:$0xff]
  %v39 = vld [vmem:[#allocation2 + $0x20] sm:$0xff]
  %v40 = vld [vmem:[#allocation2 + $0x28] sm:$0xff]
  %v41 = vld [vmem:[#allocation2 + $0x30] sm:$0xff]
  %v42 = vld [vmem:[#allocation2 + $0x38] sm:$0xff]
  %v43 = vld [vmem:[#allocation2 + $0x40] sm:$0xff]
  %v44 = vld [vmem:[#allocation2 + $0x48] sm:$0xff]
  %v45 = vld [vmem:[#allocation2 + $0x50] sm:$0xff]
  %v46 = vld [vmem:[#allocation2 + $0x58] sm:$0xff]
  %v47 = vld [vmem:[#allocation2 + $0x60] sm:$0xff]
  %v48 = vld [vmem:[#allocation2 + $0x68] sm:$0xff]
  %v49 = vld [vmem:[#allocation2 + $0x70] sm:$0xff]
  %v50 = vld [vmem:[#allocation2 + $0x78] sm:$0xff]
  %v51 = vld [vmem:[%s0] sm:$0xf]
  %v52 = vld [vmem:[%s0 + $0x4] sm:$0xf]
  %v53 = vld [vmem:[%s0 + $0x8] sm:$0xf]
  %v54 = vld [vmem:[%s0 + $0xc] sm:$0xf]
  %v55 = vld [vmem:[%s0 + $0x10] sm:$0xf]
  %v56 = vld [vmem:[%s0 + $0x14] sm:$0xf]
  %v57 = vld [vmem:[%s0 + $0x18] sm:$0xf]
  %v58 = vld [vmem:[%s0 + $0x1c] sm:$0xf]
  %v59 = vld [vmem:[%s0 + $0x20] sm:$0xf]
  %v60 = vld [vmem:[%s0 + $0x24] sm:$0xf]
  %v61 = vld [vmem:[%s0 + $0x28] sm:$0xf]
  %v62 = vld [vmem:[%s0 + $0x2c] sm:$0xf]
  %v63 = vld [vmem:[%s0 + $0x30] sm:$0xf]
  %v64 = vld [vmem:[%s0 + $0x34] sm:$0xf]
  %v65 = vld [vmem:[%s0 + $0x38] sm:$0xf]
  %v66 = vld [vmem:[%s0 + $0x3c] sm:$0xf]
  %v67 = vld [vmem:[%s1] sm:$0xf]
  %v68 = vld [vmem:[%s1 + $0x4] sm:$0xf]
  %v85 = vunpack.c.l.b16 %v51
  %v86 = vunpack.c.l.b16 %v52
  %v87 = vunpack.c.l.b16 %v53
  %v88 = vunpack.c.l.b16 %v54
  %v89 = vunpack.c.l.b16 %v55
  %v90 = vunpack.c.l.b16 %v56
  %v91 = vunpack.c.l.b16 %v57
  %v92 = vunpack.c.l.b16 %v58
  %v93 = vunpack.c.l.b16 %v59
  %v94 = vunpack.c.l.b16 %v60
  %v95 = vunpack.c.l.b16 %v61
  %v96 = vunpack.c.l.b16 %v62
  %v97 = vunpack.c.l.b16 %v63
  %v98 = vunpack.c.l.b16 %v64
  %v99 = vunpack.c.l.b16 %v65
  %v100 = vunpack.c.l.b16 %v66
  %v101 = vpack.c.b16 %v86, %v85
  %v102 = vpack.c.b16 %v88, %v87
  %v103 = vpack.c.b16 %v90, %v89
  %v104 = vpack.c.b16 %v92, %v91
  %v105 = vpack.c.b16 %v94, %v93
  %v106 = vpack.c.b16 %v96, %v95
  %v107 = vpack.c.b16 %v98, %v97
  %v108 = vpack.c.b16 %v100, %v99
  %v111 = vunpack.c.l.b16 %v67
  %v112 = vunpack.c.l.b16 %v68
  %v113 = vpack.c.b16 %v112, %v111
  %vm115 = vcmask 130048
  %v117 = vsel %vm115, %v101, 0
  %v120 = vsel %vm115, %v102, 0
  %v123 = vsel %vm115, %v103, 0
  %v126 = vsel %vm115, %v104, 0
  %v129 = vsel %vm115, %v105, 0
  %v132 = vsel %vm115, %v106, 0
  %v135 = vsel %vm115, %v107, 0
  %v138 = vsel %vm115, %v108, 0
  %140 = vmatprep.subr.bf16.mxu0 0
  %141 = vmatpush1.bf16.msra.mxu0 %v113
  %142 = vmatprep.subr.bf16.mxu0 0
  %143 = vmatpush1.bf16.msra.mxu0 0
  %144 = vmatprep.subr.bf16.mxu0 0
  %145 = vmatpush1.bf16.msra.mxu0 0
  %146 = vmatprep.subr.bf16.mxu0 0
  %147 = vmatpush1.bf16.msra.mxu0 0
  %148 = vmatprep.subr.bf16.mxu0 0
  %149 = vmatpush1.bf16.msra.mxu0 0
  %150 = vmatprep.subr.bf16.mxu0 0
  %151 = vmatpush1.bf16.msra.mxu0 0
  %152 = vmatprep.subr.bf16.mxu0 0
  %153 = vmatpush1.bf16.msra.mxu0 0
  %154 = vmatprep.subr.bf16.mxu0 0
  %155 = vmatpush1.bf16.msra.mxu0 0
  %156 = vmatprep.subr.bf16.mxu0 0
  %157 = vmatpush1.bf16.msra.mxu0 0
  %158 = vmatprep.subr.bf16.mxu0 0
  %159 = vmatpush1.bf16.msra.mxu0 0
  %160 = vmatprep.subr.bf16.mxu0 0
  %161 = vmatpush1.bf16.msra.mxu0 0
  %162 = vmatprep.subr.bf16.mxu0 0
  %163 = vmatpush1.bf16.msra.mxu0 0
  %164 = vmatprep.subr.bf16.mxu0 0
  %165 = vmatpush1.bf16.msra.mxu0 0
  %166 = vmatprep.subr.bf16.mxu0 0
  %167 = vmatpush1.bf16.msra.mxu0 0
  %168 = vmatprep.subr.bf16.mxu0 0
  %169 = vmatpush1.bf16.msra.mxu0 0
  %170 = vmatprep.subr.bf16.mxu0 0
  %171 = vmatpush1.bf16.msra.mxu0 0
  %172 = vmatprep.mubr.bf16.mxu0 0
  %173 = vmatmul.mubr.bf16.gmra.mrb[0].mxu0 %v117
  %v174 = vpop.f32.mrb[0].mxu0
  %v175 = vadd.f32 0.0, %v174
  %v176 = vpop.f32.mrb[0].mxu0
  %v177 = vpop.f32.mrb[0].mxu0
  %v178 = vadd.f32 0.0, %v177
  %v179 = vpop.f32.mrb[0].mxu0
  %180 = vmatprep.mubr.bf16.mxu0 0
  %181 = vmatmul.mubr.bf16.gmra.mrb[0].mxu0 %v120
  %v182 = vpop.f32.mrb[0].mxu0
  %v183 = vadd.f32 0.0, %v182
  %v184 = vpop.f32.mrb[0].mxu0
  %v185 = vpop.f32.mrb[0].mxu0
  %v186 = vadd.f32 0.0, %v185
  %v187 = vpop.f32.mrb[0].mxu0
  %188 = vmatprep.mubr.bf16.mxu0 0
  %189 = vmatmul.mubr.bf16.gmra.mrb[0].mxu0 %v123
  %v190 = vpop.f32.mrb[0].mxu0
  %v191 = vadd.f32 0.0, %v190
  %v192 = vpop.f32.mrb[0].mxu0
  %v193 = vpop.f32.mrb[0].mxu0
  %v194 = vadd.f32 0.0, %v193
  %v195 = vpop.f32.mrb[0].mxu0
  %196 = vmatprep.mubr.bf16.mxu0 0
  %197 = vmatmul.mubr.bf16.gmra.mrb[0].mxu0 %v126
  %v198 = vpop.f32.mrb[0].mxu0
  %v199 = vadd.f32 0.0, %v198
  %v200 = vpop.f32.mrb[0].mxu0
  %v201 = vpop.f32.mrb[0].mxu0
  %v202 = vadd.f32 0.0, %v201
  %v203 = vpop.f32.mrb[0].mxu0
  %204 = vmatprep.mubr.bf16.mxu0 0
  %205 = vmatmul.mubr.bf16.gmra.mrb[0].mxu0 %v129
  %v206 = vpop.f32.mrb[0].mxu0
  %v207 = vadd.f32 0.0, %v206
  %v208 = vpop.f32.mrb[0].mxu0
  %v209 = vpop.f32.mrb[0].mxu0
  %v210 = vadd.f32 0.0, %v209
  %v211 = vpop.f32.mrb[0].mxu0
  %212 = vmatprep.mubr.bf16.mxu0 0
  %213 = vmatmul.mubr.bf16.gmra.mrb[0].mxu0 %v132
  %v214 = vpop.f32.mrb[0].mxu0
  %v215 = vadd.f32 0.0, %v214
  %v216 = vpop.f32.mrb[0].mxu0
  %v217 = vpop.f32.mrb[0].mxu0
  %v218 = vadd.f32 0.0, %v217
  %v219 = vpop.f32.mrb[0].mxu0
  %220 = vmatprep.mubr.bf16.mxu0 0
  %221 = vmatmul.mubr.bf16.gmra.mrb[0].mxu0 %v135
  %v222 = vpop.f32.mrb[0].mxu0
  %v223 = vadd.f32 0.0, %v222
  %v224 = vpop.f32.mrb[0].mxu0
  %v225 = vpop.f32.mrb[0].mxu0
  %v226 = vadd.f32 0.0, %v225
  %v227 = vpop.f32.mrb[0].mxu0
  %228 = vmatprep.mubr.bf16.mxu0 0
  %229 = vmatmul.mubr.bf16.gmra.mrb[0].mxu0 %v138
  %v230 = vpop.f32.mrb[0].mxu0
  %v231 = vadd.f32 0.0, %v230
  %v232 = vpop.f32.mrb[0].mxu0
  %v233 = vpop.f32.mrb[0].mxu0
  %v234 = vadd.f32 0.0, %v233
  %v235 = vpop.f32.mrb[0].mxu0
  %236 = vdwg.mxu0
  %v237 = vadd.f32 %v35, %v175
  %v238 = vadd.f32 %v36, %v178
  %v239 = vadd.f32 %v37, %v183
  %v240 = vadd.f32 %v38, %v186
  %v241 = vadd.f32 %v39, %v191
  %v242 = vadd.f32 %v40, %v194
  %v243 = vadd.f32 %v41, %v199
  %v244 = vadd.f32 %v42, %v202
  %v245 = vadd.f32 %v43, %v207
  %v246 = vadd.f32 %v44, %v210
  %v247 = vadd.f32 %v45, %v215
  %v248 = vadd.f32 %v46, %v218
  %v249 = vadd.f32 %v47, %v223
  %v250 = vadd.f32 %v48, %v226
  %v251 = vadd.f32 %v49, %v231
  %v252 = vadd.f32 %v50, %v234
  %253 = vst [vmem:[#allocation2] sm:$0xff] %v237
  %254 = vst [vmem:[#allocation2 + $0x8] sm:$0xff] %v238
  %255 = vst [vmem:[#allocation2 + $0x10] sm:$0xff] %v239
  %256 = vst [vmem:[#allocation2 + $0x18] sm:$0xff] %v240
  %257 = vst [vmem:[#allocation2 + $0x20] sm:$0xff] %v241
  %258 = vst [vmem:[#allocation2 + $0x28] sm:$0xff] %v242
  %259 = vst [vmem:[#allocation2 + $0x30] sm:$0xff] %v243
  %260 = vst [vmem:[#allocation2 + $0x38] sm:$0xff] %v244
  %261 = vst [vmem:[#allocation2 + $0x40] sm:$0xff] %v245
  %262 = vst [vmem:[#allocation2 + $0x48] sm:$0xff] %v246
  %263 = vst [vmem:[#allocation2 + $0x50] sm:$0xff] %v247
  %264 = vst [vmem:[#allocation2 + $0x58] sm:$0xff] %v248
  %265 = vst [vmem:[#allocation2 + $0x60] sm:$0xff] %v249
  %266 = vst [vmem:[#allocation2 + $0x68] sm:$0xff] %v250
  %267 = vst [vmem:[#allocation2 + $0x70] sm:$0xff] %v251
  %268 = vst [vmem:[#allocation2 + $0x78] sm:$0xff] %v252
  // Predicated region
  $region18: #{bottleneck_forward.6} parent=0 // pred_check
    %p269 = pneg %p15
  $region19: #{bottleneck_forward.6} parent=0 // pred_check_branch
    %271 = sbr.rel (%p269) target = $region21
  $region20: #{bottleneck_forward.6} parent=0 // pred_region
    %v272 = vld [vmem:[#allocation2] sm:$0xff]
    %v273 = vld [vmem:[#allocation2 + $0x8] sm:$0xff]
    %v274 = vld [vmem:[#allocation2 + $0x10] sm:$0xff]
    %v275 = vld [vmem:[#allocation2 + $0x18] sm:$0xff]
    %v276 = vld [vmem:[#allocation2 + $0x20] sm:$0xff]
    %v277 = vld [vmem:[#allocation2 + $0x28] sm:$0xff]
    %v278 = vld [vmem:[#allocation2 + $0x30] sm:$0xff]
    %v279 = vld [vmem:[#allocation2 + $0x38] sm:$0xff]
    %v280 = vld [vmem:[#allocation2 + $0x40] sm:$0xff]
    %v281 = vld [vmem:[#allocation2 + $0x48] sm:$0xff]
    %v282 = vld [vmem:[#allocation2 + $0x50] sm:$0xff]
    %v283 = vld [vmem:[#allocation2 + $0x58] sm:$0xff]
    %v284 = vld [vmem:[#allocation2 + $0x60] sm:$0xff]
    %v285 = vld [vmem:[#allocation2 + $0x68] sm:$0xff]
    %v286 = vld [vmem:[#allocation2 + $0x70] sm:$0xff]
    %v287 = vld [vmem:[#allocation2 + $0x78] sm:$0xff]
    %v288 = vld [vmem:[%s2] sm:$0x1]
    %v290 = vlaneseq
    %v291 = vshrl.u32 %v290, 7
    %v292 = vsub.s32 0, %v291
    %v293 = vrot.slane %v288, %v292
    %v295 = vadd.f32 %v272, %v293
    %v296 = vadd.f32 %v273, %v293
    %v297 = vadd.f32 %v274, %v293
    %v298 = vadd.f32 %v275, %v293
    %v299 = vadd.f32 %v276, %v293
    %v300 = vadd.f32 %v277, %v293
    %v301 = vadd.f32 %v278, %v293
    %v302 = vadd.f32 %v279, %v293
    %v303 = vadd.f32 %v280, %v293
    %v304 = vadd.f32 %v281, %v293
    %v305 = vadd.f32 %v282, %v293
    %v306 = vadd.f32 %v283, %v293
    %v307 = vadd.f32 %v284, %v293
    %v308 = vadd.f32 %v285, %v293
    %v309 = vadd.f32 %v286, %v293
    %v310 = vadd.f32 %v287, %v293
    %v311 = vpack.c.bf16 %v296, %v295
    %v312 = vpack.c.bf16 %v298, %v297
    %v313 = vpack.c.bf16 %v300, %v299
    %v314 = vpack.c.bf16 %v302, %v301
    %v315 = vpack.c.bf16 %v304, %v303
    %v316 = vpack.c.bf16 %v306, %v305
    %v317 = vpack.c.bf16 %v308, %v307
    %v318 = vpack.c.bf16 %v310, %v309
    %v327 = vunpack.c.l.b16 %v311
    %v328 = vunpack.c.h.b16 %v311
    %v329 = vunpack.c.l.b16 %v312
    %v330 = vunpack.c.h.b16 %v312
    %v331 = vunpack.c.l.b16 %v313
    %v332 = vunpack.c.h.b16 %v313
    %v333 = vunpack.c.l.b16 %v314
    %v334 = vunpack.c.h.b16 %v314
    %v335 = vunpack.c.l.b16 %v315
    %v336 = vunpack.c.h.b16 %v315
    %v337 = vunpack.c.l.b16 %v316
    %v338 = vunpack.c.h.b16 %v316
    %v339 = vunpack.c.l.b16 %v317
    %v340 = vunpack.c.h.b16 %v317
    %v341 = vunpack.c.l.b16 %v318
    %v342 = vunpack.c.h.b16 %v318
    %v343 = vpack.c.b16 %v327, %v327
    %v344 = vpack.c.b16 %v328, %v328
    %v345 = vpack.c.b16 %v329, %v329
    %v346 = vpack.c.b16 %v330, %v330
    %v347 = vpack.c.b16 %v331, %v331
    %v348 = vpack.c.b16 %v332, %v332
    %v349 = vpack.c.b16 %v333, %v333
    %v350 = vpack.c.b16 %v334, %v334
    %v351 = vpack.c.b16 %v335, %v335
    %v352 = vpack.c.b16 %v336, %v336
    %v353 = vpack.c.b16 %v337, %v337
    %v354 = vpack.c.b16 %v338, %v338
    %v355 = vpack.c.b16 %v339, %v339
    %v356 = vpack.c.b16 %v340, %v340
    %v357 = vpack.c.b16 %v341, %v341
    %v358 = vpack.c.b16 %v342, %v342
    %375 = vst [vmem:[%s3] sm:$0xf] %v343
    %376 = vst [vmem:[%s3 + $0x4] sm:$0xf] %v344
    %377 = vst [vmem:[%s3 + $0x8] sm:$0xf] %v345
    %378 = vst [vmem:[%s3 + $0xc] sm:$0xf] %v346
    %379 = vst [vmem:[%s3 + $0x10] sm:$0xf] %v347
    %380 = vst [vmem:[%s3 + $0x14] sm:$0xf] %v348
    %381 = vst [vmem:[%s3 + $0x18] sm:$0xf] %v349
    %382 = vst [vmem:[%s3 + $0x1c] sm:$0xf] %v350
    %383 = vst [vmem:[%s3 + $0x20] sm:$0xf] %v351
    %384 = vst [vmem:[%s3 + $0x24] sm:$0xf] %v352
    %385 = vst [vmem:[%s3 + $0x28] sm:$0xf] %v353
    %386 = vst [vmem:[%s3 + $0x2c] sm:$0xf] %v354
    %387 = vst [vmem:[%s3 + $0x30] sm:$0xf] %v355
    %388 = vst [vmem:[%s3 + $0x34] sm:$0xf] %v356
    %389 = vst [vmem:[%s3 + $0x38] sm:$0xf] %v357
    %390 = vst [vmem:[%s3 + $0x3c] sm:$0xf] %v358
  $region21: #{bottleneck_forward.6} parent=0 // pred_fallthru
    _
  // Predicated region
  $region22: #{bottleneck_forward.6} parent=0 // pred_check
    _
  $region23: #{bottleneck_forward.6} parent=0 // pred_check_branch
    %392 = sbr.rel (0) target = $region25
  $region24: #{bottleneck_forward.6} parent=0 // pred_region
    _
  $region25: #{bottleneck_forward.6} parent=0 // pred_fallthru
    _
  // Predicated region
  $region26: #{bottleneck_forward.6} parent=0 // pred_check
    _
  $region27: #{bottleneck_forward.6} parent=0 // pred_check_branch
    %394 = sbr.rel (0) target = $region29
  $region28: #{bottleneck_forward.6} parent=0 // pred_region
    _
  $region29: #{bottleneck_forward.6} parent=0 // pred_fallthru
    _

// kernel: bottleneck_forward.4
$region0: #{bottleneck_forward.4}
  #allocation0 [shape = 'u32[]', space=smem, size = 0x4, offset = 0x4, fixed_abs, tag = 'smem constant byte address 0x4 - core index']
  #allocation1 [shape = 'u32[144,128]{1,0:T(1,128)}', space=vmem, size = 0x12000, scoped, tag = 'internal scratch']
  #allocation2 [shape = 'f32[256,128]{1,0:T(8,128)}', space=vmem, size = 0x20000, scoped, tag = 'scratch operand']
  %s0 = inlined_call_operand.vmem [shape: bf16[512,16], index: 0, kind: input, shape index: {}]
  %s1 = inlined_call_operand.vmem [shape: bf16[16,128], index: 1, kind: input, shape index: {}]
  %s2 = inlined_call_operand.vmem [shape: f32[1,128], index: 2, kind: input, shape index: {}]
  %s3 = inlined_call_operand.vmem [shape: bf16[512,128], index: 3, kind: output, shape index: {}]
  %s4 = sld [smem:[#allocation0]]
  $region53: #{bottleneck_forward.4} parent=0
    _
  %s6 = ssub.s32 1, %s4
  %s7 = scalar_select 0, %s6, %s4
  loop: start=0, step=1, limit=4
  $region2: #{bottleneck_forward.4} parent=0 // loop_pre_header
    _
  $region3: #{bottleneck_forward.4} parent=0 // loop_header
    %s9 = sphi 0, %s13
    %p10 = scmp.ge.s32.totalorder %s9, 4
    %s16 = sphi 0, %s35
    %s17 = sphi 0, %s31
    %s18 = sphi 0, %s27
    %s19 = sphi 0, %s16
    %s20 = sphi 0, %s17
    %s21 = sphi 0, %s18
    %s22 = sphi 0, %s19
    %s23 = sphi 0, %s20
    %s24 = sphi 0, %s21
    %s40 = sphi 0, %s42
    %s43 = sphi 0, %s40
    %s44 = sphi 0, %s43
    %s60 = sphi 0, %s44
    %s68 = sphi 0, %s70
    %s71 = sphi 0, %s68
    %s72 = sphi 0, %s71
    %s88 = sphi 0, %s72
    %s94 = sphi 0, %s96
    %s97 = sphi 0, %s94
    %s98 = sphi 0, %s97
    %s114 = sphi 0, %s98
    %s122 = sphi 0, %s124
    %s125 = sphi 0, %s122
    %s126 = sphi 0, %s125
    %s142 = sphi 0, %s126
  $region4: #{bottleneck_forward.4} parent=0 // loop_header_branch
    %12 = sbr.rel (%p10) target = $region8
  $region5: #{bottleneck_forward.4} parent=0 // loop_body
    %s14 = ssub.s32 %s9, 1
    %s15 = ssub.s32 %s9, 2
    %s25 = sadd.s32 1, %s18
    %p26 = scmp.ge.s32.totalorder %s25, 1
    %s27 = scalar_select %p26, 0, %s25
    %s28 = sadd.s32 1, %s17
    %s29 = scalar_select %p26, %s28, %s17
    %p30 = scmp.ge.s32.totalorder %s29, 1
    %s31 = scalar_select %p30, 0, %s29
    %s32 = sadd.s32 1, %s16
    %s33 = scalar_select %p30, %s32, %s16
    %p34 = scmp.ge.s32.totalorder %s33, 2
    %s35 = scalar_select %p34, 0, %s33
    %s36 = ssub.s32 %s16, %s35
    %s37 = ssub.s32 %s18, %s27
    %s38 = sor.u32 %s36, %s37
    %p39 = scmp.eq.s32.totalorder %s38, 0
    %s41 = sadd.s32 %s40, 1
    %s42 = scalar_select %p39, %s40, %s41
    %p45 = pneg %p39
    %p46 = scmp.eq.s32.totalorder %s9, 1
    %p47 = por %p45, %p46
    %p48 = scmp.ne.s32.totalorder %s40, %s43
    %p49 = scmp.eq.s32.totalorder %s9, 0
    %p50 = por %p48, %p49
    %p51 = scmp.ne.s32.totalorder %s40, %s43
    %p52 = scmp.eq.s32.totalorder %s14, 1
    %p53 = por %p51, %p52
    %p54 = scmp.ne.s32.totalorder %s43, %s44
    %p55 = scmp.eq.s32.totalorder %s14, 0
    %p56 = por %p54, %p55
    %p57 = scmp.ne.s32.totalorder %s43, %s44
    %p58 = scmp.eq.s32.totalorder %s15, 1
    %p59 = por %p57, %p58
    %p61 = scmp.ne.s32.totalorder %s44, %s60
    %p62 = scmp.eq.s32.totalorder %s15, 0
    %p63 = por %p61, %p62
    %s64 = ssub.s32 %s18, %s27
    %s65 = ssub.s32 %s17, %s31
    %s66 = sor.u32 %s64, %s65
    %p67 = scmp.eq.s32.totalorder %s66, 0
    %s69 = sadd.s32 %s68, 1
    %s70 = scalar_select %p67, %s68, %s69
    %p73 = pneg %p67
    %p74 = scmp.eq.s32.totalorder %s9, 1
    %p75 = por %p73, %p74
    %p76 = scmp.ne.s32.totalorder %s68, %s71
    %p77 = scmp.eq.s32.totalorder %s9, 0
    %p78 = por %p76, %p77
    %p79 = scmp.ne.s32.totalorder %s68, %s71
    %p80 = scmp.eq.s32.totalorder %s14, 1
    %p81 = por %p79, %p80
    %p82 = scmp.ne.s32.totalorder %s71, %s72
    %p83 = scmp.eq.s32.totalorder %s14, 0
    %p84 = por %p82, %p83
    %p85 = scmp.ne.s32.totalorder %s71, %s72
    %p86 = scmp.eq.s32.totalorder %s15, 1
    %p87 = por %p85, %p86
    %p89 = scmp.ne.s32.totalorder %s72, %s88
    %p90 = scmp.eq.s32.totalorder %s15, 0
    %p91 = por %p89, %p90
    %s92 = ssub.s32 %s17, %s31
    %p93 = scmp.eq.s32.totalorder %s92, 0
    %s95 = sadd.s32 %s94, 1
    %s96 = scalar_select %p93, %s94, %s95
    %p99 = pneg %p93
    %p100 = scmp.eq.s32.totalorder %s9, 1
    %p101 = por %p99, %p100
    %p102 = scmp.ne.s32.totalorder %s94, %s97
    %p103 = scmp.eq.s32.totalorder %s9, 0
    %p104 = por %p102, %p103
    %p105 = scmp.ne.s32.totalorder %s94, %s97
    %p106 = scmp.eq.s32.totalorder %s14, 1
    %p107 = por %p105, %p106
    %p108 = scmp.ne.s32.totalorder %s97, %s98
    %p109 = scmp.eq.s32.totalorder %s14, 0
    %p110 = por %p108, %p109
    %p111 = scmp.ne.s32.totalorder %s97, %s98
    %p112 = scmp.eq.s32.totalorder %s15, 1
    %p113 = por %p111, %p112
    %p115 = scmp.ne.s32.totalorder %s98, %s114
    %p116 = scmp.eq.s32.totalorder %s15, 0
    %p117 = por %p115, %p116
    %s118 = ssub.s32 %s16, %s35
    %s119 = ssub.s32 %s17, %s31
    %s120 = sor.u32 %s118, %s119
    %p121 = scmp.eq.s32.totalorder %s120, 0
    %s123 = sadd.s32 %s122, 1
    %s124 = scalar_select %p121, %s122, %s123
    %p127 = pneg %p121
    %p128 = scmp.eq.s32.totalorder %s9, 1
    %p129 = por %p127, %p128
    %p130 = scmp.ne.s32.totalorder %s122, %s125
    %p131 = scmp.eq.s32.totalorder %s9, 0
    %p132 = por %p130, %p131
    %p133 = scmp.ne.s32.totalorder %s122, %s125
    %p134 = scmp.eq.s32.totalorder %s14, 1
    %p135 = por %p133, %p134
    %p136 = scmp.ne.s32.totalorder %s125, %s126
    %p137 = scmp.eq.s32.totalorder %s14, 0
    %p138 = por %p136, %p137
    %p139 = scmp.ne.s32.totalorder %s125, %s126
    %p140 = scmp.eq.s32.totalorder %s15, 1
    %p141 = por %p139, %p140
    %p143 = scmp.ne.s32.totalorder %s126, %s142
    %p144 = scmp.eq.s32.totalorder %s15, 0
    %p145 = por %p143, %p144
    %p146 = scmp.le.s32.totalorder 1, %s9
    %p147 = scmp.lt.s32.totalorder %s9, 3
    %p148 = pnand %p146, %p147
    %p149 = pneg %p148
    // Predicated region
    $region9: #{bottleneck_forward.4} parent=5 // pred_check
      _
    $region10: #{bottleneck_forward.4} parent=5 // pred_check_branch
      %151 = sbr.rel (%p148) target = $region12
    $region11: #{bottleneck_forward.4} parent=5 // pred_region
      %s152 = ssub.s32 %s9, 1
      // Predicated region
      $region13: #{bottleneck_forward.4} parent=11 // pred_check
        %p153 = pneg %p84
      $region14: #{bottleneck_forward.4} parent=11 // pred_check_branch
        %155 = sbr.rel (%p153) target = $region16
      $region15: #{bottleneck_forward.4} parent=11 // pred_region
        %s156 = smul.u32 2, %s21
        %p157 = scmp.lt.s32.totalorder %s156, 1
        %s158 = scalar_select %p157, %s156, 1
        %p159 = scmp.lt.s32.totalorder %s20, 0
        %s160 = scalar_select %p159, %s20, 0
        %s161 = sadd.s32 %s160, %s158
        %s162 = smul.addr %s161, 4
        %s163 = scalar_lea.vmem %s1, %s162
        %s164 = smul.u32 2, %s21
      $region16: #{bottleneck_forward.4} parent=11 // pred_fallthru
        _
      // Predicated region
      $region17: #{bottleneck_forward.4} parent=11 // pred_check
        %p165 = pneg %p110
      $region18: #{bottleneck_forward.4} parent=11 // pred_check_branch
        %167 = sbr.rel (%p165) target = $region20
      $region19: #{bottleneck_forward.4} parent=11 // pred_region
        %p168 = scmp.lt.s32.totalorder %s20, 0
        %s169 = scalar_select %p168, %s20, 0
        %s170 = scalar_lea.vmem %s2, %s169
      $region20: #{bottleneck_forward.4} parent=11 // pred_fallthru
        _
    $region12: #{bottleneck_forward.4} parent=5 // pred_fallthru
      _
    %p171 = scmp.lt.s32.totalorder %s9, 2
    // Predicated region
    $region21: #{bottleneck_forward.4} parent=5 // pred_check
      %p172 = pneg %p171
    $region22: #{bottleneck_forward.4} parent=5 // pred_check_branch
      %174 = sbr.rel (%p172) target = $region24
    $region23: #{bottleneck_forward.4} parent=5 // pred_region
      // Predicated region
      $region25: #{bottleneck_forward.4} parent=23 // pred_check
        %p175 = pneg %p50
      $region26: #{bottleneck_forward.4} parent=23 // pred_check_branch
        %177 = sbr.rel (%p175) target = $region28
      $region27: #{bottleneck_forward.4} parent=23 // pred_region
        %s178 = smul.u32 32, %s16
        %p179 = scmp.lt.s32.totalorder %s178, 63
        %s180 = scalar_select %p179, %s178, 63
        %p181 = scmp.lt.s32.totalorder %s18, 0
        %s182 = scalar_select %p181, %s18, 0
        %s183 = sadd.s32 %s182, %s180
        %s184 = smul.addr %s183, 4
        %s185 = scalar_lea.vmem %s0, %s184
        %s186 = smul.u32 32, %s16
      $region28: #{bottleneck_forward.4} parent=23 // pred_fallthru
        _
    $region24: #{bottleneck_forward.4} parent=5 // pred_fallthru
      _
    %p187 = scmp.le.s32.totalorder 1, %s9
    %p188 = scmp.lt.s32.totalorder %s9, 3
    %p189 = pnand %p187, %p188
    %p190 = pneg %p189
    // Predicated region
    $region29: #{bottleneck_forward.4} parent=5 // pred_check
      _
    $region30: #{bottleneck_forward.4} parent=5 // pred_check_branch
      %192 = sbr.rel (%p189) target = $region32
    $region31: #{bottleneck_forward.4} parent=5 // pred_region
      %s193 = ssub.s32 %s9, 1
      %s194 = smul.u32 32, %s19
      %p195 = scmp.lt.s32.totalorder %s194, 63
      %s196 = scalar_select %p195, %s194, 63
      %p197 = scmp.lt.s32.totalorder %s21, 0
      %s198 = scalar_select %p197, %s21, 0
      %s199 = sadd.s32 %s198, %s196
      %s200 = smul.addr %s199, 4
      %s201 = scalar_lea.vmem %s0, %s200
      %p202 = pneg %p56
      %p203 = pneg %p53
      %s204 = smul.u32 2, %s21
      %p205 = scmp.lt.s32.totalorder %s204, 1
      %s206 = scalar_select %p205, %s204, 1
      %p207 = scmp.lt.s32.totalorder %s20, 0
      %s208 = scalar_select %p207, %s20, 0
      %s209 = sadd.s32 %s208, %s206
      %s210 = smul.addr %s209, 4
      %s211 = scalar_lea.vmem %s1, %s210
      %p212 = pneg %p84
      %p213 = pneg %p81
      %p214 = scmp.lt.s32.totalorder %s20, 0
      %s215 = scalar_select %p214, %s20, 0
      %s216 = scalar_lea.vmem %s2, %s215
      %p217 = pneg %p110
      %p218 = pneg %p107
      %p219 = pneg %p138
      %p220 = pneg %p135
      %s221 = smul.u32 32, %s19
      %p222 = scmp.lt.s32.totalorder %s221, 63
      %s223 = scalar_select %p222, %s221, 63
      %p224 = scmp.lt.s32.totalorder %s20, 0
      %s225 = scalar_select %p224, %s20, 0
      %s226 = sadd.s32 %s225, %s223
      %s227 = smul.addr %s226, 4
      %s228 = scalar_lea.vmem %s3, %s227
      %s229 = smul.u32 32, %s19
      %p230 = scmp.lt.s32.totalorder %s229, 63
      %s231 = scalar_select %p230, %s229, 63
      %p232 = scmp.lt.s32.totalorder %s21, 0
      %s233 = scalar_select %p232, %s21, 0
      %s234 = sadd.s32 %s233, %s231
      %s235 = smul.addr %s234, 4
      %s236 = scalar_lea.vmem %s0, %s235
      %s237 = smul.u32 32, %s19
      %s238 = smul.u32 2, %s21
      %p239 = scmp.lt.s32.totalorder %s238, 1
      %s240 = scalar_select %p239, %s238, 1
      %p241 = scmp.lt.s32.totalorder %s20, 0
      %s242 = scalar_select %p241, %s20, 0
      %s243 = sadd.s32 %s242, %s240
      %s244 = smul.addr %s243, 4
      %s245 = scalar_lea.vmem %s1, %s244
      %s246 = smul.u32 2, %s21
      %p247 = scmp.lt.s32.totalorder %s20, 0
      %s248 = scalar_select %p247, %s20, 0
      %s249 = scalar_lea.vmem %s2, %s248
      %s250 = smul.u32 32, %s19
      %p251 = scmp.lt.s32.totalorder %s250, 63
      %s252 = scalar_select %p251, %s250, 63
      %p253 = scmp.lt.s32.totalorder %s20, 0
      %s254 = scalar_select %p253, %s20, 0
      %s255 = sadd.s32 %s254, %s252
      %s256 = smul.addr %s255, 4
      %s257 = scalar_lea.vmem %s3, %s256
      %s258 = smul.u32 32, %s19
      %p260 = scmp.eq.s32.totalorder %s21, 0
      // Predicated region
      $region33: #{bottleneck_forward.4} parent=31 // pred_check
        %p261 = pneg %p260
      $region34: #{bottleneck_forward.4} parent=31 // pred_check_branch
        %263 = sbr.rel (%p261) target = $region36
      $region35: #{bottleneck_forward.4} parent=31 // pred_region
        %264 = vst [vmem:[#allocation2] sm:$0xff] 0.0
        %265 = vst [vmem:[#allocation2 + $0x8] sm:$0xff] 0.0
        %266 = vst [vmem:[#allocation2 + $0x10] sm:$0xff] 0.0
        %267 = vst [vmem:[#allocation2 + $0x18] sm:$0xff] 0.0
        %268 = vst [vmem:[#allocation2 + $0x20] sm:$0xff] 0.0
        %269 = vst [vmem:[#allocation2 + $0x28] sm:$0xff] 0.0
        %270 = vst [vmem:[#allocation2 + $0x30] sm:$0xff] 0.0
        %271 = vst [vmem:[#allocation2 + $0x38] sm:$0xff] 0.0
        %272 = vst [vmem:[#allocation2 + $0x40] sm:$0xff] 0.0
        %273 = vst [vmem:[#allocation2 + $0x48] sm:$0xff] 0.0
        %274 = vst [vmem:[#allocation2 + $0x50] sm:$0xff] 0.0
        %275 = vst [vmem:[#allocation2 + $0x58] sm:$0xff] 0.0
        %276 = vst [vmem:[#allocation2 + $0x60] sm:$0xff] 0.0
        %277 = vst [vmem:[#allocation2 + $0x68] sm:$0xff] 0.0
        %278 = vst [vmem:[#allocation2 + $0x70] sm:$0xff] 0.0
        %279 = vst [vmem:[#allocation2 + $0x78] sm:$0xff] 0.0
        %280 = vst [vmem:[#allocation2 + $0x80] sm:$0xff] 0.0
        %281 = vst [vmem:[#allocation2 + $0x88] sm:$0xff] 0.0
        %282 = vst [vmem:[#allocation2 + $0x90] sm:$0xff] 0.0
        %283 = vst [vmem:[#allocation2 + $0x98] sm:$0xff] 0.0
        %284 = vst [vmem:[#allocation2 + $0xa0] sm:$0xff] 0.0
        %285 = vst [vmem:[#allocation2 + $0xa8] sm:$0xff] 0.0
        %286 = vst [vmem:[#allocation2 + $0xb0] sm:$0xff] 0.0
        %287 = vst [vmem:[#allocation2 + $0xb8] sm:$0xff] 0.0
        %288 = vst [vmem:[#allocation2 + $0xc0] sm:$0xff] 0.0
        %289 = vst [vmem:[#allocation2 + $0xc8] sm:$0xff] 0.0
        %290 = vst [vmem:[#allocation2 + $0xd0] sm:$0xff] 0.0
        %291 = vst [vmem:[#allocation2 + $0xd8] sm:$0xff] 0.0
        %292 = vst [vmem:[#allocation2 + $0xe0] sm:$0xff] 0.0
        %293 = vst [vmem:[#allocation2 + $0xe8] sm:$0xff] 0.0
        %294 = vst [vmem:[#allocation2 + $0xf0] sm:$0xff] 0.0
        %295 = vst [vmem:[#allocation2 + $0xf8] sm:$0xff] 0.0
      $region36: #{bottleneck_forward.4} parent=31 // pred_fallthru
        _
      %v296 = vld [vmem:[#allocation2] sm:$0xff]
      %v297 = vld [vmem:[#allocation2 + $0x8] sm:$0xff]
      %v298 = vld [vmem:[#allocation2 + $0x10] sm:$0xff]
      %v299 = vld [vmem:[#allocation2 + $0x18] sm:$0xff]
      %v300 = vld [vmem:[#allocation2 + $0x20] sm:$0xff]
      %v301 = vld [vmem:[#allocation2 + $0x28] sm:$0xff]
      %v302 = vld [vmem:[#allocation2 + $0x30] sm:$0xff]
      %v303 = vld [vmem:[#allocation2 + $0x38] sm:$0xff]
      %v304 = vld [vmem:[#allocation2 + $0x40] sm:$0xff]
      %v305 = vld [vmem:[#allocation2 + $0x48] sm:$0xff]
      %v306 = vld [vmem:[#allocation2 + $0x50] sm:$0xff]
      %v307 = vld [vmem:[#allocation2 + $0x58] sm:$0xff]
      %v308 = vld [vmem:[#allocation2 + $0x60] sm:$0xff]
      %v309 = vld [vmem:[#allocation2 + $0x68] sm:$0xff]
      %v310 = vld [vmem:[#allocation2 + $0x70] sm:$0xff]
      %v311 = vld [vmem:[#allocation2 + $0x78] sm:$0xff]
      %v312 = vld [vmem:[#allocation2 + $0x80] sm:$0xff]
      %v313 = vld [vmem:[#allocation2 + $0x88] sm:$0xff]
      %v314 = vld [vmem:[#allocation2 + $0x90] sm:$0xff]
      %v315 = vld [vmem:[#allocation2 + $0x98] sm:$0xff]
      %v316 = vld [vmem:[#allocation2 + $0xa0] sm:$0xff]
      %v317 = vld [vmem:[#allocation2 + $0xa8] sm:$0xff]
      %v318 = vld [vmem:[#allocation2 + $0xb0] sm:$0xff]
      %v319 = vld [vmem:[#allocation2 + $0xb8] sm:$0xff]
      %v320 = vld [vmem:[#allocation2 + $0xc0] sm:$0xff]
      %v321 = vld [vmem:[#allocation2 + $0xc8] sm:$0xff]
      %v322 = vld [vmem:[#allocation2 + $0xd0] sm:$0xff]
      %v323 = vld [vmem:[#allocation2 + $0xd8] sm:$0xff]
      %v324 = vld [vmem:[#allocation2 + $0xe0] sm:$0xff]
      %v325 = vld [vmem:[#allocation2 + $0xe8] sm:$0xff]
      %v326 = vld [vmem:[#allocation2 + $0xf0] sm:$0xff]
      %v327 = vld [vmem:[#allocation2 + $0xf8] sm:$0xff]
      %v328 = vld [vmem:[%s236] sm:$0xf]
      %v329 = vld [vmem:[%s236 + $0x4] sm:$0xf]
      %v330 = vld [vmem:[%s236 + $0x8] sm:$0xf]
      %v331 = vld [vmem:[%s236 + $0xc] sm:$0xf]
      %v332 = vld [vmem:[%s236 + $0x10] sm:$0xf]
      %v333 = vld [vmem:[%s236 + $0x14] sm:$0xf]
      %v334 = vld [vmem:[%s236 + $0x18] sm:$0xf]
      %v335 = vld [vmem:[%s236 + $0x1c] sm:$0xf]
      %v336 = vld [vmem:[%s236 + $0x20] sm:$0xf]
      %v337 = vld [vmem:[%s236 + $0x24] sm:$0xf]
      %v338 = vld [vmem:[%s236 + $0x28] sm:$0xf]
      %v339 = vld [vmem:[%s236 + $0x2c] sm:$0xf]
      %v340 = vld [vmem:[%s236 + $0x30] sm:$0xf]
      %v341 = vld [vmem:[%s236 + $0x34] sm:$0xf]
      %v342 = vld [vmem:[%s236 + $0x38] sm:$0xf]
      %v343 = vld [vmem:[%s236 + $0x3c] sm:$0xf]
      %v344 = vld [vmem:[%s236 + $0x40] sm:$0xf]
      %v345 = vld [vmem:[%s236 + $0x44] sm:$0xf]
      %v346 = vld [vmem:[%s236 + $0x48] sm:$0xf]
      %v347 = vld [vmem:[%s236 + $0x4c] sm:$0xf]
      %v348 = vld [vmem:[%s236 + $0x50] sm:$0xf]
      %v349 = vld [vmem:[%s236 + $0x54] sm:$0xf]
      %v350 = vld [vmem:[%s236 + $0x58] sm:$0xf]
      %v351 = vld [vmem:[%s236 + $0x5c] sm:$0xf]
      %v352 = vld [vmem:[%s236 + $0x60] sm:$0xf]
      %v353 = vld [vmem:[%s236 + $0x64] sm:$0xf]
      %v354 = vld [vmem:[%s236 + $0x68] sm:$0xf]
      %v355 = vld [vmem:[%s236 + $0x6c] sm:$0xf]
      %v356 = vld [vmem:[%s236 + $0x70] sm:$0xf]
      %v357 = vld [vmem:[%s236 + $0x74] sm:$0xf]
      %v358 = vld [vmem:[%s236 + $0x78] sm:$0xf]
      %v359 = vld [vmem:[%s236 + $0x7c] sm:$0xf]
      %v360 = vld [vmem:[%s245] sm:$0xf]
      %v361 = vld [vmem:[%s245 + $0x4] sm:$0xf]
      %v394 = vunpack.c.l.b16 %v328
      %v395 = vunpack.c.l.b16 %v329
      %v396 = vunpack.c.l.b16 %v330
      %v397 = vunpack.c.l.b16 %v331
      %v398 = vunpack.c.l.b16 %v332
      %v399 = vunpack.c.l.b16 %v333
      %v400 = vunpack.c.l.b16 %v334
      %v401 = vunpack.c.l.b16 %v335
      %v402 = vunpack.c.l.b16 %v336
      %v403 = vunpack.c.l.b16 %v337
      %v404 = vunpack.c.l.b16 %v338
      %v405 = vunpack.c.l.b16 %v339
      %v406 = vunpack.c.l.b16 %v340
      %v407 = vunpack.c.l.b16 %v341
      %v408 = vunpack.c.l.b16 %v342
      %v409 = vunpack.c.l.b16 %v343
      %v410 = vunpack.c.l.b16 %v344
      %v411 = vunpack.c.l.b16 %v345
      %v412 = vunpack.c.l.b16 %v346
      %v413 = vunpack.c.l.b16 %v347
      %v414 = vunpack.c.l.b16 %v348
      %v415 = vunpack.c.l.b16 %v349
      %v416 = vunpack.c.l.b16 %v350
      %v417 = vunpack.c.l.b16 %v351
      %v418 = vunpack.c.l.b16 %v352
      %v419 = vunpack.c.l.b16 %v353
      %v420 = vunpack.c.l.b16 %v354
      %v421 = vunpack.c.l.b16 %v355
      %v422 = vunpack.c.l.b16 %v356
      %v423 = vunpack.c.l.b16 %v357
      %v424 = vunpack.c.l.b16 %v358
      %v425 = vunpack.c.l.b16 %v359
      %v426 = vpack.c.b16 %v395, %v394
      %v427 = vpack.c.b16 %v397, %v396
      %v428 = vpack.c.b16 %v399, %v398
      %v429 = vpack.c.b16 %v401, %v400
      %v430 = vpack.c.b16 %v403, %v402
      %v431 = vpack.c.b16 %v405, %v404
      %v432 = vpack.c.b16 %v407, %v406
      %v433 = vpack.c.b16 %v409, %v408
      %v434 = vpack.c.b16 %v411, %v410
      %v435 = vpack.c.b16 %v413, %v412
      %v436 = vpack.c.b16 %v415, %v414
      %v437 = vpack.c.b16 %v417, %v416
      %v438 = vpack.c.b16 %v419, %v418
      %v439 = vpack.c.b16 %v421, %v420
      %v440 = vpack.c.b16 %v423, %v422
      %v441 = vpack.c.b16 %v425, %v424
      %v444 = vunpack.c.l.b16 %v360
      %v445 = vunpack.c.l.b16 %v361
      %v446 = vpack.c.b16 %v445, %v444
      %vm448 = vcmask 130048
      %v450 = vsel %vm448, %v426, 0
      %v453 = vsel %vm448, %v427, 0
      %v456 = vsel %vm448, %v428, 0
      %v459 = vsel %vm448, %v429, 0
      %v462 = vsel %vm448, %v430, 0
      %v465 = vsel %vm448, %v431, 0
      %v468 = vsel %vm448, %v432, 0
      %v471 = vsel %vm448, %v433, 0
      %v474 = vsel %vm448, %v434, 0
      %v477 = vsel %vm448, %v435, 0
      %v480 = vsel %vm448, %v436, 0
      %v483 = vsel %vm448, %v437, 0
      %v486 = vsel %vm448, %v438, 0
      %v489 = vsel %vm448, %v439, 0
      %v492 = vsel %vm448, %v440, 0
      %v495 = vsel %vm448, %v441, 0
      %497 = vmatprep.subr.bf16.mxu0 0
      %498 = vmatpush1.bf16.msra.mxu0 %v446
      %499 = vmatprep.subr.bf16.mxu0 0
      %500 = vmatpush1.bf16.msra.mxu0 0
      %501 = vmatprep.subr.bf16.mxu0 0
      %502 = vmatpush1.bf16.msra.mxu0 0
      %503 = vmatprep.subr.bf16.mxu0 0
      %504 = vmatpush1.bf16.msra.mxu0 0
      %505 = vmatprep.subr.bf16.mxu0 0
      %506 = vmatpush1.bf16.msra.mxu0 0
      %507 = vmatprep.subr.bf16.mxu0 0
      %508 = vmatpush1.bf16.msra.mxu0 0
      %509 = vmatprep.subr.bf16.mxu0 0
      %510 = vmatpush1.bf16.msra.mxu0 0
      %511 = vmatprep.subr.bf16.mxu0 0
      %512 = vmatpush1.bf16.msra.mxu0 0
      %513 = vmatprep.subr.bf16.mxu0 0
      %514 = vmatpush1.bf16.msra.mxu0 0
      %515 = vmatprep.subr.bf16.mxu0 0
      %516 = vmatpush1.bf16.msra.mxu0 0
      %517 = vmatprep.subr.bf16.mxu0 0
      %518 = vmatpush1.bf16.msra.mxu0 0
      %519 = vmatprep.subr.bf16.mxu0 0
      %520 = vmatpush1.bf16.msra.mxu0 0
      %521 = vmatprep.subr.bf16.mxu0 0
      %522 = vmatpush1.bf16.msra.mxu0 0
      %523 = vmatprep.subr.bf16.mxu0 0
      %524 = vmatpush1.bf16.msra.mxu0 0
      %525 = vmatprep.subr.bf16.mxu0 0
      %526 = vmatpush1.bf16.msra.mxu0 0
      %527 = vmatprep.subr.bf16.mxu0 0
      %528 = vmatpush1.bf16.msra.mxu0 0
      %529 = vmatprep.mubr.bf16.mxu0 0
      %530 = vmatmul.mubr.bf16.gmra.mrb[0].mxu0 %v450
      %v531 = vpop.f32.mrb[0].mxu0
      %v532 = vadd.f32 0.0, %v531
      %v533 = vpop.f32.mrb[0].mxu0
      %v534 = vpop.f32.mrb[0].mxu0
      %v535 = vadd.f32 0.0, %v534
      %v536 = vpop.f32.mrb[0].mxu0
      %537 = vmatprep.mubr.bf16.mxu0 0
      %538 = vmatmul.mubr.bf16.gmra.mrb[0].mxu0 %v453
      %v539 = vpop.f32.mrb[0].mxu0
      %v540 = vadd.f32 0.0, %v539
      %v541 = vpop.f32.mrb[0].mxu0
      %v542 = vpop.f32.mrb[0].mxu0
      %v543 = vadd.f32 0.0, %v542
      %v544 = vpop.f32.mrb[0].mxu0
      %545 = vmatprep.mubr.bf16.mxu0 0
      %546 = vmatmul.mubr.bf16.gmra.mrb[0].mxu0 %v456
      %v547 = vpop.f32.mrb[0].mxu0
      %v548 = vadd.f32 0.0, %v547
      %v549 = vpop.f32.mrb[0].mxu0
      %v550 = vpop.f32.mrb[0].mxu0
      %v551 = vadd.f32 0.0, %v550
      %v552 = vpop.f32.mrb[0].mxu0
      %553 = vmatprep.mubr.bf16.mxu0 0
      %554 = vmatmul.mubr.bf16.gmra.mrb[0].mxu0 %v459
      %v555 = vpop.f32.mrb[0].mxu0
      %v556 = vadd.f32 0.0, %v555
      %v557 = vpop.f32.mrb[0].mxu0
      %v558 = vpop.f32.mrb[0].mxu0
      %v559 = vadd.f32 0.0, %v558
      %v560 = vpop.f32.mrb[0].mxu0
      %561 = vmatprep.mubr.bf16.mxu0 0
      %562 = vmatmul.mubr.bf16.gmra.mrb[0].mxu0 %v462
      %v563 = vpop.f32.mrb[0].mxu0
      %v564 = vadd.f32 0.0, %v563
      %v565 = vpop.f32.mrb[0].mxu0
      %v566 = vpop.f32.mrb[0].mxu0
      %v567 = vadd.f32 0.0, %v566
      %v568 = vpop.f32.mrb[0].mxu0
      %569 = vmatprep.mubr.bf16.mxu0 0
      %570 = vmatmul.mubr.bf16.gmra.mrb[0].mxu0 %v465
      %v571 = vpop.f32.mrb[0].mxu0
      %v572 = vadd.f32 0.0, %v571
      %v573 = vpop.f32.mrb[0].mxu0
      %v574 = vpop.f32.mrb[0].mxu0
      %v575 = vadd.f32 0.0, %v574
      %v576 = vpop.f32.mrb[0].mxu0
      %577 = vmatprep.mubr.bf16.mxu0 0
      %578 = vmatmul.mubr.bf16.gmra.mrb[0].mxu0 %v468
      %v579 = vpop.f32.mrb[0].mxu0
      %v580 = vadd.f32 0.0, %v579
      %v581 = vpop.f32.mrb[0].mxu0
      %v582 = vpop.f32.mrb[0].mxu0
      %v583 = vadd.f32 0.0, %v582
      %v584 = vpop.f32.mrb[0].mxu0
      %585 = vmatprep.mubr.bf16.mxu0 0
      %586 = vmatmul.mubr.bf16.gmra.mrb[0].mxu0 %v471
      %v587 = vpop.f32.mrb[0].mxu0
      %v588 = vadd.f32 0.0, %v587
      %v589 = vpop.f32.mrb[0].mxu0
      %v590 = vpop.f32.mrb[0].mxu0
      %v591 = vadd.f32 0.0, %v590
      %v592 = vpop.f32.mrb[0].mxu0
      %593 = vmatprep.mubr.bf16.mxu0 0
      %594 = vmatmul.mubr.bf16.gmra.mrb[0].mxu0 %v474
      %v595 = vpop.f32.mrb[0].mxu0
      %v596 = vadd.f32 0.0, %v595
      %v597 = vpop.f32.mrb[0].mxu0
      %v598 = vpop.f32.mrb[0].mxu0
      %v599 = vadd.f32 0.0, %v598
      %v600 = vpop.f32.mrb[0].mxu0
      %601 = vmatprep.mubr.bf16.mxu0 0
      %602 = vmatmul.mubr.bf16.gmra.mrb[0].mxu0 %v477
      %v603 = vpop.f32.mrb[0].mxu0
      %v604 = vadd.f32 0.0, %v603
      %v605 = vpop.f32.mrb[0].mxu0
      %v606 = vpop.f32.mrb[0].mxu0
      %v607 = vadd.f32 0.0, %v606
      %v608 = vpop.f32.mrb[0].mxu0
      %609 = vmatprep.mubr.bf16.mxu0 0
      %610 = vmatmul.mubr.bf16.gmra.mrb[0].mxu0 %v480
      %v611 = vpop.f32.mrb[0].mxu0
      %v612 = vadd.f32 0.0, %v611
      %v613 = vpop.f32.mrb[0].mxu0
      %v614 = vpop.f32.mrb[0].mxu0
      %v615 = vadd.f32 0.0, %v614
      %v616 = vpop.f32.mrb[0].mxu0
      %617 = vmatprep.mubr.bf16.mxu0 0
      %618 = vmatmul.mubr.bf16.gmra.mrb[0].mxu0 %v483
      %v619 = vpop.f32.mrb[0].mxu0
      %v620 = vadd.f32 0.0, %v619
      %v621 = vpop.f32.mrb[0].mxu0
      %v622 = vpop.f32.mrb[0].mxu0
      %v623 = vadd.f32 0.0, %v622
      %v624 = vpop.f32.mrb[0].mxu0
      %625 = vmatprep.mubr.bf16.mxu0 0
      %626 = vmatmul.mubr.bf16.gmra.mrb[0].mxu0 %v486
      %v627 = vpop.f32.mrb[0].mxu0
      %v628 = vadd.f32 0.0, %v627
      %v629 = vpop.f32.mrb[0].mxu0
      %v630 = vpop.f32.mrb[0].mxu0
      %v631 = vadd.f32 0.0, %v630
      %v632 = vpop.f32.mrb[0].mxu0
      %633 = vmatprep.mubr.bf16.mxu0 0
      %634 = vmatmul.mubr.bf16.gmra.mrb[0].mxu0 %v489
      %v635 = vpop.f32.mrb[0].mxu0
      %v636 = vadd.f32 0.0, %v635
      %v637 = vpop.f32.mrb[0].mxu0
      %v638 = vpop.f32.mrb[0].mxu0
      %v639 = vadd.f32 0.0, %v638
      %v640 = vpop.f32.mrb[0].mxu0
      %641 = vmatprep.mubr.bf16.mxu0 0
      %642 = vmatmul.mubr.bf16.gmra.mrb[0].mxu0 %v492
      %v643 = vpop.f32.mrb[0].mxu0
      %v644 = vadd.f32 0.0, %v643
      %v645 = vpop.f32.mrb[0].mxu0
      %v646 = vpop.f32.mrb[0].mxu0
      %v647 = vadd.f32 0.0, %v646
      %v648 = vpop.f32.mrb[0].mxu0
      %649 = vmatprep.mubr.bf16.mxu0 0
      %650 = vmatmul.mubr.bf16.gmra.mrb[0].mxu0 %v495
      %v651 = vpop.f32.mrb[0].mxu0
      %v652 = vadd.f32 0.0, %v651
      %v653 = vpop.f32.mrb[0].mxu0
      %v654 = vpop.f32.mrb[0].mxu0
      %v655 = vadd.f32 0.0, %v654
      %v656 = vpop.f32.mrb[0].mxu0
      %657 = vdwg.mxu0
      %v658 = vadd.f32 %v296, %v532
      %v659 = vadd.f32 %v297, %v535
      %v660 = vadd.f32 %v298, %v540
      %v661 = vadd.f32 %v299, %v543
      %v662 = vadd.f32 %v300, %v548
      %v663 = vadd.f32 %v301, %v551
      %v664 = vadd.f32 %v302, %v556
      %v665 = vadd.f32 %v303, %v559
      %v666 = vadd.f32 %v304, %v564
      %v667 = vadd.f32 %v305, %v567
      %v668 = vadd.f32 %v306, %v572
      %v669 = vadd.f32 %v307, %v575
      %v670 = vadd.f32 %v308, %v580
      %v671 = vadd.f32 %v309, %v583
      %v672 = vadd.f32 %v310, %v588
      %v673 = vadd.f32 %v311, %v591
      %v674 = vadd.f32 %v312, %v596
      %v675 = vadd.f32 %v313, %v599
      %v676 = vadd.f32 %v314, %v604
      %v677 = vadd.f32 %v315, %v607
      %v678 = vadd.f32 %v316, %v612
      %v679 = vadd.f32 %v317, %v615
      %v680 = vadd.f32 %v318, %v620
      %v681 = vadd.f32 %v319, %v623
      %v682 = vadd.f32 %v320, %v628
      %v683 = vadd.f32 %v321, %v631
      %v684 = vadd.f32 %v322, %v636
      %v685 = vadd.f32 %v323, %v639
      %v686 = vadd.f32 %v324, %v644
      %v687 = vadd.f32 %v325, %v647
      %v688 = vadd.f32 %v326, %v652
      %v689 = vadd.f32 %v327, %v655
      %690 = vst [vmem:[#allocation2] sm:$0xff] %v658
      %691 = vst [vmem:[#allocation2 + $0x8] sm:$0xff] %v659
      %692 = vst [vmem:[#allocation2 + $0x10] sm:$0xff] %v660
      %693 = vst [vmem:[#allocation2 + $0x18] sm:$0xff] %v661
      %694 = vst [vmem:[#allocation2 + $0x20] sm:$0xff] %v662
      %695 = vst [vmem:[#allocation2 + $0x28] sm:$0xff] %v663
      %696 = vst [vmem:[#allocation2 + $0x30] sm:$0xff] %v664
      %697 = vst [vmem:[#allocation2 + $0x38] sm:$0xff] %v665
      %698 = vst [vmem:[#allocation2 + $0x40] sm:$0xff] %v666
      %699 = vst [vmem:[#allocation2 + $0x48] sm:$0xff] %v667
      %700 = vst [vmem:[#allocation2 + $0x50] sm:$0xff] %v668
      %701 = vst [vmem:[#allocation2 + $0x58] sm:$0xff] %v669
      %702 = vst [vmem:[#allocation2 + $0x60] sm:$0xff] %v670
      %703 = vst [vmem:[#allocation2 + $0x68] sm:$0xff] %v671
      %704 = vst [vmem:[#allocation2 + $0x70] sm:$0xff] %v672
      %705 = vst [vmem:[#allocation2 + $0x78] sm:$0xff] %v673
      %706 = vst [vmem:[#allocation2 + $0x80] sm:$0xff] %v674
      %707 = vst [vmem:[#allocation2 + $0x88] sm:$0xff] %v675
      %708 = vst [vmem:[#allocation2 + $0x90] sm:$0xff] %v676
      %709 = vst [vmem:[#allocation2 + $0x98] sm:$0xff] %v677
      %710 = vst [vmem:[#allocation2 + $0xa0] sm:$0xff] %v678
      %711 = vst [vmem:[#allocation2 + $0xa8] sm:$0xff] %v679
      %712 = vst [vmem:[#allocation2 + $0xb0] sm:$0xff] %v680
      %713 = vst [vmem:[#allocation2 + $0xb8] sm:$0xff] %v681
      %714 = vst [vmem:[#allocation2 + $0xc0] sm:$0xff] %v682
      %715 = vst [vmem:[#allocation2 + $0xc8] sm:$0xff] %v683
      %716 = vst [vmem:[#allocation2 + $0xd0] sm:$0xff] %v684
      %717 = vst [vmem:[#allocation2 + $0xd8] sm:$0xff] %v685
      %718 = vst [vmem:[#allocation2 + $0xe0] sm:$0xff] %v686
      %719 = vst [vmem:[#allocation2 + $0xe8] sm:$0xff] %v687
      %720 = vst [vmem:[#allocation2 + $0xf0] sm:$0xff] %v688
      %721 = vst [vmem:[#allocation2 + $0xf8] sm:$0xff] %v689
      // Predicated region
      $region37: #{bottleneck_forward.4} parent=31 // pred_check
        %p722 = pneg %p260
      $region38: #{bottleneck_forward.4} parent=31 // pred_check_branch
        %724 = sbr.rel (%p722) target = $region40
      $region39: #{bottleneck_forward.4} parent=31 // pred_region
        %v725 = vld [vmem:[#allocation2] sm:$0xff]
        %v726 = vld [vmem:[#allocation2 + $0x8] sm:$0xff]
        %v727 = vld [vmem:[#allocation2 + $0x10] sm:$0xff]
        %v728 = vld [vmem:[#allocation2 + $0x18] sm:$0xff]
        %v729 = vld [vmem:[#allocation2 + $0x20] sm:$0xff]
        %v730 = vld [vmem:[#allocation2 + $0x28] sm:$0xff]
        %v731 = vld [vmem:[#allocation2 + $0x30] sm:$0xff]
        %v732 = vld [vmem:[#allocation2 + $0x38] sm:$0xff]
        %v733 = vld [vmem:[#allocation2 + $0x40] sm:$0xff]
        %v734 = vld [vmem:[#allocation2 + $0x48] sm:$0xff]
        %v735 = vld [vmem:[#allocation2 + $0x50] sm:$0xff]
        %v736 = vld [vmem:[#allocation2 + $0x58] sm:$0xff]
        %v737 = vld [vmem:[#allocation2 + $0x60] sm:$0xff]
        %v738 = vld [vmem:[#allocation2 + $0x68] sm:$0xff]
        %v739 = vld [vmem:[#allocation2 + $0x70] sm:$0xff]
        %v740 = vld [vmem:[#allocation2 + $0x78] sm:$0xff]
        %v741 = vld [vmem:[#allocation2 + $0x80] sm:$0xff]
        %v742 = vld [vmem:[#allocation2 + $0x88] sm:$0xff]
        %v743 = vld [vmem:[#allocation2 + $0x90] sm:$0xff]
        %v744 = vld [vmem:[#allocation2 + $0x98] sm:$0xff]
        %v745 = vld [vmem:[#allocation2 + $0xa0] sm:$0xff]
        %v746 = vld [vmem:[#allocation2 + $0xa8] sm:$0xff]
        %v747 = vld [vmem:[#allocation2 + $0xb0] sm:$0xff]
        %v748 = vld [vmem:[#allocation2 + $0xb8] sm:$0xff]
        %v749 = vld [vmem:[#allocation2 + $0xc0] sm:$0xff]
        %v750 = vld [vmem:[#allocation2 + $0xc8] sm:$0xff]
        %v751 = vld [vmem:[#allocation2 + $0xd0] sm:$0xff]
        %v752 = vld [vmem:[#allocation2 + $0xd8] sm:$0xff]
        %v753 = vld [vmem:[#allocation2 + $0xe0] sm:$0xff]
        %v754 = vld [vmem:[#allocation2 + $0xe8] sm:$0xff]
        %v755 = vld [vmem:[#allocation2 + $0xf0] sm:$0xff]
        %v756 = vld [vmem:[#allocation2 + $0xf8] sm:$0xff]
        %v757 = vld [vmem:[%s249] sm:$0x1]
        %v759 = vlaneseq
        %v760 = vshrl.u32 %v759, 7
        %v761 = vsub.s32 0, %v760
        %v762 = vrot.slane %v757, %v761
        %v764 = vadd.f32 %v725, %v762
        %v765 = vadd.f32 %v726, %v762
        %v766 = vadd.f32 %v727, %v762
        %v767 = vadd.f32 %v728, %v762
        %v768 = vadd.f32 %v729, %v762
        %v769 = vadd.f32 %v730, %v762
        %v770 = vadd.f32 %v731, %v762
        %v771 = vadd.f32 %v732, %v762
        %v772 = vadd.f32 %v733, %v762
        %v773 = vadd.f32 %v734, %v762
        %v774 = vadd.f32 %v735, %v762
        %v775 = vadd.f32 %v736, %v762
        %v776 = vadd.f32 %v737, %v762
        %v777 = vadd.f32 %v738, %v762
        %v778 = vadd.f32 %v739, %v762
        %v779 = vadd.f32 %v740, %v762
        %v780 = vadd.f32 %v741, %v762
        %v781 = vadd.f32 %v742, %v762
        %v782 = vadd.f32 %v743, %v762
        %v783 = vadd.f32 %v744, %v762
        %v784 = vadd.f32 %v745, %v762
        %v785 = vadd.f32 %v746, %v762
        %v786 = vadd.f32 %v747, %v762
        %v787 = vadd.f32 %v748, %v762
        %v788 = vadd.f32 %v749, %v762
        %v789 = vadd.f32 %v750, %v762
        %v790 = vadd.f32 %v751, %v762
        %v791 = vadd.f32 %v752, %v762
        %v792 = vadd.f32 %v753, %v762
        %v793 = vadd.f32 %v754, %v762
        %v794 = vadd.f32 %v755, %v762
        %v795 = vadd.f32 %v756, %v762
        %v796 = vmax.f32 %v764, 0.0
        %v797 = vmax.f32 %v765, 0.0
        %v798 = vmax.f32 %v766, 0.0
        %v799 = vmax.f32 %v767, 0.0
        %v800 = vmax.f32 %v768, 0.0
        %v801 = vmax.f32 %v769, 0.0
        %v802 = vmax.f32 %v770, 0.0
        %v803 = vmax.f32 %v771, 0.0
        %v804 = vmax.f32 %v772, 0.0
        %v805 = vmax.f32 %v773, 0.0
        %v806 = vmax.f32 %v774, 0.0
        %v807 = vmax.f32 %v775, 0.0
        %v808 = vmax.f32 %v776, 0.0
        %v809 = vmax.f32 %v777, 0.0
        %v810 = vmax.f32 %v778, 0.0
        %v811 = vmax.f32 %v779, 0.0
        %v812 = vmax.f32 %v780, 0.0
        %v813 = vmax.f32 %v781, 0.0
        %v814 = vmax.f32 %v782, 0.0
        %v815 = vmax.f32 %v783, 0.0
        %v816 = vmax.f32 %v784, 0.0
        %v817 = vmax.f32 %v785, 0.0
        %v818 = vmax.f32 %v786, 0.0
        %v819 = vmax.f32 %v787, 0.0
        %v820 = vmax.f32 %v788, 0.0
        %v821 = vmax.f32 %v789, 0.0
        %v822 = vmax.f32 %v790, 0.0
        %v823 = vmax.f32 %v791, 0.0
        %v824 = vmax.f32 %v792, 0.0
        %v825 = vmax.f32 %v793, 0.0
        %v826 = vmax.f32 %v794, 0.0
        %v827 = vmax.f32 %v795, 0.0
        %v828 = vpack.c.bf16 %v797, %v796
        %v829 = vpack.c.bf16 %v799, %v798
        %v830 = vpack.c.bf16 %v801, %v800
        %v831 = vpack.c.bf16 %v803, %v802
        %v832 = vpack.c.bf16 %v805, %v804
        %v833 = vpack.c.bf16 %v807, %v806
        %v834 = vpack.c.bf16 %v809, %v808
        %v835 = vpack.c.bf16 %v811, %v810
        %v836 = vpack.c.bf16 %v813, %v812
        %v837 = vpack.c.bf16 %v815, %v814
        %v838 = vpack.c.bf16 %v817, %v816
        %v839 = vpack.c.bf16 %v819, %v818
        %v840 = vpack.c.bf16 %v821, %v820
        %v841 = vpack.c.bf16 %v823, %v822
        %v842 = vpack.c.bf16 %v825, %v824
        %v843 = vpack.c.bf16 %v827, %v826
        %v860 = vunpack.c.l.b16 %v828
        %v861 = vunpack.c.h.b16 %v828
        %v862 = vunpack.c.l.b16 %v829
        %v863 = vunpack.c.h.b16 %v829
        %v864 = vunpack.c.l.b16 %v830
        %v865 = vunpack.c.h.b16 %v830
        %v866 = vunpack.c.l.b16 %v831
        %v867 = vunpack.c.h.b16 %v831
        %v868 = vunpack.c.l.b16 %v832
        %v869 = vunpack.c.h.b16 %v832
        %v870 = vunpack.c.l.b16 %v833
        %v871 = vunpack.c.h.b16 %v833
        %v872 = vunpack.c.l.b16 %v834
        %v873 = vunpack.c.h.b16 %v834
        %v874 = vunpack.c.l.b16 %v835
        %v875 = vunpack.c.h.b16 %v835
        %v876 = vunpack.c.l.b16 %v836
        %v877 = vunpack.c.h.b16 %v836
        %v878 = vunpack.c.l.b16 %v837
        %v879 = vunpack.c.h.b16 %v837
        %v880 = vunpack.c.l.b16 %v838
        %v881 = vunpack.c.h.b16 %v838
        %v882 = vunpack.c.l.b16 %v839
        %v883 = vunpack.c.h.b16 %v839
        %v884 = vunpack.c.l.b16 %v840
        %v885 = vunpack.c.h.b16 %v840
        %v886 = vunpack.c.l.b16 %v841
        %v887 = vunpack.c.h.b16 %v841
        %v888 = vunpack.c.l.b16 %v842
        %v889 = vunpack.c.h.b16 %v842
        %v890 = vunpack.c.l.b16 %v843
        %v891 = vunpack.c.h.b16 %v843
        %v892 = vpack.c.b16 %v860, %v860
        %v893 = vpack.c.b16 %v861, %v861
        %v894 = vpack.c.b16 %v862, %v862
        %v895 = vpack.c.b16 %v863, %v863
        %v896 = vpack.c.b16 %v864, %v864
        %v897 = vpack.c.b16 %v865, %v865
        %v898 = vpack.c.b16 %v866, %v866
        %v899 = vpack.c.b16 %v867, %v867
        %v900 = vpack.c.b16 %v868, %v868
        %v901 = vpack.c.b16 %v869, %v869
        %v902 = vpack.c.b16 %v870, %v870
        %v903 = vpack.c.b16 %v871, %v871
        %v904 = vpack.c.b16 %v872, %v872
        %v905 = vpack.c.b16 %v873, %v873
        %v906 = vpack.c.b16 %v874, %v874
        %v907 = vpack.c.b16 %v875, %v875
        %v908 = vpack.c.b16 %v876, %v876
        %v909 = vpack.c.b16 %v877, %v877
        %v910 = vpack.c.b16 %v878, %v878
        %v911 = vpack.c.b16 %v879, %v879
        %v912 = vpack.c.b16 %v880, %v880
        %v913 = vpack.c.b16 %v881, %v881
        %v914 = vpack.c.b16 %v882, %v882
        %v915 = vpack.c.b16 %v883, %v883
        %v916 = vpack.c.b16 %v884, %v884
        %v917 = vpack.c.b16 %v885, %v885
        %v918 = vpack.c.b16 %v886, %v886
        %v919 = vpack.c.b16 %v887, %v887
        %v920 = vpack.c.b16 %v888, %v888
        %v921 = vpack.c.b16 %v889, %v889
        %v922 = vpack.c.b16 %v890, %v890
        %v923 = vpack.c.b16 %v891, %v891
        %956 = vst [vmem:[%s257] sm:$0xf] %v892
        %957 = vst [vmem:[%s257 + $0x4] sm:$0xf] %v893
        %958 = vst [vmem:[%s257 + $0x8] sm:$0xf] %v894
        %959 = vst [vmem:[%s257 + $0xc] sm:$0xf] %v895
        %960 = vst [vmem:[%s257 + $0x10] sm:$0xf] %v896
        %961 = vst [vmem:[%s257 + $0x14] sm:$0xf] %v897
        %962 = vst [vmem:[%s257 + $0x18] sm:$0xf] %v898
        %963 = vst [vmem:[%s257 + $0x1c] sm:$0xf] %v899
        %964 = vst [vmem:[%s257 + $0x20] sm:$0xf] %v900
        %965 = vst [vmem:[%s257 + $0x24] sm:$0xf] %v901
        %966 = vst [vmem:[%s257 + $0x28] sm:$0xf] %v902
        %967 = vst [vmem:[%s257 + $0x2c] sm:$0xf] %v903
        %968 = vst [vmem:[%s257 + $0x30] sm:$0xf] %v904
        %969 = vst [vmem:[%s257 + $0x34] sm:$0xf] %v905
        %970 = vst [vmem:[%s257 + $0x38] sm:$0xf] %v906
        %971 = vst [vmem:[%s257 + $0x3c] sm:$0xf] %v907
        %972 = vst [vmem:[%s257 + $0x40] sm:$0xf] %v908
        %973 = vst [vmem:[%s257 + $0x44] sm:$0xf] %v909
        %974 = vst [vmem:[%s257 + $0x48] sm:$0xf] %v910
        %975 = vst [vmem:[%s257 + $0x4c] sm:$0xf] %v911
        %976 = vst [vmem:[%s257 + $0x50] sm:$0xf] %v912
        %977 = vst [vmem:[%s257 + $0x54] sm:$0xf] %v913
        %978 = vst [vmem:[%s257 + $0x58] sm:$0xf] %v914
        %979 = vst [vmem:[%s257 + $0x5c] sm:$0xf] %v915
        %980 = vst [vmem:[%s257 + $0x60] sm:$0xf] %v916
        %981 = vst [vmem:[%s257 + $0x64] sm:$0xf] %v917
        %982 = vst [vmem:[%s257 + $0x68] sm:$0xf] %v918
        %983 = vst [vmem:[%s257 + $0x6c] sm:$0xf] %v919
        %984 = vst [vmem:[%s257 + $0x70] sm:$0xf] %v920
        %985 = vst [vmem:[%s257 + $0x74] sm:$0xf] %v921
        %986 = vst [vmem:[%s257 + $0x78] sm:$0xf] %v922
        %987 = vst [vmem:[%s257 + $0x7c] sm:$0xf] %v923
      $region40: #{bottleneck_forward.4} parent=31 // pred_fallthru
        _
      %s988 = smul.u32 32, %s19
      %p989 = scmp.lt.s32.totalorder %s988, 63
      %s990 = scalar_select %p989, %s988, 63
      %p991 = scmp.lt.s32.totalorder %s20, 0
      %s992 = scalar_select %p991, %s20, 0
      %s993 = sadd.s32 %s992, %s990
      %s994 = smul.addr %s993, 4
      %s995 = scalar_lea.vmem %s3, %s994
      // Predicated region
      $region41: #{bottleneck_forward.4} parent=31 // pred_check
        %p996 = pneg %p135
      $region42: #{bottleneck_forward.4} parent=31 // pred_check_branch
        %998 = sbr.rel (%p996) target = $region44
      $region43: #{bottleneck_forward.4} parent=31 // pred_region
        %s999 = smul.u32 32, %s19
      $region44: #{bottleneck_forward.4} parent=31 // pred_fallthru
        _
    $region32: #{bottleneck_forward.4} parent=5 // pred_fallthru
      _
    %p1000 = scmp.le.s32.totalorder 2, %s9
    // Predicated region
    $region45: #{bottleneck_forward.4} parent=5 // pred_check
      %p1001 = pneg %p1000
    $region46: #{bottleneck_forward.4} parent=5 // pred_check_branch
      %1003 = sbr.rel (%p1001) target = $region48
    $region47: #{bottleneck_forward.4} parent=5 // pred_region
      %s1004 = ssub.s32 %s9, 2
      // Predicated region
      $region49: #{bottleneck_forward.4} parent=47 // pred_check
        %p1005 = pneg %p141
      $region50: #{bottleneck_forward.4} parent=47 // pred_check_branch
        %1007 = sbr.rel (%p1005) target = $region52
      $region51: #{bottleneck_forward.4} parent=47 // pred_region
        %s1008 = smul.u32 32, %s22
        %p1009 = scmp.lt.s32.totalorder %s1008, 63
        %s1010 = scalar_select %p1009, %s1008, 63
        %p1011 = scmp.lt.s32.totalorder %s23, 0
        %s1012 = scalar_select %p1011, %s23, 0
        %s1013 = sadd.s32 %s1012, %s1010
        %s1014 = smul.addr %s1013, 4
        %s1015 = scalar_lea.vmem %s3, %s1014
      $region52: #{bottleneck_forward.4} parent=47 // pred_fallthru
        _
    $region48: #{bottleneck_forward.4} parent=5 // pred_fallthru
      _
  $region6: #{bottleneck_forward.4} parent=0 // loop_footer
    %s13 = sadd.s32 1, %s9
  $region7: #{bottleneck_forward.4} parent=0 // loop_footer_branch
    %8 = sbr.rel target = $region3
  $region8: #{bottleneck_forward.4} parent=0 // loop_exit
    _

// kernel: bottleneck_forward.7
$region0: #{bottleneck_forward.7}
  #allocation0 [shape = 'u32[]', space=smem, size = 0x4, offset = 0x4, fixed_abs, tag = 'smem constant byte address 0x4 - core index']
  #allocation1 [shape = 'u32[144,128]{1,0:T(1,128)}', space=vmem, size = 0x12000, scoped, tag = 'internal scratch']
  #allocation2 [shape = 'f32[128,128]{1,0:T(8,128)}', space=vmem, size = 0x10000, scoped, tag = 'scratch operand']
  %s0 = inlined_call_operand.vmem [shape: bf16[128,128], index: 0, kind: input, shape index: {}]
  %s1 = inlined_call_operand.vmem [shape: bf16[128,128], index: 1, kind: input, shape index: {}]
  %s2 = inlined_call_operand.vmem [shape: f32[1,128], index: 2, kind: input, shape index: {}]
  %s3 = inlined_call_operand.vmem [shape: bf16[128,128], index: 3, kind: input, shape index: {}]
  %s4 = inlined_call_operand.vmem [shape: bf16[128,128], index: 4, kind: output, shape index: {}]
  %s5 = sld [smem:[#allocation0]]
  $region34: #{bottleneck_forward.7} parent=0
    _
  %s7 = ssub.s32 1, %s5
  %s8 = scalar_select 0, %s7, %s5
  // Predicated region
  $region2: #{bottleneck_forward.7} parent=0 // pred_check
    _
  $region3: #{bottleneck_forward.7} parent=0 // pred_check_branch
    %10 = sbr.rel (0) target = $region5
  $region4: #{bottleneck_forward.7} parent=0 // pred_region
    _
  $region5: #{bottleneck_forward.7} parent=0 // pred_fallthru
    _
  // Predicated region
  $region6: #{bottleneck_forward.7} parent=0 // pred_check
    _
  $region7: #{bottleneck_forward.7} parent=0 // pred_check_branch
    %12 = sbr.rel (0) target = $region9
  $region8: #{bottleneck_forward.7} parent=0 // pred_region
    _
  $region9: #{bottleneck_forward.7} parent=0 // pred_fallthru
    _
  // Predicated region
  $region10: #{bottleneck_forward.7} parent=0 // pred_check
    _
  $region11: #{bottleneck_forward.7} parent=0 // pred_check_branch
    %14 = sbr.rel (0) target = $region13
  $region12: #{bottleneck_forward.7} parent=0 // pred_region
    _
  $region13: #{bottleneck_forward.7} parent=0 // pred_fallthru
    _
  // Predicated region
  $region14: #{bottleneck_forward.7} parent=0 // pred_check
    _
  $region15: #{bottleneck_forward.7} parent=0 // pred_check_branch
    %16 = sbr.rel (0) target = $region17
  $region16: #{bottleneck_forward.7} parent=0 // pred_region
    _
  $region17: #{bottleneck_forward.7} parent=0 // pred_fallthru
    _
  %p18 = scmp.eq.s32.totalorder 0, 0
  // Predicated region
  $region18: #{bottleneck_forward.7} parent=0 // pred_check
    %p19 = pneg %p18
  $region19: #{bottleneck_forward.7} parent=0 // pred_check_branch
    %21 = sbr.rel (%p19) target = $region21
  $region20: #{bottleneck_forward.7} parent=0 // pred_region
    %22 = vst [vmem:[#allocation2] sm:$0xff] 0.0
    %23 = vst [vmem:[#allocation2 + $0x8] sm:$0xff] 0.0
    %24 = vst [vmem:[#allocation2 + $0x10] sm:$0xff] 0.0
    %25 = vst [vmem:[#allocation2 + $0x18] sm:$0xff] 0.0
    %26 = vst [vmem:[#allocation2 + $0x20] sm:$0xff] 0.0
    %27 = vst [vmem:[#allocation2 + $0x28] sm:$0xff] 0.0
    %28 = vst [vmem:[#allocation2 + $0x30] sm:$0xff] 0.0
    %29 = vst [vmem:[#allocation2 + $0x38] sm:$0xff] 0.0
    %30 = vst [vmem:[#allocation2 + $0x40] sm:$0xff] 0.0
    %31 = vst [vmem:[#allocation2 + $0x48] sm:$0xff] 0.0
    %32 = vst [vmem:[#allocation2 + $0x50] sm:$0xff] 0.0
    %33 = vst [vmem:[#allocation2 + $0x58] sm:$0xff] 0.0
    %34 = vst [vmem:[#allocation2 + $0x60] sm:$0xff] 0.0
    %35 = vst [vmem:[#allocation2 + $0x68] sm:$0xff] 0.0
    %36 = vst [vmem:[#allocation2 + $0x70] sm:$0xff] 0.0
    %37 = vst [vmem:[#allocation2 + $0x78] sm:$0xff] 0.0
  $region21: #{bottleneck_forward.7} parent=0 // pred_fallthru
    _
  %v38 = vld [vmem:[#allocation2] sm:$0xff]
  %v39 = vld [vmem:[#allocation2 + $0x8] sm:$0xff]
  %v40 = vld [vmem:[#allocation2 + $0x10] sm:$0xff]
  %v41 = vld [vmem:[#allocation2 + $0x18] sm:$0xff]
  %v42 = vld [vmem:[#allocation2 + $0x20] sm:$0xff]
  %v43 = vld [vmem:[#allocation2 + $0x28] sm:$0xff]
  %v44 = vld [vmem:[#allocation2 + $0x30] sm:$0xff]
  %v45 = vld [vmem:[#allocation2 + $0x38] sm:$0xff]
  %v46 = vld [vmem:[#allocation2 + $0x40] sm:$0xff]
  %v47 = vld [vmem:[#allocation2 + $0x48] sm:$0xff]
  %v48 = vld [vmem:[#allocation2 + $0x50] sm:$0xff]
  %v49 = vld [vmem:[#allocation2 + $0x58] sm:$0xff]
  %v50 = vld [vmem:[#allocation2 + $0x60] sm:$0xff]
  %v51 = vld [vmem:[#allocation2 + $0x68] sm:$0xff]
  %v52 = vld [vmem:[#allocation2 + $0x70] sm:$0xff]
  %v53 = vld [vmem:[#allocation2 + $0x78] sm:$0xff]
  %v54 = vld [vmem:[%s0] sm:$0xf]
  %v55 = vld [vmem:[%s0 + $0x4] sm:$0xf]
  %v56 = vld [vmem:[%s0 + $0x8] sm:$0xf]
  %v57 = vld [vmem:[%s0 + $0xc] sm:$0xf]
  %v58 = vld [vmem:[%s0 + $0x10] sm:$0xf]
  %v59 = vld [vmem:[%s0 + $0x14] sm:$0xf]
  %v60 = vld [vmem:[%s0 + $0x18] sm:$0xf]
  %v61 = vld [vmem:[%s0 + $0x1c] sm:$0xf]
  %v62 = vld [vmem:[%s0 + $0x20] sm:$0xf]
  %v63 = vld [vmem:[%s0 + $0x24] sm:$0xf]
  %v64 = vld [vmem:[%s0 + $0x28] sm:$0xf]
  %v65 = vld [vmem:[%s0 + $0x2c] sm:$0xf]
  %v66 = vld [vmem:[%s0 + $0x30] sm:$0xf]
  %v67 = vld [vmem:[%s0 + $0x34] sm:$0xf]
  %v68 = vld [vmem:[%s0 + $0x38] sm:$0xf]
  %v69 = vld [vmem:[%s0 + $0x3c] sm:$0xf]
  %v70 = vld [vmem:[%s1] sm:$0xf]
  %v71 = vld [vmem:[%s1 + $0x4] sm:$0xf]
  %v72 = vld [vmem:[%s1 + $0x8] sm:$0xf]
  %v73 = vld [vmem:[%s1 + $0xc] sm:$0xf]
  %v74 = vld [vmem:[%s1 + $0x10] sm:$0xf]
  %v75 = vld [vmem:[%s1 + $0x14] sm:$0xf]
  %v76 = vld [vmem:[%s1 + $0x18] sm:$0xf]
  %v77 = vld [vmem:[%s1 + $0x1c] sm:$0xf]
  %v78 = vld [vmem:[%s1 + $0x20] sm:$0xf]
  %v79 = vld [vmem:[%s1 + $0x24] sm:$0xf]
  %v80 = vld [vmem:[%s1 + $0x28] sm:$0xf]
  %v81 = vld [vmem:[%s1 + $0x2c] sm:$0xf]
  %v82 = vld [vmem:[%s1 + $0x30] sm:$0xf]
  %v83 = vld [vmem:[%s1 + $0x34] sm:$0xf]
  %v84 = vld [vmem:[%s1 + $0x38] sm:$0xf]
  %v85 = vld [vmem:[%s1 + $0x3c] sm:$0xf]
  %v102 = vunpack.c.l.b16 %v54
  %v103 = vunpack.c.l.b16 %v55
  %v104 = vunpack.c.l.b16 %v56
  %v105 = vunpack.c.l.b16 %v57
  %v106 = vunpack.c.l.b16 %v58
  %v107 = vunpack.c.l.b16 %v59
  %v108 = vunpack.c.l.b16 %v60
  %v109 = vunpack.c.l.b16 %v61
  %v110 = vunpack.c.l.b16 %v62
  %v111 = vunpack.c.l.b16 %v63
  %v112 = vunpack.c.l.b16 %v64
  %v113 = vunpack.c.l.b16 %v65
  %v114 = vunpack.c.l.b16 %v66
  %v115 = vunpack.c.l.b16 %v67
  %v116 = vunpack.c.l.b16 %v68
  %v117 = vunpack.c.l.b16 %v69
  %v118 = vpack.c.b16 %v103, %v102
  %v119 = vpack.c.b16 %v105, %v104
  %v120 = vpack.c.b16 %v107, %v106
  %v121 = vpack.c.b16 %v109, %v108
  %v122 = vpack.c.b16 %v111, %v110
  %v123 = vpack.c.b16 %v113, %v112
  %v124 = vpack.c.b16 %v115, %v114
  %v125 = vpack.c.b16 %v117, %v116
  %v150 = vunpack.c.l.b16 %v70
  %v151 = vunpack.c.l.b16 %v71
  %v152 = vunpack.c.l.b16 %v72
  %v153 = vunpack.c.l.b16 %v73
  %v154 = vunpack.c.l.b16 %v74
  %v155 = vunpack.c.l.b16 %v75
  %v156 = vunpack.c.l.b16 %v76
  %v157 = vunpack.c.l.b16 %v77
  %v158 = vunpack.c.l.b16 %v78
  %v159 = vunpack.c.l.b16 %v79
  %v160 = vunpack.c.l.b16 %v80
  %v161 = vunpack.c.l.b16 %v81
  %v162 = vunpack.c.l.b16 %v82
  %v163 = vunpack.c.l.b16 %v83
  %v164 = vunpack.c.l.b16 %v84
  %v165 = vunpack.c.l.b16 %v85
  %v166 = vpack.c.b16 %v151, %v150
  %v167 = vpack.c.b16 %v153, %v152
  %v168 = vpack.c.b16 %v155, %v154
  %v169 = vpack.c.b16 %v157, %v156
  %v170 = vpack.c.b16 %v159, %v158
  %v171 = vpack.c.b16 %v161, %v160
  %v172 = vpack.c.b16 %v163, %v162
  %v173 = vpack.c.b16 %v165, %v164
  %182 = vmatprep.subr.bf16.mxu0 0
  %183 = vmatpush1.bf16.msra.mxu0 %v166
  %184 = vmatprep.subr.bf16.mxu0 0
  %185 = vmatpush1.bf16.msra.mxu0 %v167
  %186 = vmatprep.subr.bf16.mxu0 0
  %187 = vmatpush1.bf16.msra.mxu0 %v168
  %188 = vmatprep.subr.bf16.mxu0 0
  %189 = vmatpush1.bf16.msra.mxu0 %v169
  %190 = vmatprep.subr.bf16.mxu0 0
  %191 = vmatpush1.bf16.msra.mxu0 %v170
  %192 = vmatprep.subr.bf16.mxu0 0
  %193 = vmatpush1.bf16.msra.mxu0 %v171
  %194 = vmatprep.subr.bf16.mxu0 0
  %195 = vmatpush1.bf16.msra.mxu0 %v172
  %196 = vmatprep.subr.bf16.mxu0 0
  %197 = vmatpush1.bf16.msra.mxu0 %v173
  %198 = vmatprep.subr.bf16.mxu0 0
  %199 = vmatpush1.bf16.msra.mxu0 0
  %200 = vmatprep.subr.bf16.mxu0 0
  %201 = vmatpush1.bf16.msra.mxu0 0
  %202 = vmatprep.subr.bf16.mxu0 0
  %203 = vmatpush1.bf16.msra.mxu0 0
  %204 = vmatprep.subr.bf16.mxu0 0
  %205 = vmatpush1.bf16.msra.mxu0 0
  %206 = vmatprep.subr.bf16.mxu0 0
  %207 = vmatpush1.bf16.msra.mxu0 0
  %208 = vmatprep.subr.bf16.mxu0 0
  %209 = vmatpush1.bf16.msra.mxu0 0
  %210 = vmatprep.subr.bf16.mxu0 0
  %211 = vmatpush1.bf16.msra.mxu0 0
  %212 = vmatprep.subr.bf16.mxu0 0
  %213 = vmatpush1.bf16.msra.mxu0 0
  %214 = vmatprep.mubr.bf16.mxu0 0
  %215 = vmatmul.mubr.bf16.gmra.mrb[0].mxu0 %v118
  %v216 = vpop.f32.mrb[0].mxu0
  %v217 = vadd.f32 0.0, %v216
  %v218 = vpop.f32.mrb[0].mxu0
  %v219 = vpop.f32.mrb[0].mxu0
  %v220 = vadd.f32 0.0, %v219
  %v221 = vpop.f32.mrb[0].mxu0
  %222 = vmatprep.mubr.bf16.mxu0 0
  %223 = vmatmul.mubr.bf16.gmra.mrb[0].mxu0 %v119
  %v224 = vpop.f32.mrb[0].mxu0
  %v225 = vadd.f32 0.0, %v224
  %v226 = vpop.f32.mrb[0].mxu0
  %v227 = vpop.f32.mrb[0].mxu0
  %v228 = vadd.f32 0.0, %v227
  %v229 = vpop.f32.mrb[0].mxu0
  %230 = vmatprep.mubr.bf16.mxu0 0
  %231 = vmatmul.mubr.bf16.gmra.mrb[0].mxu0 %v120
  %v232 = vpop.f32.mrb[0].mxu0
  %v233 = vadd.f32 0.0, %v232
  %v234 = vpop.f32.mrb[0].mxu0
  %v235 = vpop.f32.mrb[0].mxu0
  %v236 = vadd.f32 0.0, %v235
  %v237 = vpop.f32.mrb[0].mxu0
  %238 = vmatprep.mubr.bf16.mxu0 0
  %239 = vmatmul.mubr.bf16.gmra.mrb[0].mxu0 %v121
  %v240 = vpop.f32.mrb[0].mxu0
  %v241 = vadd.f32 0.0, %v240
  %v242 = vpop.f32.mrb[0].mxu0
  %v243 = vpop.f32.mrb[0].mxu0
  %v244 = vadd.f32 0.0, %v243
  %v245 = vpop.f32.mrb[0].mxu0
  %246 = vmatprep.mubr.bf16.mxu0 0
  %247 = vmatmul.mubr.bf16.gmra.mrb[0].mxu0 %v122
  %v248 = vpop.f32.mrb[0].mxu0
  %v249 = vadd.f32 0.0, %v248
  %v250 = vpop.f32.mrb[0].mxu0
  %v251 = vpop.f32.mrb[0].mxu0
  %v252 = vadd.f32 0.0, %v251
  %v253 = vpop.f32.mrb[0].mxu0
  %254 = vmatprep.mubr.bf16.mxu0 0
  %255 = vmatmul.mubr.bf16.gmra.mrb[0].mxu0 %v123
  %v256 = vpop.f32.mrb[0].mxu0
  %v257 = vadd.f32 0.0, %v256
  %v258 = vpop.f32.mrb[0].mxu0
  %v259 = vpop.f32.mrb[0].mxu0
  %v260 = vadd.f32 0.0, %v259
  %v261 = vpop.f32.mrb[0].mxu0
  %262 = vmatprep.mubr.bf16.mxu0 0
  %263 = vmatmul.mubr.bf16.gmra.mrb[0].mxu0 %v124
  %v264 = vpop.f32.mrb[0].mxu0
  %v265 = vadd.f32 0.0, %v264
  %v266 = vpop.f32.mrb[0].mxu0
  %v267 = vpop.f32.mrb[0].mxu0
  %v268 = vadd.f32 0.0, %v267
  %v269 = vpop.f32.mrb[0].mxu0
  %270 = vmatprep.mubr.bf16.mxu0 0
  %271 = vmatmul.mubr.bf16.gmra.mrb[0].mxu0 %v125
  %v272 = vpop.f32.mrb[0].mxu0
  %v273 = vadd.f32 0.0, %v272
  %v274 = vpop.f32.mrb[0].mxu0
  %v275 = vpop.f32.mrb[0].mxu0
  %v276 = vadd.f32 0.0, %v275
  %v277 = vpop.f32.mrb[0].mxu0
  %278 = vdwg.mxu0
  %v279 = vadd.f32 %v38, %v217
  %v280 = vadd.f32 %v39, %v220
  %v281 = vadd.f32 %v40, %v225
  %v282 = vadd.f32 %v41, %v228
  %v283 = vadd.f32 %v42, %v233
  %v284 = vadd.f32 %v43, %v236
  %v285 = vadd.f32 %v44, %v241
  %v286 = vadd.f32 %v45, %v244
  %v287 = vadd.f32 %v46, %v249
  %v288 = vadd.f32 %v47, %v252
  %v289 = vadd.f32 %v48, %v257
  %v290 = vadd.f32 %v49, %v260
  %v291 = vadd.f32 %v50, %v265
  %v292 = vadd.f32 %v51, %v268
  %v293 = vadd.f32 %v52, %v273
  %v294 = vadd.f32 %v53, %v276
  %295 = vst [vmem:[#allocation2] sm:$0xff] %v279
  %296 = vst [vmem:[#allocation2 + $0x8] sm:$0xff] %v280
  %297 = vst [vmem:[#allocation2 + $0x10] sm:$0xff] %v281
  %298 = vst [vmem:[#allocation2 + $0x18] sm:$0xff] %v282
  %299 = vst [vmem:[#allocation2 + $0x20] sm:$0xff] %v283
  %300 = vst [vmem:[#allocation2 + $0x28] sm:$0xff] %v284
  %301 = vst [vmem:[#allocation2 + $0x30] sm:$0xff] %v285
  %302 = vst [vmem:[#allocation2 + $0x38] sm:$0xff] %v286
  %303 = vst [vmem:[#allocation2 + $0x40] sm:$0xff] %v287
  %304 = vst [vmem:[#allocation2 + $0x48] sm:$0xff] %v288
  %305 = vst [vmem:[#allocation2 + $0x50] sm:$0xff] %v289
  %306 = vst [vmem:[#allocation2 + $0x58] sm:$0xff] %v290
  %307 = vst [vmem:[#allocation2 + $0x60] sm:$0xff] %v291
  %308 = vst [vmem:[#allocation2 + $0x68] sm:$0xff] %v292
  %309 = vst [vmem:[#allocation2 + $0x70] sm:$0xff] %v293
  %310 = vst [vmem:[#allocation2 + $0x78] sm:$0xff] %v294
  // Predicated region
  $region22: #{bottleneck_forward.7} parent=0 // pred_check
    %p311 = pneg %p18
  $region23: #{bottleneck_forward.7} parent=0 // pred_check_branch
    %313 = sbr.rel (%p311) target = $region25
  $region24: #{bottleneck_forward.7} parent=0 // pred_region
    %v314 = vld [vmem:[#allocation2] sm:$0xff]
    %v315 = vld [vmem:[#allocation2 + $0x8] sm:$0xff]
    %v316 = vld [vmem:[#allocation2 + $0x10] sm:$0xff]
    %v317 = vld [vmem:[#allocation2 + $0x18] sm:$0xff]
    %v318 = vld [vmem:[#allocation2 + $0x20] sm:$0xff]
    %v319 = vld [vmem:[#allocation2 + $0x28] sm:$0xff]
    %v320 = vld [vmem:[#allocation2 + $0x30] sm:$0xff]
    %v321 = vld [vmem:[#allocation2 + $0x38] sm:$0xff]
    %v322 = vld [vmem:[#allocation2 + $0x40] sm:$0xff]
    %v323 = vld [vmem:[#allocation2 + $0x48] sm:$0xff]
    %v324 = vld [vmem:[#allocation2 + $0x50] sm:$0xff]
    %v325 = vld [vmem:[#allocation2 + $0x58] sm:$0xff]
    %v326 = vld [vmem:[#allocation2 + $0x60] sm:$0xff]
    %v327 = vld [vmem:[#allocation2 + $0x68] sm:$0xff]
    %v328 = vld [vmem:[#allocation2 + $0x70] sm:$0xff]
    %v329 = vld [vmem:[#allocation2 + $0x78] sm:$0xff]
    %v330 = vld [vmem:[%s2] sm:$0x1]
    %v332 = vlaneseq
    %v333 = vshrl.u32 %v332, 7
    %v334 = vsub.s32 0, %v333
    %v335 = vrot.slane %v330, %v334
    %v337 = vadd.f32 %v314, %v335
    %v338 = vadd.f32 %v315, %v335
    %v339 = vadd.f32 %v316, %v335
    %v340 = vadd.f32 %v317, %v335
    %v341 = vadd.f32 %v318, %v335
    %v342 = vadd.f32 %v319, %v335
    %v343 = vadd.f32 %v320, %v335
    %v344 = vadd.f32 %v321, %v335
    %v345 = vadd.f32 %v322, %v335
    %v346 = vadd.f32 %v323, %v335
    %v347 = vadd.f32 %v324, %v335
    %v348 = vadd.f32 %v325, %v335
    %v349 = vadd.f32 %v326, %v335
    %v350 = vadd.f32 %v327, %v335
    %v351 = vadd.f32 %v328, %v335
    %v352 = vadd.f32 %v329, %v335
    %v353 = vld [vmem:[%s3] sm:$0xf]
    %v354 = vld [vmem:[%s3 + $0x4] sm:$0xf]
    %v355 = vld [vmem:[%s3 + $0x8] sm:$0xf]
    %v356 = vld [vmem:[%s3 + $0xc] sm:$0xf]
    %v357 = vld [vmem:[%s3 + $0x10] sm:$0xf]
    %v358 = vld [vmem:[%s3 + $0x14] sm:$0xf]
    %v359 = vld [vmem:[%s3 + $0x18] sm:$0xf]
    %v360 = vld [vmem:[%s3 + $0x1c] sm:$0xf]
    %v361 = vld [vmem:[%s3 + $0x20] sm:$0xf]
    %v362 = vld [vmem:[%s3 + $0x24] sm:$0xf]
    %v363 = vld [vmem:[%s3 + $0x28] sm:$0xf]
    %v364 = vld [vmem:[%s3 + $0x2c] sm:$0xf]
    %v365 = vld [vmem:[%s3 + $0x30] sm:$0xf]
    %v366 = vld [vmem:[%s3 + $0x34] sm:$0xf]
    %v367 = vld [vmem:[%s3 + $0x38] sm:$0xf]
    %v368 = vld [vmem:[%s3 + $0x3c] sm:$0xf]
    %v369 = vunpack.c.l.bf16 %v353
    %v370 = vunpack.c.l.bf16 %v354
    %v371 = vunpack.c.l.bf16 %v355
    %v372 = vunpack.c.l.bf16 %v356
    %v373 = vunpack.c.l.bf16 %v357
    %v374 = vunpack.c.l.bf16 %v358
    %v375 = vunpack.c.l.bf16 %v359
    %v376 = vunpack.c.l.bf16 %v360
    %v377 = vunpack.c.l.bf16 %v361
    %v378 = vunpack.c.l.bf16 %v362
    %v379 = vunpack.c.l.bf16 %v363
    %v380 = vunpack.c.l.bf16 %v364
    %v381 = vunpack.c.l.bf16 %v365
    %v382 = vunpack.c.l.bf16 %v366
    %v383 = vunpack.c.l.bf16 %v367
    %v384 = vunpack.c.l.bf16 %v368
    %v385 = vadd.f32 %v337, %v369
    %v386 = vadd.f32 %v338, %v370
    %v387 = vadd.f32 %v339, %v371
    %v388 = vadd.f32 %v340, %v372
    %v389 = vadd.f32 %v341, %v373
    %v390 = vadd.f32 %v342, %v374
    %v391 = vadd.f32 %v343, %v375
    %v392 = vadd.f32 %v344, %v376
    %v393 = vadd.f32 %v345, %v377
    %v394 = vadd.f32 %v346, %v378
    %v395 = vadd.f32 %v347, %v379
    %v396 = vadd.f32 %v348, %v380
    %v397 = vadd.f32 %v349, %v381
    %v398 = vadd.f32 %v350, %v382
    %v399 = vadd.f32 %v351, %v383
    %v400 = vadd.f32 %v352, %v384
    %v401 = vmax.f32 %v385, 0.0
    %v402 = vmax.f32 %v386, 0.0
    %v403 = vmax.f32 %v387, 0.0
    %v404 = vmax.f32 %v388, 0.0
    %v405 = vmax.f32 %v389, 0.0
    %v406 = vmax.f32 %v390, 0.0
    %v407 = vmax.f32 %v391, 0.0
    %v408 = vmax.f32 %v392, 0.0
    %v409 = vmax.f32 %v393, 0.0
    %v410 = vmax.f32 %v394, 0.0
    %v411 = vmax.f32 %v395, 0.0
    %v412 = vmax.f32 %v396, 0.0
    %v413 = vmax.f32 %v397, 0.0
    %v414 = vmax.f32 %v398, 0.0
    %v415 = vmax.f32 %v399, 0.0
    %v416 = vmax.f32 %v400, 0.0
    %v417 = vpack.c.bf16 %v402, %v401
    %v418 = vpack.c.bf16 %v404, %v403
    %v419 = vpack.c.bf16 %v406, %v405
    %v420 = vpack.c.bf16 %v408, %v407
    %v421 = vpack.c.bf16 %v410, %v409
    %v422 = vpack.c.bf16 %v412, %v411
    %v423 = vpack.c.bf16 %v414, %v413
    %v424 = vpack.c.bf16 %v416, %v415
    %v433 = vunpack.c.l.b16 %v417
    %v434 = vunpack.c.h.b16 %v417
    %v435 = vunpack.c.l.b16 %v418
    %v436 = vunpack.c.h.b16 %v418
    %v437 = vunpack.c.l.b16 %v419
    %v438 = vunpack.c.h.b16 %v419
    %v439 = vunpack.c.l.b16 %v420
    %v440 = vunpack.c.h.b16 %v420
    %v441 = vunpack.c.l.b16 %v421
    %v442 = vunpack.c.h.b16 %v421
    %v443 = vunpack.c.l.b16 %v422
    %v444 = vunpack.c.h.b16 %v422
    %v445 = vunpack.c.l.b16 %v423
    %v446 = vunpack.c.h.b16 %v423
    %v447 = vunpack.c.l.b16 %v424
    %v448 = vunpack.c.h.b16 %v424
    %v449 = vpack.c.b16 %v433, %v433
    %v450 = vpack.c.b16 %v434, %v434
    %v451 = vpack.c.b16 %v435, %v435
    %v452 = vpack.c.b16 %v436, %v436
    %v453 = vpack.c.b16 %v437, %v437
    %v454 = vpack.c.b16 %v438, %v438
    %v455 = vpack.c.b16 %v439, %v439
    %v456 = vpack.c.b16 %v440, %v440
    %v457 = vpack.c.b16 %v441, %v441
    %v458 = vpack.c.b16 %v442, %v442
    %v459 = vpack.c.b16 %v443, %v443
    %v460 = vpack.c.b16 %v444, %v444
    %v461 = vpack.c.b16 %v445, %v445
    %v462 = vpack.c.b16 %v446, %v446
    %v463 = vpack.c.b16 %v447, %v447
    %v464 = vpack.c.b16 %v448, %v448
    %481 = vst [vmem:[%s4] sm:$0xf] %v449
    %482 = vst [vmem:[%s4 + $0x4] sm:$0xf] %v450
    %483 = vst [vmem:[%s4 + $0x8] sm:$0xf] %v451
    %484 = vst [vmem:[%s4 + $0xc] sm:$0xf] %v452
    %485 = vst [vmem:[%s4 + $0x10] sm:$0xf] %v453
    %486 = vst [vmem:[%s4 + $0x14] sm:$0xf] %v454
    %487 = vst [vmem:[%s4 + $0x18] sm:$0xf] %v455
    %488 = vst [vmem:[%s4 + $0x1c] sm:$0xf] %v456
    %489 = vst [vmem:[%s4 + $0x20] sm:$0xf] %v457
    %490 = vst [vmem:[%s4 + $0x24] sm:$0xf] %v458
    %491 = vst [vmem:[%s4 + $0x28] sm:$0xf] %v459
    %492 = vst [vmem:[%s4 + $0x2c] sm:$0xf] %v460
    %493 = vst [vmem:[%s4 + $0x30] sm:$0xf] %v461
    %494 = vst [vmem:[%s4 + $0x34] sm:$0xf] %v462
    %495 = vst [vmem:[%s4 + $0x38] sm:$0xf] %v463
    %496 = vst [vmem:[%s4 + $0x3c] sm:$0xf] %v464
  $region25: #{bottleneck_forward.7} parent=0 // pred_fallthru
    _
  // Predicated region
  $region26: #{bottleneck_forward.7} parent=0 // pred_check
    _
  $region27: #{bottleneck_forward.7} parent=0 // pred_check_branch
    %498 = sbr.rel (0) target = $region29
  $region28: #{bottleneck_forward.7} parent=0 // pred_region
    _
  $region29: #{bottleneck_forward.7} parent=0 // pred_fallthru
    _
  // Predicated region
  $region30: #{bottleneck_forward.7} parent=0 // pred_check
    _
  $region31: #{bottleneck_forward.7} parent=0 // pred_check_branch
    %500 = sbr.rel (0) target = $region33
  $region32: #{bottleneck_forward.7} parent=0 // pred_region
    _
  $region33: #{bottleneck_forward.7} parent=0 // pred_fallthru
    _

// kernel: bottleneck_forward.5
$region0: #{bottleneck_forward.5}
  #allocation0 [shape = 'u32[]', space=smem, size = 0x4, offset = 0x4, fixed_abs, tag = 'smem constant byte address 0x4 - core index']
  #allocation1 [shape = 'u32[144,128]{1,0:T(1,128)}', space=vmem, size = 0x12000, scoped, tag = 'internal scratch']
  %s0 = inlined_call_operand.vmem [shape: bf16[8,10,10,128], index: 0, kind: input, shape index: {}]
  %s1 = inlined_call_operand.vmem [shape: bf16[9,128,128], index: 1, kind: input, shape index: {}]
  %s2 = inlined_call_operand.vmem [shape: f32[1,128], index: 2, kind: input, shape index: {}]
  %s3 = inlined_call_operand.vmem [shape: bf16[128,128], index: 3, kind: output, shape index: {}]
  %s4 = sld [smem:[#allocation0]]
  $region45: #{bottleneck_forward.5} parent=0
    _
  %s6 = ssub.s32 1, %s4
  %s7 = scalar_select 0, %s6, %s4
  loop: start=0, step=1, limit=4
  $region2: #{bottleneck_forward.5} parent=0 // loop_pre_header
    _
  $region3: #{bottleneck_forward.5} parent=0 // loop_header
    %s9 = sphi 0, %s13
    %p10 = scmp.ge.s32.totalorder %s9, 4
    %s16 = sphi 0, %s28
    %s17 = sphi 0, %s24
    %s18 = sphi 0, %s16
    %s19 = sphi 0, %s17
    %s20 = sphi 0, %s18
    %s21 = sphi 0, %s19
    %s31 = sphi 0, %s33
    %s34 = sphi 0, %s31
    %s35 = sphi 0, %s34
    %s51 = sphi 0, %s35
    %s57 = sphi 0, %s59
    %s60 = sphi 0, %s57
    %s61 = sphi 0, %s60
    %s77 = sphi 0, %s61
    %s83 = sphi 0, %s85
    %s86 = sphi 0, %s83
    %s87 = sphi 0, %s86
    %s103 = sphi 0, %s87
    %s111 = sphi 0, %s113
    %s114 = sphi 0, %s111
    %s115 = sphi 0, %s114
    %s131 = sphi 0, %s115
  $region4: #{bottleneck_forward.5} parent=0 // loop_header_branch
    %12 = sbr.rel (%p10) target = $region8
  $region5: #{bottleneck_forward.5} parent=0 // loop_body
    %s14 = ssub.s32 %s9, 1
    %s15 = ssub.s32 %s9, 2
    %s22 = sadd.s32 1, %s17
    %p23 = scmp.ge.s32.totalorder %s22, 1
    %s24 = scalar_select %p23, 0, %s22
    %s25 = sadd.s32 1, %s16
    %s26 = scalar_select %p23, %s25, %s16
    %p27 = scmp.ge.s32.totalorder %s26, 2
    %s28 = scalar_select %p27, 0, %s26
    %s29 = ssub.s32 %s16, %s28
    %p30 = scmp.eq.s32.totalorder %s29, 0
    %s32 = sadd.s32 %s31, 1
    %s33 = scalar_select %p30, %s31, %s32
    %p36 = pneg %p30
    %p37 = scmp.eq.s32.totalorder %s9, 1
    %p38 = por %p36, %p37
    %p39 = scmp.ne.s32.totalorder %s31, %s34
    %p40 = scmp.eq.s32.totalorder %s9, 0
    %p41 = por %p39, %p40
    %p42 = scmp.ne.s32.totalorder %s31, %s34
    %p43 = scmp.eq.s32.totalorder %s14, 1
    %p44 = por %p42, %p43
    %p45 = scmp.ne.s32.totalorder %s34, %s35
    %p46 = scmp.eq.s32.totalorder %s14, 0
    %p47 = por %p45, %p46
    %p48 = scmp.ne.s32.totalorder %s34, %s35
    %p49 = scmp.eq.s32.totalorder %s15, 1
    %p50 = por %p48, %p49
    %p52 = scmp.ne.s32.totalorder %s35, %s51
    %p53 = scmp.eq.s32.totalorder %s15, 0
    %p54 = por %p52, %p53
    %s55 = ssub.s32 %s17, %s24
    %p56 = scmp.eq.s32.totalorder %s55, 0
    %s58 = sadd.s32 %s57, 1
    %s59 = scalar_select %p56, %s57, %s58
    %p62 = pneg %p56
    %p63 = scmp.eq.s32.totalorder %s9, 1
    %p64 = por %p62, %p63
    %p65 = scmp.ne.s32.totalorder %s57, %s60
    %p66 = scmp.eq.s32.totalorder %s9, 0
    %p67 = por %p65, %p66
    %p68 = scmp.ne.s32.totalorder %s57, %s60
    %p69 = scmp.eq.s32.totalorder %s14, 1
    %p70 = por %p68, %p69
    %p71 = scmp.ne.s32.totalorder %s60, %s61
    %p72 = scmp.eq.s32.totalorder %s14, 0
    %p73 = por %p71, %p72
    %p74 = scmp.ne.s32.totalorder %s60, %s61
    %p75 = scmp.eq.s32.totalorder %s15, 1
    %p76 = por %p74, %p75
    %p78 = scmp.ne.s32.totalorder %s61, %s77
    %p79 = scmp.eq.s32.totalorder %s15, 0
    %p80 = por %p78, %p79
    %s81 = ssub.s32 %s17, %s24
    %p82 = scmp.eq.s32.totalorder %s81, 0
    %s84 = sadd.s32 %s83, 1
    %s85 = scalar_select %p82, %s83, %s84
    %p88 = pneg %p82
    %p89 = scmp.eq.s32.totalorder %s9, 1
    %p90 = por %p88, %p89
    %p91 = scmp.ne.s32.totalorder %s83, %s86
    %p92 = scmp.eq.s32.totalorder %s9, 0
    %p93 = por %p91, %p92
    %p94 = scmp.ne.s32.totalorder %s83, %s86
    %p95 = scmp.eq.s32.totalorder %s14, 1
    %p96 = por %p94, %p95
    %p97 = scmp.ne.s32.totalorder %s86, %s87
    %p98 = scmp.eq.s32.totalorder %s14, 0
    %p99 = por %p97, %p98
    %p100 = scmp.ne.s32.totalorder %s86, %s87
    %p101 = scmp.eq.s32.totalorder %s15, 1
    %p102 = por %p100, %p101
    %p104 = scmp.ne.s32.totalorder %s87, %s103
    %p105 = scmp.eq.s32.totalorder %s15, 0
    %p106 = por %p104, %p105
    %s107 = ssub.s32 %s16, %s28
    %s108 = ssub.s32 %s17, %s24
    %s109 = sor.u32 %s107, %s108
    %p110 = scmp.eq.s32.totalorder %s109, 0
    %s112 = sadd.s32 %s111, 1
    %s113 = scalar_select %p110, %s111, %s112
    %p116 = pneg %p110
    %p117 = scmp.eq.s32.totalorder %s9, 1
    %p118 = por %p116, %p117
    %p119 = scmp.ne.s32.totalorder %s111, %s114
    %p120 = scmp.eq.s32.totalorder %s9, 0
    %p121 = por %p119, %p120
    %p122 = scmp.ne.s32.totalorder %s111, %s114
    %p123 = scmp.eq.s32.totalorder %s14, 1
    %p124 = por %p122, %p123
    %p125 = scmp.ne.s32.totalorder %s114, %s115
    %p126 = scmp.eq.s32.totalorder %s14, 0
    %p127 = por %p125, %p126
    %p128 = scmp.ne.s32.totalorder %s114, %s115
    %p129 = scmp.eq.s32.totalorder %s15, 1
    %p130 = por %p128, %p129
    %p132 = scmp.ne.s32.totalorder %s115, %s131
    %p133 = scmp.eq.s32.totalorder %s15, 0
    %p134 = por %p132, %p133
    %p135 = scmp.le.s32.totalorder 1, %s9
    %p136 = scmp.lt.s32.totalorder %s9, 3
    %p137 = pnand %p135, %p136
    %p138 = pneg %p137
    // Predicated region
    $region9: #{bottleneck_forward.5} parent=5 // pred_check
      _
    $region10: #{bottleneck_forward.5} parent=5 // pred_check_branch
      %140 = sbr.rel (%p137) target = $region12
    $region11: #{bottleneck_forward.5} parent=5 // pred_region
      %s141 = ssub.s32 %s9, 1
      // Predicated region
      $region13: #{bottleneck_forward.5} parent=11 // pred_check
        %p142 = pneg %p73
      $region14: #{bottleneck_forward.5} parent=11 // pred_check_branch
        %144 = sbr.rel (%p142) target = $region16
      $region15: #{bottleneck_forward.5} parent=11 // pred_region
        %p145 = scmp.lt.s32.totalorder %s19, 0
        %s146 = scalar_select %p145, %s19, 0
        %s147 = smul.addr %s146, 4
        %s148 = scalar_lea.vmem %s1, %s147
      $region16: #{bottleneck_forward.5} parent=11 // pred_fallthru
        _
      // Predicated region
      $region17: #{bottleneck_forward.5} parent=11 // pred_check
        %p149 = pneg %p99
      $region18: #{bottleneck_forward.5} parent=11 // pred_check_branch
        %151 = sbr.rel (%p149) target = $region20
      $region19: #{bottleneck_forward.5} parent=11 // pred_region
        %p152 = scmp.lt.s32.totalorder %s19, 0
        %s153 = scalar_select %p152, %s19, 0
        %s154 = scalar_lea.vmem %s2, %s153
      $region20: #{bottleneck_forward.5} parent=11 // pred_fallthru
        _
    $region12: #{bottleneck_forward.5} parent=5 // pred_fallthru
      _
    %p155 = scmp.lt.s32.totalorder %s9, 2
    // Predicated region
    $region21: #{bottleneck_forward.5} parent=5 // pred_check
      %p156 = pneg %p155
    $region22: #{bottleneck_forward.5} parent=5 // pred_check_branch
      %158 = sbr.rel (%p156) target = $region24
    $region23: #{bottleneck_forward.5} parent=5 // pred_region
      // Predicated region
      $region25: #{bottleneck_forward.5} parent=23 // pred_check
        %p159 = pneg %p41
      $region26: #{bottleneck_forward.5} parent=23 // pred_check_branch
        %161 = sbr.rel (%p159) target = $region28
      $region27: #{bottleneck_forward.5} parent=23 // pred_region
        %s162 = smul.u32 4, %s16
        %p163 = scmp.lt.s32.totalorder %s162, 7
        %s164 = scalar_select %p163, %s162, 7
        %s165 = smul.addr %s164, 20
        %s166 = smul.addr %s165, 4
        %s167 = scalar_lea.vmem %s0, %s166
        %s168 = smul.u32 4, %s16
      $region28: #{bottleneck_forward.5} parent=23 // pred_fallthru
        _
    $region24: #{bottleneck_forward.5} parent=5 // pred_fallthru
      _
    %p169 = scmp.le.s32.totalorder 1, %s9
    %p170 = scmp.lt.s32.totalorder %s9, 3
    %p171 = pnand %p169, %p170
    %p172 = pneg %p171
    // Predicated region
    $region29: #{bottleneck_forward.5} parent=5 // pred_check
      _
    $region30: #{bottleneck_forward.5} parent=5 // pred_check_branch
      %174 = sbr.rel (%p171) target = $region32
    $region31: #{bottleneck_forward.5} parent=5 // pred_region
      %s175 = ssub.s32 %s9, 1
      %s176 = smul.u32 4, %s18
      %p177 = scmp.lt.s32.totalorder %s176, 7
      %s178 = scalar_select %p177, %s176, 7
      %s179 = smul.addr %s178, 20
      %s180 = smul.addr %s179, 4
      %s181 = scalar_lea.vmem %s0, %s180
      %p182 = pneg %p47
      %p183 = pneg %p44
      %p184 = scmp.lt.s32.totalorder %s19, 0
      %s185 = scalar_select %p184, %s19, 0
      %s186 = smul.addr %s185, 4
      %s187 = scalar_lea.vmem %s1, %s186
      %p188 = pneg %p73
      %p189 = pneg %p70
      %p190 = scmp.lt.s32.totalorder %s19, 0
      %s191 = scalar_select %p190, %s19, 0
      %s192 = scalar_lea.vmem %s2, %s191
      %p193 = pneg %p99
      %p194 = pneg %p96
      %p195 = pneg %p127
      %p196 = pneg %p124
      %s197 = smul.u32 8, %s18
      %p198 = scmp.lt.s32.totalorder %s197, 15
      %s199 = scalar_select %p198, %s197, 15
      %p200 = scmp.lt.s32.totalorder %s19, 0
      %s201 = scalar_select %p200, %s19, 0
      %s202 = sadd.s32 %s201, %s199
      %s203 = smul.addr %s202, 4
      %s204 = scalar_lea.vmem %s3, %s203
      %s205 = smul.u32 4, %s18
      %p206 = scmp.lt.s32.totalorder %s205, 7
      %s207 = scalar_select %p206, %s205, 7
      %s208 = smul.addr %s207, 20
      %s209 = smul.addr %s208, 4
      %s210 = scalar_lea.vmem %s0, %s209
      %s211 = smul.u32 4, %s18
      %p212 = scmp.lt.s32.totalorder %s19, 0
      %s213 = scalar_select %p212, %s19, 0
      %s214 = smul.addr %s213, 4
      %s215 = scalar_lea.vmem %s1, %s214
      %p216 = scmp.lt.s32.totalorder %s19, 0
      %s217 = scalar_select %p216, %s19, 0
      %s218 = scalar_lea.vmem %s2, %s217
      %s219 = smul.u32 8, %s18
      %p220 = scmp.lt.s32.totalorder %s219, 15
      %s221 = scalar_select %p220, %s219, 15
      %p222 = scmp.lt.s32.totalorder %s19, 0
      %s223 = scalar_select %p222, %s19, 0
      %s224 = sadd.s32 %s223, %s221
      %s225 = smul.addr %s224, 4
      %s226 = scalar_lea.vmem %s3, %s225
      %s227 = smul.u32 8, %s18
      %v229 = vld [vmem:[%s210] sm:$0xf]
      %v230 = vld [vmem:[%s210 + $0x8] sm:$0xf]
      %v231 = vld [vmem:[%s210 + $0x10] sm:$0xf]
      %v232 = vld [vmem:[%s210 + $0x18] sm:$0xf]
      %v233 = vld [vmem:[%s210 + $0x20] sm:$0xf]
      %v234 = vld [vmem:[%s210 + $0x28] sm:$0xf]
      %v235 = vld [vmem:[%s210 + $0x30] sm:$0xf]
      %v236 = vld [vmem:[%s210 + $0x38] sm:$0xf]
      %v237 = vld [vmem:[%s215] sm:$0xf]
      %v238 = vld [vmem:[%s215 + $0x4] sm:$0xf]
      %v239 = vld [vmem:[%s215 + $0x8] sm:$0xf]
      %v240 = vld [vmem:[%s215 + $0xc] sm:$0xf]
      %v241 = vld [vmem:[%s215 + $0x10] sm:$0xf]
      %v242 = vld [vmem:[%s215 + $0x14] sm:$0xf]
      %v243 = vld [vmem:[%s215 + $0x18] sm:$0xf]
      %v244 = vld [vmem:[%s215 + $0x1c] sm:$0xf]
      %v245 = vld [vmem:[%s215 + $0x20] sm:$0xf]
      %v246 = vld [vmem:[%s215 + $0x24] sm:$0xf]
      %v247 = vld [vmem:[%s215 + $0x28] sm:$0xf]
      %v248 = vld [vmem:[%s215 + $0x2c] sm:$0xf]
      %v249 = vld [vmem:[%s215 + $0x30] sm:$0xf]
      %v250 = vld [vmem:[%s215 + $0x34] sm:$0xf]
      %v251 = vld [vmem:[%s215 + $0x38] sm:$0xf]
      %v252 = vld [vmem:[%s215 + $0x3c] sm:$0xf]
      %s253 = scalar_lea.vmem %s210, 80
      %v254 = vld [vmem:[%s253] sm:$0xf]
      %v255 = vld [vmem:[%s253 + $0x8] sm:$0xf]
      %v256 = vld [vmem:[%s253 + $0x10] sm:$0xf]
      %v257 = vld [vmem:[%s253 + $0x18] sm:$0xf]
      %v258 = vld [vmem:[%s253 + $0x20] sm:$0xf]
      %v259 = vld [vmem:[%s253 + $0x28] sm:$0xf]
      %v260 = vld [vmem:[%s253 + $0x30] sm:$0xf]
      %v261 = vld [vmem:[%s253 + $0x38] sm:$0xf]
      %s262 = scalar_lea.vmem %s215, 64
      %v263 = vld [vmem:[%s262] sm:$0xf]
      %v264 = vld [vmem:[%s262 + $0x4] sm:$0xf]
      %v265 = vld [vmem:[%s262 + $0x8] sm:$0xf]
      %v266 = vld [vmem:[%s262 + $0xc] sm:$0xf]
      %v267 = vld [vmem:[%s262 + $0x10] sm:$0xf]
      %v268 = vld [vmem:[%s262 + $0x14] sm:$0xf]
      %v269 = vld [vmem:[%s262 + $0x18] sm:$0xf]
      %v270 = vld [vmem:[%s262 + $0x1c] sm:$0xf]
      %v271 = vld [vmem:[%s262 + $0x20] sm:$0xf]
      %v272 = vld [vmem:[%s262 + $0x24] sm:$0xf]
      %v273 = vld [vmem:[%s262 + $0x28] sm:$0xf]
      %v274 = vld [vmem:[%s262 + $0x2c] sm:$0xf]
      %v275 = vld [vmem:[%s262 + $0x30] sm:$0xf]
      %v276 = vld [vmem:[%s262 + $0x34] sm:$0xf]
      %v277 = vld [vmem:[%s262 + $0x38] sm:$0xf]
      %v278 = vld [vmem:[%s262 + $0x3c] sm:$0xf]
      %v287 = vunpack.c.l.b16 %v254
      %v288 = vunpack.c.l.b16 %v255
      %v289 = vunpack.c.l.b16 %v256
      %v290 = vunpack.c.l.b16 %v257
      %v291 = vunpack.c.l.b16 %v258
      %v292 = vunpack.c.l.b16 %v259
      %v293 = vunpack.c.l.b16 %v260
      %v294 = vunpack.c.l.b16 %v261
      %v295 = vpack.c.b16 %v288, %v287
      %v296 = vpack.c.b16 %v290, %v289
      %v297 = vpack.c.b16 %v292, %v291
      %v298 = vpack.c.b16 %v294, %v293
      %v319 = vunpack.c.l.b16 %v263
      %v320 = vunpack.c.l.b16 %v264
      %v321 = vunpack.c.l.b16 %v265
      %v322 = vunpack.c.l.b16 %v266
      %v323 = vunpack.c.l.b16 %v267
      %v324 = vunpack.c.l.b16 %v268
      %v325 = vunpack.c.l.b16 %v269
      %v326 = vunpack.c.l.b16 %v270
      %v327 = vunpack.c.l.b16 %v271
      %v328 = vunpack.c.l.b16 %v272
      %v329 = vunpack.c.l.b16 %v273
      %v330 = vunpack.c.l.b16 %v274
      %v331 = vunpack.c.l.b16 %v275
      %v332 = vunpack.c.l.b16 %v276
      %v333 = vunpack.c.l.b16 %v277
      %v334 = vunpack.c.l.b16 %v278
      %v335 = vpack.c.b16 %v320, %v319
      %v336 = vpack.c.b16 %v322, %v321
      %v337 = vpack.c.b16 %v324, %v323
      %v338 = vpack.c.b16 %v326, %v325
      %v339 = vpack.c.b16 %v328, %v327
      %v340 = vpack.c.b16 %v330, %v329
      %v341 = vpack.c.b16 %v332, %v331
      %v342 = vpack.c.b16 %v334, %v333
      %351 = vmatprep.subr.bf16.mxu0 0
      %352 = vmatpush1.bf16.msra.mxu0 %v335
      %353 = vmatprep.subr.bf16.mxu0 0
      %354 = vmatpush1.bf16.msra.mxu0 %v336
      %355 = vmatprep.subr.bf16.mxu0 0
      %356 = vmatpush1.bf16.msra.mxu0 %v337
      %357 = vmatprep.subr.bf16.mxu0 0
      %358 = vmatpush1.bf16.msra.mxu0 %v338
      %359 = vmatprep.subr.bf16.mxu0 0
      %360 = vmatpush1.bf16.msra.mxu0 %v339
      %361 = vmatprep.subr.bf16.mxu0 0
      %362 = vmatpush1.bf16.msra.mxu0 %v340
      %363 = vmatprep.subr.bf16.mxu0 0
      %364 = vmatpush1.bf16.msra.mxu0 %v341
      %365 = vmatprep.subr.bf16.mxu0 0
      %366 = vmatpush1.bf16.msra.mxu0 %v342
      %367 = vmatprep.subr.bf16.mxu0 0
      %368 = vmatpush1.bf16.msra.mxu0 0
      %369 = vmatprep.subr.bf16.mxu0 0
      %370 = vmatpush1.bf16.msra.mxu0 0
      %371 = vmatprep.subr.bf16.mxu0 0
      %372 = vmatpush1.bf16.msra.mxu0 0
      %373 = vmatprep.subr.bf16.mxu0 0
      %374 = vmatpush1.bf16.msra.mxu0 0
      %375 = vmatprep.subr.bf16.mxu0 0
      %376 = vmatpush1.bf16.msra.mxu0 0
      %377 = vmatprep.subr.bf16.mxu0 0
      %378 = vmatpush1.bf16.msra.mxu0 0
      %379 = vmatprep.subr.bf16.mxu0 0
      %380 = vmatpush1.bf16.msra.mxu0 0
      %381 = vmatprep.subr.bf16.mxu0 0
      %382 = vmatpush1.bf16.msra.mxu0 0
      %383 = vmatprep.mubr.bf16.mxu0 0
      %384 = vmatmul.mubr.bf16.gmra.mrb[0].mxu0 %v295
      %v385 = vpop.f32.mrb[0].mxu0
      %v386 = vadd.f32 0.0, %v385
      %v387 = vpop.f32.mrb[0].mxu0
      %v388 = vpop.f32.mrb[0].mxu0
      %v389 = vadd.f32 0.0, %v388
      %v390 = vpop.f32.mrb[0].mxu0
      %391 = vmatprep.mubr.bf16.mxu0 0
      %392 = vmatmul.mubr.bf16.gmra.mrb[0].mxu0 %v296
      %v393 = vpop.f32.mrb[0].mxu0
      %v394 = vadd.f32 0.0, %v393
      %v395 = vpop.f32.mrb[0].mxu0
      %v396 = vpop.f32.mrb[0].mxu0
      %v397 = vadd.f32 0.0, %v396
      %v398 = vpop.f32.mrb[0].mxu0
      %399 = vmatprep.mubr.bf16.mxu0 0
      %400 = vmatmul.mubr.bf16.gmra.mrb[0].mxu0 %v297
      %v401 = vpop.f32.mrb[0].mxu0
      %v402 = vadd.f32 0.0, %v401
      %v403 = vpop.f32.mrb[0].mxu0
      %v404 = vpop.f32.mrb[0].mxu0
      %v405 = vadd.f32 0.0, %v404
      %v406 = vpop.f32.mrb[0].mxu0
      %407 = vmatprep.mubr.bf16.mxu0 0
      %408 = vmatmul.mubr.bf16.gmra.mrb[0].mxu0 %v298
      %v409 = vpop.f32.mrb[0].mxu0
      %v410 = vadd.f32 0.0, %v409
      %v411 = vpop.f32.mrb[0].mxu0
      %v412 = vpop.f32.mrb[0].mxu0
      %v413 = vadd.f32 0.0, %v412
      %v414 = vpop.f32.mrb[0].mxu0
      %415 = vdwg.mxu0
      %v424 = vunpack.c.l.b16 %v229
      %v425 = vunpack.c.l.b16 %v230
      %v426 = vunpack.c.l.b16 %v231
      %v427 = vunpack.c.l.b16 %v232
      %v428 = vunpack.c.l.b16 %v233
      %v429 = vunpack.c.l.b16 %v234
      %v430 = vunpack.c.l.b16 %v235
      %v431 = vunpack.c.l.b16 %v236
      %v432 = vpack.c.b16 %v425, %v424
      %v433 = vpack.c.b16 %v427, %v426
      %v434 = vpack.c.b16 %v429, %v428
      %v435 = vpack.c.b16 %v431, %v430
      %v456 = vunpack.c.l.b16 %v237
      %v457 = vunpack.c.l.b16 %v238
      %v458 = vunpack.c.l.b16 %v239
      %v459 = vunpack.c.l.b16 %v240
      %v460 = vunpack.c.l.b16 %v241
      %v461 = vunpack.c.l.b16 %v242
      %v462 = vunpack.c.l.b16 %v243
      %v463 = vunpack.c.l.b16 %v244
      %v464 = vunpack.c.l.b16 %v245
      %v465 = vunpack.c.l.b16 %v246
      %v466 = vunpack.c.l.b16 %v247
      %v467 = vunpack.c.l.b16 %v248
      %v468 = vunpack.c.l.b16 %v249
      %v469 = vunpack.c.l.b16 %v250
      %v470 = vunpack.c.l.b16 %v251
      %v471 = vunpack.c.l.b16 %v252
      %v472 = vpack.c.b16 %v457, %v456
      %v473 = vpack.c.b16 %v459, %v458
      %v474 = vpack.c.b16 %v461, %v460
      %v475 = vpack.c.b16 %v463, %v462
      %v476 = vpack.c.b16 %v465, %v464
      %v477 = vpack.c.b16 %v467, %v466
      %v478 = vpack.c.b16 %v469, %v468
      %v479 = vpack.c.b16 %v471, %v470
      %488 = vmatprep.subr.bf16.mxu0 0
      %489 = vmatpush1.bf16.msra.mxu0 %v472
      %490 = vmatprep.subr.bf16.mxu0 0
      %491 = vmatpush1.bf16.msra.mxu0 %v473
      %492 = vmatprep.subr.bf16.mxu0 0
      %493 = vmatpush1.bf16.msra.mxu0 %v474
      %494 = vmatprep.subr.bf16.mxu0 0
      %495 = vmatpush1.bf16.msra.mxu0 %v475
      %496 = vmatprep.subr.bf16.mxu0 0
      %497 = vmatpush1.bf16.msra.mxu0 %v476
      %498 = vmatprep.subr.bf16.mxu0 0
      %499 = vmatpush1.bf16.msra.mxu0 %v477
      %500 = vmatprep.subr.bf16.mxu0 0
      %501 = vmatpush1.bf16.msra.mxu0 %v478
      %502 = vmatprep.subr.bf16.mxu0 0
      %503 = vmatpush1.bf16.msra.mxu0 %v479
      %504 = vmatprep.subr.bf16.mxu0 0
      %505 = vmatpush1.bf16.msra.mxu0 0
      %506 = vmatprep.subr.bf16.mxu0 0
      %507 = vmatpush1.bf16.msra.mxu0 0
      %508 = vmatprep.subr.bf16.mxu0 0
      %509 = vmatpush1.bf16.msra.mxu0 0
      %510 = vmatprep.subr.bf16.mxu0 0
      %511 = vmatpush1.bf16.msra.mxu0 0
      %512 = vmatprep.subr.bf16.mxu0 0
      %513 = vmatpush1.bf16.msra.mxu0 0
      %514 = vmatprep.subr.bf16.mxu0 0
      %515 = vmatpush1.bf16.msra.mxu0 0
      %516 = vmatprep.subr.bf16.mxu0 0
      %517 = vmatpush1.bf16.msra.mxu0 0
      %518 = vmatprep.subr.bf16.mxu0 0
      %519 = vmatpush1.bf16.msra.mxu0 0
      %520 = vmatprep.mubr.bf16.mxu0 0
      %521 = vmatmul.mubr.bf16.gmra.mrb[0].mxu0 %v432
      %v522 = vpop.f32.mrb[0].mxu0
      %v523 = vadd.f32 %v386, %v522
      %v524 = vpop.f32.mrb[0].mxu0
      %v525 = vpop.f32.mrb[0].mxu0
      %v526 = vadd.f32 %v389, %v525
      %v527 = vpop.f32.mrb[0].mxu0
      %528 = vmatprep.mubr.bf16.mxu0 0
      %529 = vmatmul.mubr.bf16.gmra.mrb[0].mxu0 %v433
      %v530 = vpop.f32.mrb[0].mxu0
      %v531 = vadd.f32 %v394, %v530
      %v532 = vpop.f32.mrb[0].mxu0
      %v533 = vpop.f32.mrb[0].mxu0
      %v534 = vadd.f32 %v397, %v533
      %v535 = vpop.f32.mrb[0].mxu0
      %536 = vmatprep.mubr.bf16.mxu0 0
      %537 = vmatmul.mubr.bf16.gmra.mrb[0].mxu0 %v434
      %v538 = vpop.f32.mrb[0].mxu0
      %v539 = vadd.f32 %v402, %v538
      %v540 = vpop.f32.mrb[0].mxu0
      %v541 = vpop.f32.mrb[0].mxu0
      %v542 = vadd.f32 %v405, %v541
      %v543 = vpop.f32.mrb[0].mxu0
      %544 = vmatprep.mubr.bf16.mxu0 0
      %545 = vmatmul.mubr.bf16.gmra.mrb[0].mxu0 %v435
      %v546 = vpop.f32.mrb[0].mxu0
      %v547 = vadd.f32 %v410, %v546
      %v548 = vpop.f32.mrb[0].mxu0
      %v549 = vpop.f32.mrb[0].mxu0
      %v550 = vadd.f32 %v413, %v549
      %v551 = vpop.f32.mrb[0].mxu0
      %552 = vdwg.mxu0
      %v553 = vld [vmem:[%s210] sm:$0xf]
      %v554 = vld [vmem:[%s210 + $0x4] sm:$0x1]
      %v555 = vld [vmem:[%s210 + $0x8] sm:$0xf]
      %v556 = vld [vmem:[%s210 + $0xc] sm:$0x1]
      %v557 = vld [vmem:[%s210 + $0x10] sm:$0xf]
      %v558 = vld [vmem:[%s210 + $0x14] sm:$0x1]
      %v559 = vld [vmem:[%s210 + $0x18] sm:$0xf]
      %v560 = vld [vmem:[%s210 + $0x1c] sm:$0x1]
      %v561 = vld [vmem:[%s210 + $0x20] sm:$0xf]
      %v562 = vld [vmem:[%s210 + $0x24] sm:$0x1]
      %v563 = vld [vmem:[%s210 + $0x28] sm:$0xf]
      %v564 = vld [vmem:[%s210 + $0x2c] sm:$0x1]
      %v565 = vld [vmem:[%s210 + $0x30] sm:$0xf]
      %v566 = vld [vmem:[%s210 + $0x34] sm:$0x1]
      %v567 = vld [vmem:[%s210 + $0x38] sm:$0xf]
      %v568 = vld [vmem:[%s210 + $0x3c] sm:$0x1]
      %vm569 = vsmask.f32 3328
      %vm570 = vsmask.f32 7440
      %vm571 = vmor %vm569, %vm570
      %v573 = vshrl.u32 %v553, 16
      %v575 = vrot.slane %v573, 4
      %v576 = vshll.u32 %v553, 16
      %v578 = vrot.slane %v576, 5
      %v579 = vor.u32 %v575, %v578
      %v580 = vrot.slane %v579, 4
      %v582 = vshll.u32 %v554, 16
      %v584 = vrot.slane %v582, 5
      %v585 = vsel %vm571, %v580, %v584
      %v587 = vshrl.u32 %v555, 16
      %v589 = vrot.slane %v587, 4
      %v590 = vshll.u32 %v555, 16
      %v592 = vrot.slane %v590, 5
      %v593 = vor.u32 %v589, %v592
      %v594 = vrot.slane %v593, 4
      %v596 = vshll.u32 %v556, 16
      %v598 = vrot.slane %v596, 5
      %v599 = vsel %vm571, %v594, %v598
      %v601 = vshrl.u32 %v557, 16
      %v603 = vrot.slane %v601, 4
      %v604 = vshll.u32 %v557, 16
      %v606 = vrot.slane %v604, 5
      %v607 = vor.u32 %v603, %v606
      %v608 = vrot.slane %v607, 4
      %v610 = vshll.u32 %v558, 16
      %v612 = vrot.slane %v610, 5
      %v613 = vsel %vm571, %v608, %v612
      %v615 = vshrl.u32 %v559, 16
      %v617 = vrot.slane %v615, 4
      %v618 = vshll.u32 %v559, 16
      %v620 = vrot.slane %v618, 5
      %v621 = vor.u32 %v617, %v620
      %v622 = vrot.slane %v621, 4
      %v624 = vshll.u32 %v560, 16
      %v626 = vrot.slane %v624, 5
      %v627 = vsel %vm571, %v622, %v626
      %v629 = vshrl.u32 %v561, 16
      %v631 = vrot.slane %v629, 4
      %v632 = vshll.u32 %v561, 16
      %v634 = vrot.slane %v632, 5
      %v635 = vor.u32 %v631, %v634
      %v636 = vrot.slane %v635, 4
      %v638 = vshll.u32 %v562, 16
      %v640 = vrot.slane %v638, 5
      %v641 = vsel %vm571, %v636, %v640
      %v643 = vshrl.u32 %v563, 16
      %v645 = vrot.slane %v643, 4
      %v646 = vshll.u32 %v563, 16
      %v648 = vrot.slane %v646, 5
      %v649 = vor.u32 %v645, %v648
      %v650 = vrot.slane %v649, 4
      %v652 = vshll.u32 %v564, 16
      %v654 = vrot.slane %v652, 5
      %v655 = vsel %vm571, %v650, %v654
      %v657 = vshrl.u32 %v565, 16
      %v659 = vrot.slane %v657, 4
      %v660 = vshll.u32 %v565, 16
      %v662 = vrot.slane %v660, 5
      %v663 = vor.u32 %v659, %v662
      %v664 = vrot.slane %v663, 4
      %v666 = vshll.u32 %v566, 16
      %v668 = vrot.slane %v666, 5
      %v669 = vsel %vm571, %v664, %v668
      %v671 = vshrl.u32 %v567, 16
      %v673 = vrot.slane %v671, 4
      %v674 = vshll.u32 %v567, 16
      %v676 = vrot.slane %v674, 5
      %v677 = vor.u32 %v673, %v676
      %v678 = vrot.slane %v677, 4
      %v680 = vshll.u32 %v568, 16
      %v682 = vrot.slane %v680, 5
      %v683 = vsel %vm571, %v678, %v682
      %s684 = scalar_lea.vmem %s215, 128
      %v685 = vld [vmem:[%s684] sm:$0xf]
      %v686 = vld [vmem:[%s684 + $0x4] sm:$0xf]
      %v687 = vld [vmem:[%s684 + $0x8] sm:$0xf]
      %v688 = vld [vmem:[%s684 + $0xc] sm:$0xf]
      %v689 = vld [vmem:[%s684 + $0x10] sm:$0xf]
      %v690 = vld [vmem:[%s684 + $0x14] sm:$0xf]
      %v691 = vld [vmem:[%s684 + $0x18] sm:$0xf]
      %v692 = vld [vmem:[%s684 + $0x1c] sm:$0xf]
      %v693 = vld [vmem:[%s684 + $0x20] sm:$0xf]
      %v694 = vld [vmem:[%s684 + $0x24] sm:$0xf]
      %v695 = vld [vmem:[%s684 + $0x28] sm:$0xf]
      %v696 = vld [vmem:[%s684 + $0x2c] sm:$0xf]
      %v697 = vld [vmem:[%s684 + $0x30] sm:$0xf]
      %v698 = vld [vmem:[%s684 + $0x34] sm:$0xf]
      %v699 = vld [vmem:[%s684 + $0x38] sm:$0xf]
      %v700 = vld [vmem:[%s684 + $0x3c] sm:$0xf]
      %v701 = vunpack.c.l.b16 %v585
      %v702 = vunpack.c.l.b16 %v599
      %v703 = vunpack.c.l.b16 %v613
      %v704 = vunpack.c.l.b16 %v627
      %v705 = vunpack.c.l.b16 %v641
      %v706 = vunpack.c.l.b16 %v655
      %v707 = vunpack.c.l.b16 %v669
      %v708 = vunpack.c.l.b16 %v683
      %v709 = vpack.c.b16 %v702, %v701
      %v710 = vpack.c.b16 %v704, %v703
      %v711 = vpack.c.b16 %v706, %v705
      %v712 = vpack.c.b16 %v708, %v707
      %v733 = vunpack.c.l.b16 %v685
      %v734 = vunpack.c.l.b16 %v686
      %v735 = vunpack.c.l.b16 %v687
      %v736 = vunpack.c.l.b16 %v688
      %v737 = vunpack.c.l.b16 %v689
      %v738 = vunpack.c.l.b16 %v690
      %v739 = vunpack.c.l.b16 %v691
      %v740 = vunpack.c.l.b16 %v692
      %v741 = vunpack.c.l.b16 %v693
      %v742 = vunpack.c.l.b16 %v694
      %v743 = vunpack.c.l.b16 %v695
      %v744 = vunpack.c.l.b16 %v696
      %v745 = vunpack.c.l.b16 %v697
      %v746 = vunpack.c.l.b16 %v698
      %v747 = vunpack.c.l.b16 %v699
      %v748 = vunpack.c.l.b16 %v700
      %v749 = vpack.c.b16 %v734, %v733
      %v750 = vpack.c.b16 %v736, %v735
      %v751 = vpack.c.b16 %v738, %v737
      %v752 = vpack.c.b16 %v740, %v739
      %v753 = vpack.c.b16 %v742, %v741
      %v754 = vpack.c.b16 %v744, %v743
      %v755 = vpack.c.b16 %v746, %v745
      %v756 = vpack.c.b16 %v748, %v747
      %765 = vmatprep.subr.bf16.mxu0 0
      %766 = vmatpush1.bf16.msra.mxu0 %v749
      %767 = vmatprep.subr.bf16.mxu0 0
      %768 = vmatpush1.bf16.msra.mxu0 %v750
      %769 = vmatprep.subr.bf16.mxu0 0
      %770 = vmatpush1.bf16.msra.mxu0 %v751
      %771 = vmatprep.subr.bf16.mxu0 0
      %772 = vmatpush1.bf16.msra.mxu0 %v752
      %773 = vmatprep.subr.bf16.mxu0 0
      %774 = vmatpush1.bf16.msra.mxu0 %v753
      %775 = vmatprep.subr.bf16.mxu0 0
      %776 = vmatpush1.bf16.msra.mxu0 %v754
      %777 = vmatprep.subr.bf16.mxu0 0
      %778 = vmatpush1.bf16.msra.mxu0 %v755
      %779 = vmatprep.subr.bf16.mxu0 0
      %780 = vmatpush1.bf16.msra.mxu0 %v756
      %781 = vmatprep.subr.bf16.mxu0 0
      %782 = vmatpush1.bf16.msra.mxu0 0
      %783 = vmatprep.subr.bf16.mxu0 0
      %784 = vmatpush1.bf16.msra.mxu0 0
      %785 = vmatprep.subr.bf16.mxu0 0
      %786 = vmatpush1.bf16.msra.mxu0 0
      %787 = vmatprep.subr.bf16.mxu0 0
      %788 = vmatpush1.bf16.msra.mxu0 0
      %789 = vmatprep.subr.bf16.mxu0 0
      %790 = vmatpush1.bf16.msra.mxu0 0
      %791 = vmatprep.subr.bf16.mxu0 0
      %792 = vmatpush1.bf16.msra.mxu0 0
      %793 = vmatprep.subr.bf16.mxu0 0
      %794 = vmatpush1.bf16.msra.mxu0 0
      %795 = vmatprep.subr.bf16.mxu0 0
      %796 = vmatpush1.bf16.msra.mxu0 0
      %797 = vmatprep.mubr.bf16.mxu0 0
      %798 = vmatmul.mubr.bf16.gmra.mrb[0].mxu0 %v709
      %v799 = vpop.f32.mrb[0].mxu0
      %v800 = vadd.f32 0.0, %v799
      %v801 = vpop.f32.mrb[0].mxu0
      %v802 = vpop.f32.mrb[0].mxu0
      %v803 = vadd.f32 0.0, %v802
      %v804 = vpop.f32.mrb[0].mxu0
      %805 = vmatprep.mubr.bf16.mxu0 0
      %806 = vmatmul.mubr.bf16.gmra.mrb[0].mxu0 %v710
      %v807 = vpop.f32.mrb[0].mxu0
      %v808 = vadd.f32 0.0, %v807
      %v809 = vpop.f32.mrb[0].mxu0
      %v810 = vpop.f32.mrb[0].mxu0
      %v811 = vadd.f32 0.0, %v810
      %v812 = vpop.f32.mrb[0].mxu0
      %813 = vmatprep.mubr.bf16.mxu0 0
      %814 = vmatmul.mubr.bf16.gmra.mrb[0].mxu0 %v711
      %v815 = vpop.f32.mrb[0].mxu0
      %v816 = vadd.f32 0.0, %v815
      %v817 = vpop.f32.mrb[0].mxu0
      %v818 = vpop.f32.mrb[0].mxu0
      %v819 = vadd.f32 0.0, %v818
      %v820 = vpop.f32.mrb[0].mxu0
      %821 = vmatprep.mubr.bf16.mxu0 0
      %822 = vmatmul.mubr.bf16.gmra.mrb[0].mxu0 %v712
      %v823 = vpop.f32.mrb[0].mxu0
      %v824 = vadd.f32 0.0, %v823
      %v825 = vpop.f32.mrb[0].mxu0
      %v826 = vpop.f32.mrb[0].mxu0
      %v827 = vadd.f32 0.0, %v826
      %v828 = vpop.f32.mrb[0].mxu0
      %829 = vdwg.mxu0
      %v830 = vadd.f32 %v523, %v800
      %v831 = vadd.f32 %v526, %v803
      %v832 = vadd.f32 %v531, %v808
      %v833 = vadd.f32 %v534, %v811
      %v834 = vadd.f32 %v539, %v816
      %v835 = vadd.f32 %v542, %v819
      %v836 = vadd.f32 %v547, %v824
      %v837 = vadd.f32 %v550, %v827
      %s838 = scalar_lea.vmem %s210, 160
      %v839 = vld [vmem:[%s838] sm:$0xf]
      %v840 = vld [vmem:[%s838 + $0x8] sm:$0xf]
      %v841 = vld [vmem:[%s838 + $0x10] sm:$0xf]
      %v842 = vld [vmem:[%s838 + $0x18] sm:$0xf]
      %v843 = vld [vmem:[%s838 + $0x20] sm:$0xf]
      %v844 = vld [vmem:[%s838 + $0x28] sm:$0xf]
      %v845 = vld [vmem:[%s838 + $0x30] sm:$0xf]
      %v846 = vld [vmem:[%s838 + $0x38] sm:$0xf]
      %s847 = scalar_lea.vmem %s215, 192
      %v848 = vld [vmem:[%s847] sm:$0xf]
      %v849 = vld [vmem:[%s847 + $0x4] sm:$0xf]
      %v850 = vld [vmem:[%s847 + $0x8] sm:$0xf]
      %v851 = vld [vmem:[%s847 + $0xc] sm:$0xf]
      %v852 = vld [vmem:[%s847 + $0x10] sm:$0xf]
      %v853 = vld [vmem:[%s847 + $0x14] sm:$0xf]
      %v854 = vld [vmem:[%s847 + $0x18] sm:$0xf]
      %v855 = vld [vmem:[%s847 + $0x1c] sm:$0xf]
      %v856 = vld [vmem:[%s847 + $0x20] sm:$0xf]
      %v857 = vld [vmem:[%s847 + $0x24] sm:$0xf]
      %v858 = vld [vmem:[%s847 + $0x28] sm:$0xf]
      %v859 = vld [vmem:[%s847 + $0x2c] sm:$0xf]
      %v860 = vld [vmem:[%s847 + $0x30] sm:$0xf]
      %v861 = vld [vmem:[%s847 + $0x34] sm:$0xf]
      %v862 = vld [vmem:[%s847 + $0x38] sm:$0xf]
      %v863 = vld [vmem:[%s847 + $0x3c] sm:$0xf]
      %v872 = vunpack.c.l.b16 %v839
      %v873 = vunpack.c.l.b16 %v840
      %v874 = vunpack.c.l.b16 %v841
      %v875 = vunpack.c.l.b16 %v842
      %v876 = vunpack.c.l.b16 %v843
      %v877 = vunpack.c.l.b16 %v844
      %v878 = vunpack.c.l.b16 %v845
      %v879 = vunpack.c.l.b16 %v846
      %v880 = vpack.c.b16 %v873, %v872
      %v881 = vpack.c.b16 %v875, %v874
      %v882 = vpack.c.b16 %v877, %v876
      %v883 = vpack.c.b16 %v879, %v878
      %v904 = vunpack.c.l.b16 %v848
      %v905 = vunpack.c.l.b16 %v849
      %v906 = vunpack.c.l.b16 %v850
      %v907 = vunpack.c.l.b16 %v851
      %v908 = vunpack.c.l.b16 %v852
      %v909 = vunpack.c.l.b16 %v853
      %v910 = vunpack.c.l.b16 %v854
      %v911 = vunpack.c.l.b16 %v855
      %v912 = vunpack.c.l.b16 %v856
      %v913 = vunpack.c.l.b16 %v857
      %v914 = vunpack.c.l.b16 %v858
      %v915 = vunpack.c.l.b16 %v859
      %v916 = vunpack.c.l.b16 %v860
      %v917 = vunpack.c.l.b16 %v861
      %v918 = vunpack.c.l.b16 %v862
      %v919 = vunpack.c.l.b16 %v863
      %v920 = vpack.c.b16 %v905, %v904
      %v921 = vpack.c.b16 %v907, %v906
      %v922 = vpack.c.b16 %v909, %v908
      %v923 = vpack.c.b16 %v911, %v910
      %v924 = vpack.c.b16 %v913, %v912
      %v925 = vpack.c.b16 %v915, %v914
      %v926 = vpack.c.b16 %v917, %v916
      %v927 = vpack.c.b16 %v919, %v918
      %936 = vmatprep.subr.bf16.mxu0 0
      %937 = vmatpush1.bf16.msra.mxu0 %v920
      %938 = vmatprep.subr.bf16.mxu0 0
      %939 = vmatpush1.bf16.msra.mxu0 %v921
      %940 = vmatprep.subr.bf16.mxu0 0
      %941 = vmatpush1.bf16.msra.mxu0 %v922
      %942 = vmatprep.subr.bf16.mxu0 0
      %943 = vmatpush1.bf16.msra.mxu0 %v923
      %944 = vmatprep.subr.bf16.mxu0 0
      %945 = vmatpush1.bf16.msra.mxu0 %v924
      %946 = vmatprep.subr.bf16.mxu0 0
      %947 = vmatpush1.bf16.msra.mxu0 %v925
      %948 = vmatprep.subr.bf16.mxu0 0
      %949 = vmatpush1.bf16.msra.mxu0 %v926
      %950 = vmatprep.subr.bf16.mxu0 0
      %951 = vmatpush1.bf16.msra.mxu0 %v927
      %952 = vmatprep.subr.bf16.mxu0 0
      %953 = vmatpush1.bf16.msra.mxu0 0
      %954 = vmatprep.subr.bf16.mxu0 0
      %955 = vmatpush1.bf16.msra.mxu0 0
      %956 = vmatprep.subr.bf16.mxu0 0
      %957 = vmatpush1.bf16.msra.mxu0 0
      %958 = vmatprep.subr.bf16.mxu0 0
      %959 = vmatpush1.bf16.msra.mxu0 0
      %960 = vmatprep.subr.bf16.mxu0 0
      %961 = vmatpush1.bf16.msra.mxu0 0
      %962 = vmatprep.subr.bf16.mxu0 0
      %963 = vmatpush1.bf16.msra.mxu0 0
      %964 = vmatprep.subr.bf16.mxu0 0
      %965 = vmatpush1.bf16.msra.mxu0 0
      %966 = vmatprep.subr.bf16.mxu0 0
      %967 = vmatpush1.bf16.msra.mxu0 0
      %968 = vmatprep.mubr.bf16.mxu0 0
      %969 = vmatmul.mubr.bf16.gmra.mrb[0].mxu0 %v880
      %v970 = vpop.f32.mrb[0].mxu0
      %v971 = vadd.f32 0.0, %v970
      %v972 = vpop.f32.mrb[0].mxu0
      %v973 = vpop.f32.mrb[0].mxu0
      %v974 = vadd.f32 0.0, %v973
      %v975 = vpop.f32.mrb[0].mxu0
      %976 = vmatprep.mubr.bf16.mxu0 0
      %977 = vmatmul.mubr.bf16.gmra.mrb[0].mxu0 %v881
      %v978 = vpop.f32.mrb[0].mxu0
      %v979 = vadd.f32 0.0, %v978
      %v980 = vpop.f32.mrb[0].mxu0
      %v981 = vpop.f32.mrb[0].mxu0
      %v982 = vadd.f32 0.0, %v981
      %v983 = vpop.f32.mrb[0].mxu0
      %984 = vmatprep.mubr.bf16.mxu0 0
      %985 = vmatmul.mubr.bf16.gmra.mrb[0].mxu0 %v882
      %v986 = vpop.f32.mrb[0].mxu0
      %v987 = vadd.f32 0.0, %v986
      %v988 = vpop.f32.mrb[0].mxu0
      %v989 = vpop.f32.mrb[0].mxu0
      %v990 = vadd.f32 0.0, %v989
      %v991 = vpop.f32.mrb[0].mxu0
      %992 = vmatprep.mubr.bf16.mxu0 0
      %993 = vmatmul.mubr.bf16.gmra.mrb[0].mxu0 %v883
      %v994 = vpop.f32.mrb[0].mxu0
      %v995 = vadd.f32 0.0, %v994
      %v996 = vpop.f32.mrb[0].mxu0
      %v997 = vpop.f32.mrb[0].mxu0
      %v998 = vadd.f32 0.0, %v997
      %v999 = vpop.f32.mrb[0].mxu0
      %1000 = vdwg.mxu0
      %v1001 = vadd.f32 %v830, %v971
      %v1002 = vadd.f32 %v831, %v974
      %v1003 = vadd.f32 %v832, %v979
      %v1004 = vadd.f32 %v833, %v982
      %v1005 = vadd.f32 %v834, %v987
      %v1006 = vadd.f32 %v835, %v990
      %v1007 = vadd.f32 %v836, %v995
      %v1008 = vadd.f32 %v837, %v998
      %s1009 = scalar_lea.vmem %s210, 240
      %v1010 = vld [vmem:[%s1009] sm:$0xf]
      %v1011 = vld [vmem:[%s1009 + $0x8] sm:$0xf]
      %v1012 = vld [vmem:[%s1009 + $0x10] sm:$0xf]
      %v1013 = vld [vmem:[%s1009 + $0x18] sm:$0xf]
      %v1014 = vld [vmem:[%s1009 + $0x20] sm:$0xf]
      %v1015 = vld [vmem:[%s1009 + $0x28] sm:$0xf]
      %v1016 = vld [vmem:[%s1009 + $0x30] sm:$0xf]
      %v1017 = vld [vmem:[%s1009 + $0x38] sm:$0xf]
      %s1018 = scalar_lea.vmem %s215, 256
      %v1019 = vld [vmem:[%s1018] sm:$0xf]
      %v1020 = vld [vmem:[%s1018 + $0x4] sm:$0xf]
      %v1021 = vld [vmem:[%s1018 + $0x8] sm:$0xf]
      %v1022 = vld [vmem:[%s1018 + $0xc] sm:$0xf]
      %v1023 = vld [vmem:[%s1018 + $0x10] sm:$0xf]
      %v1024 = vld [vmem:[%s1018 + $0x14] sm:$0xf]
      %v1025 = vld [vmem:[%s1018 + $0x18] sm:$0xf]
      %v1026 = vld [vmem:[%s1018 + $0x1c] sm:$0xf]
      %v1027 = vld [vmem:[%s1018 + $0x20] sm:$0xf]
      %v1028 = vld [vmem:[%s1018 + $0x24] sm:$0xf]
      %v1029 = vld [vmem:[%s1018 + $0x28] sm:$0xf]
      %v1030 = vld [vmem:[%s1018 + $0x2c] sm:$0xf]
      %v1031 = vld [vmem:[%s1018 + $0x30] sm:$0xf]
      %v1032 = vld [vmem:[%s1018 + $0x34] sm:$0xf]
      %v1033 = vld [vmem:[%s1018 + $0x38] sm:$0xf]
      %v1034 = vld [vmem:[%s1018 + $0x3c] sm:$0xf]
      %v1043 = vunpack.c.l.b16 %v1010
      %v1044 = vunpack.c.l.b16 %v1011
      %v1045 = vunpack.c.l.b16 %v1012
      %v1046 = vunpack.c.l.b16 %v1013
      %v1047 = vunpack.c.l.b16 %v1014
      %v1048 = vunpack.c.l.b16 %v1015
      %v1049 = vunpack.c.l.b16 %v1016
      %v1050 = vunpack.c.l.b16 %v1017
      %v1051 = vpack.c.b16 %v1044, %v1043
      %v1052 = vpack.c.b16 %v1046, %v1045
      %v1053 = vpack.c.b16 %v1048, %v1047
      %v1054 = vpack.c.b16 %v1050, %v1049
      %v1075 = vunpack.c.l.b16 %v1019
      %v1076 = vunpack.c.l.b16 %v1020
      %v1077 = vunpack.c.l.b16 %v1021
      %v1078 = vunpack.c.l.b16 %v1022
      %v1079 = vunpack.c.l.b16 %v1023
      %v1080 = vunpack.c.l.b16 %v1024
      %v1081 = vunpack.c.l.b16 %v1025
      %v1082 = vunpack.c.l.b16 %v1026
      %v1083 = vunpack.c.l.b16 %v1027
      %v1084 = vunpack.c.l.b16 %v1028
      %v1085 = vunpack.c.l.b16 %v1029
      %v1086 = vunpack.c.l.b16 %v1030
      %v1087 = vunpack.c.l.b16 %v1031
      %v1088 = vunpack.c.l.b16 %v1032
      %v1089 = vunpack.c.l.b16 %v1033
      %v1090 = vunpack.c.l.b16 %v1034
      %v1091 = vpack.c.b16 %v1076, %v1075
      %v1092 = vpack.c.b16 %v1078, %v1077
      %v1093 = vpack.c.b16 %v1080, %v1079
      %v1094 = vpack.c.b16 %v1082, %v1081
      %v1095 = vpack.c.b16 %v1084, %v1083
      %v1096 = vpack.c.b16 %v1086, %v1085
      %v1097 = vpack.c.b16 %v1088, %v1087
      %v1098 = vpack.c.b16 %v1090, %v1089
      %1107 = vmatprep.subr.bf16.mxu0 0
      %1108 = vmatpush1.bf16.msra.mxu0 %v1091
      %1109 = vmatprep.subr.bf16.mxu0 0
      %1110 = vmatpush1.bf16.msra.mxu0 %v1092
      %1111 = vmatprep.subr.bf16.mxu0 0
      %1112 = vmatpush1.bf16.msra.mxu0 %v1093
      %1113 = vmatprep.subr.bf16.mxu0 0
      %1114 = vmatpush1.bf16.msra.mxu0 %v1094
      %1115 = vmatprep.subr.bf16.mxu0 0
      %1116 = vmatpush1.bf16.msra.mxu0 %v1095
      %1117 = vmatprep.subr.bf16.mxu0 0
      %1118 = vmatpush1.bf16.msra.mxu0 %v1096
      %1119 = vmatprep.subr.bf16.mxu0 0
      %1120 = vmatpush1.bf16.msra.mxu0 %v1097
      %1121 = vmatprep.subr.bf16.mxu0 0
      %1122 = vmatpush1.bf16.msra.mxu0 %v1098
      %1123 = vmatprep.subr.bf16.mxu0 0
      %1124 = vmatpush1.bf16.msra.mxu0 0
      %1125 = vmatprep.subr.bf16.mxu0 0
      %1126 = vmatpush1.bf16.msra.mxu0 0
      %1127 = vmatprep.subr.bf16.mxu0 0
      %1128 = vmatpush1.bf16.msra.mxu0 0
      %1129 = vmatprep.subr.bf16.mxu0 0
      %1130 = vmatpush1.bf16.msra.mxu0 0
      %1131 = vmatprep.subr.bf16.mxu0 0
      %1132 = vmatpush1.bf16.msra.mxu0 0
      %1133 = vmatprep.subr.bf16.mxu0 0
      %1134 = vmatpush1.bf16.msra.mxu0 0
      %1135 = vmatprep.subr.bf16.mxu0 0
      %1136 = vmatpush1.bf16.msra.mxu0 0
      %1137 = vmatprep.subr.bf16.mxu0 0
      %1138 = vmatpush1.bf16.msra.mxu0 0
      %1139 = vmatprep.mubr.bf16.mxu0 0
      %1140 = vmatmul.mubr.bf16.gmra.mrb[0].mxu0 %v1051
      %v1141 = vpop.f32.mrb[0].mxu0
      %v1142 = vadd.f32 0.0, %v1141
      %v1143 = vpop.f32.mrb[0].mxu0
      %v1144 = vpop.f32.mrb[0].mxu0
      %v1145 = vadd.f32 0.0, %v1144
      %v1146 = vpop.f32.mrb[0].mxu0
      %1147 = vmatprep.mubr.bf16.mxu0 0
      %1148 = vmatmul.mubr.bf16.gmra.mrb[0].mxu0 %v1052
      %v1149 = vpop.f32.mrb[0].mxu0
      %v1150 = vadd.f32 0.0, %v1149
      %v1151 = vpop.f32.mrb[0].mxu0
      %v1152 = vpop.f32.mrb[0].mxu0
      %v1153 = vadd.f32 0.0, %v1152
      %v1154 = vpop.f32.mrb[0].mxu0
      %1155 = vmatprep.mubr.bf16.mxu0 0
      %1156 = vmatmul.mubr.bf16.gmra.mrb[0].mxu0 %v1053
      %v1157 = vpop.f32.mrb[0].mxu0
      %v1158 = vadd.f32 0.0, %v1157
      %v1159 = vpop.f32.mrb[0].mxu0
      %v1160 = vpop.f32.mrb[0].mxu0
      %v1161 = vadd.f32 0.0, %v1160
      %v1162 = vpop.f32.mrb[0].mxu0
      %1163 = vmatprep.mubr.bf16.mxu0 0
      %1164 = vmatmul.mubr.bf16.gmra.mrb[0].mxu0 %v1054
      %v1165 = vpop.f32.mrb[0].mxu0
      %v1166 = vadd.f32 0.0, %v1165
      %v1167 = vpop.f32.mrb[0].mxu0
      %v1168 = vpop.f32.mrb[0].mxu0
      %v1169 = vadd.f32 0.0, %v1168
      %v1170 = vpop.f32.mrb[0].mxu0
      %1171 = vdwg.mxu0
      %v1172 = vadd.f32 %v1001, %v1142
      %v1173 = vadd.f32 %v1002, %v1145
      %v1174 = vadd.f32 %v1003, %v1150
      %v1175 = vadd.f32 %v1004, %v1153
      %v1176 = vadd.f32 %v1005, %v1158
      %v1177 = vadd.f32 %v1006, %v1161
      %v1178 = vadd.f32 %v1007, %v1166
      %v1179 = vadd.f32 %v1008, %v1169
      %v1180 = vld [vmem:[%s838] sm:$0xf]
      %v1181 = vld [vmem:[%s838 + $0x4] sm:$0x1]
      %v1182 = vld [vmem:[%s838 + $0x8] sm:$0xf]
      %v1183 = vld [vmem:[%s838 + $0xc] sm:$0x1]
      %v1184 = vld [vmem:[%s838 + $0x10] sm:$0xf]
      %v1185 = vld [vmem:[%s838 + $0x14] sm:$0x1]
      %v1186 = vld [vmem:[%s838 + $0x18] sm:$0xf]
      %v1187 = vld [vmem:[%s838 + $0x1c] sm:$0x1]
      %v1188 = vld [vmem:[%s838 + $0x20] sm:$0xf]
      %v1189 = vld [vmem:[%s838 + $0x24] sm:$0x1]
      %v1190 = vld [vmem:[%s838 + $0x28] sm:$0xf]
      %v1191 = vld [vmem:[%s838 + $0x2c] sm:$0x1]
      %v1192 = vld [vmem:[%s838 + $0x30] sm:$0xf]
      %v1193 = vld [vmem:[%s838 + $0x34] sm:$0x1]
      %v1194 = vld [vmem:[%s838 + $0x38] sm:$0xf]
      %v1195 = vld [vmem:[%s838 + $0x3c] sm:$0x1]
      %v1197 = vshrl.u32 %v1180, 16
      %v1199 = vrot.slane %v1197, 4
      %v1200 = vshll.u32 %v1180, 16
      %v1202 = vrot.slane %v1200, 5
      %v1203 = vor.u32 %v1199, %v1202
      %v1204 = vrot.slane %v1203, 4
      %v1206 = vshll.u32 %v1181, 16
      %v1208 = vrot.slane %v1206, 5
      %v1209 = vsel %vm571, %v1204, %v1208
      %v1211 = vshrl.u32 %v1182, 16
      %v1213 = vrot.slane %v1211, 4
      %v1214 = vshll.u32 %v1182, 16
      %v1216 = vrot.slane %v1214, 5
      %v1217 = vor.u32 %v1213, %v1216
      %v1218 = vrot.slane %v1217, 4
      %v1220 = vshll.u32 %v1183, 16
      %v1222 = vrot.slane %v1220, 5
      %v1223 = vsel %vm571, %v1218, %v1222
      %v1225 = vshrl.u32 %v1184, 16
      %v1227 = vrot.slane %v1225, 4
      %v1228 = vshll.u32 %v1184, 16
      %v1230 = vrot.slane %v1228, 5
      %v1231 = vor.u32 %v1227, %v1230
      %v1232 = vrot.slane %v1231, 4
      %v1234 = vshll.u32 %v1185, 16
      %v1236 = vrot.slane %v1234, 5
      %v1237 = vsel %vm571, %v1232, %v1236
      %v1239 = vshrl.u32 %v1186, 16
      %v1241 = vrot.slane %v1239, 4
      %v1242 = vshll.u32 %v1186, 16
      %v1244 = vrot.slane %v1242, 5
      %v1245 = vor.u32 %v1241, %v1244
      %v1246 = vrot.slane %v1245, 4
      %v1248 = vshll.u32 %v1187, 16
      %v1250 = vrot.slane %v1248, 5
      %v1251 = vsel %vm571, %v1246, %v1250
      %v1253 = vshrl.u32 %v1188, 16
      %v1255 = vrot.slane %v1253, 4
      %v1256 = vshll.u32 %v1188, 16
      %v1258 = vrot.slane %v1256, 5
      %v1259 = vor.u32 %v1255, %v1258
      %v1260 = vrot.slane %v1259, 4
      %v1262 = vshll.u32 %v1189, 16
      %v1264 = vrot.slane %v1262, 5
      %v1265 = vsel %vm571, %v1260, %v1264
      %v1267 = vshrl.u32 %v1190, 16
      %v1269 = vrot.slane %v1267, 4
      %v1270 = vshll.u32 %v1190, 16
      %v1272 = vrot.slane %v1270, 5
      %v1273 = vor.u32 %v1269, %v1272
      %v1274 = vrot.slane %v1273, 4
      %v1276 = vshll.u32 %v1191, 16
      %v1278 = vrot.slane %v1276, 5
      %v1279 = vsel %vm571, %v1274, %v1278
      %v1281 = vshrl.u32 %v1192, 16
      %v1283 = vrot.slane %v1281, 4
      %v1284 = vshll.u32 %v1192, 16
      %v1286 = vrot.slane %v1284, 5
      %v1287 = vor.u32 %v1283, %v1286
      %v1288 = vrot.slane %v1287, 4
      %v1290 = vshll.u32 %v1193, 16
      %v1292 = vrot.slane %v1290, 5
      %v1293 = vsel %vm571, %v1288, %v1292
      %v1295 = vshrl.u32 %v1194, 16
      %v1297 = vrot.slane %v1295, 4
      %v1298 = vshll.u32 %v1194, 16
      %v1300 = vrot.slane %v1298, 5
      %v1301 = vor.u32 %v1297, %v1300
      %v1302 = vrot.slane %v1301, 4
      %v1304 = vshll.u32 %v1195, 16
      %v1306 = vrot.slane %v1304, 5
      %v1307 = vsel %vm571, %v1302, %v1306
      %s1308 = scalar_lea.vmem %s215, 320
      %v1309 = vld [vmem:[%s1308] sm:$0xf]
      %v1310 = vld [vmem:[%s1308 + $0x4] sm:$0xf]
      %v1311 = vld [vmem:[%s1308 + $0x8] sm:$0xf]
      %v1312 = vld [vmem:[%s1308 + $0xc] sm:$0xf]
      %v1313 = vld [vmem:[%s1308 + $0x10] sm:$0xf]
      %v1314 = vld [vmem:[%s1308 + $0x14] sm:$0xf]
      %v1315 = vld [vmem:[%s1308 + $0x18] sm:$0xf]
      %v1316 = vld [vmem:[%s1308 + $0x1c] sm:$0xf]
      %v1317 = vld [vmem:[%s1308 + $0x20] sm:$0xf]
      %v1318 = vld [vmem:[%s1308 + $0x24] sm:$0xf]
      %v1319 = vld [vmem:[%s1308 + $0x28] sm:$0xf]
      %v1320 = vld [vmem:[%s1308 + $0x2c] sm:$0xf]
      %v1321 = vld [vmem:[%s1308 + $0x30] sm:$0xf]
      %v1322 = vld [vmem:[%s1308 + $0x34] sm:$0xf]
      %v1323 = vld [vmem:[%s1308 + $0x38] sm:$0xf]
      %v1324 = vld [vmem:[%s1308 + $0x3c] sm:$0xf]
      %v1325 = vunpack.c.l.b16 %v1209
      %v1326 = vunpack.c.l.b16 %v1223
      %v1327 = vunpack.c.l.b16 %v1237
      %v1328 = vunpack.c.l.b16 %v1251
      %v1329 = vunpack.c.l.b16 %v1265
      %v1330 = vunpack.c.l.b16 %v1279
      %v1331 = vunpack.c.l.b16 %v1293
      %v1332 = vunpack.c.l.b16 %v1307
      %v1333 = vpack.c.b16 %v1326, %v1325
      %v1334 = vpack.c.b16 %v1328, %v1327
      %v1335 = vpack.c.b16 %v1330, %v1329
      %v1336 = vpack.c.b16 %v1332, %v1331
      %v1357 = vunpack.c.l.b16 %v1309
      %v1358 = vunpack.c.l.b16 %v1310
      %v1359 = vunpack.c.l.b16 %v1311
      %v1360 = vunpack.c.l.b16 %v1312
      %v1361 = vunpack.c.l.b16 %v1313
      %v1362 = vunpack.c.l.b16 %v1314
      %v1363 = vunpack.c.l.b16 %v1315
      %v1364 = vunpack.c.l.b16 %v1316
      %v1365 = vunpack.c.l.b16 %v1317
      %v1366 = vunpack.c.l.b16 %v1318
      %v1367 = vunpack.c.l.b16 %v1319
      %v1368 = vunpack.c.l.b16 %v1320
      %v1369 = vunpack.c.l.b16 %v1321
      %v1370 = vunpack.c.l.b16 %v1322
      %v1371 = vunpack.c.l.b16 %v1323
      %v1372 = vunpack.c.l.b16 %v1324
      %v1373 = vpack.c.b16 %v1358, %v1357
      %v1374 = vpack.c.b16 %v1360, %v1359
      %v1375 = vpack.c.b16 %v1362, %v1361
      %v1376 = vpack.c.b16 %v1364, %v1363
      %v1377 = vpack.c.b16 %v1366, %v1365
      %v1378 = vpack.c.b16 %v1368, %v1367
      %v1379 = vpack.c.b16 %v1370, %v1369
      %v1380 = vpack.c.b16 %v1372, %v1371
      %1389 = vmatprep.subr.bf16.mxu0 0
      %1390 = vmatpush1.bf16.msra.mxu0 %v1373
      %1391 = vmatprep.subr.bf16.mxu0 0
      %1392 = vmatpush1.bf16.msra.mxu0 %v1374
      %1393 = vmatprep.subr.bf16.mxu0 0
      %1394 = vmatpush1.bf16.msra.mxu0 %v1375
      %1395 = vmatprep.subr.bf16.mxu0 0
      %1396 = vmatpush1.bf16.msra.mxu0 %v1376
      %1397 = vmatprep.subr.bf16.mxu0 0
      %1398 = vmatpush1.bf16.msra.mxu0 %v1377
      %1399 = vmatprep.subr.bf16.mxu0 0
      %1400 = vmatpush1.bf16.msra.mxu0 %v1378
      %1401 = vmatprep.subr.bf16.mxu0 0
      %1402 = vmatpush1.bf16.msra.mxu0 %v1379
      %1403 = vmatprep.subr.bf16.mxu0 0
      %1404 = vmatpush1.bf16.msra.mxu0 %v1380
      %1405 = vmatprep.subr.bf16.mxu0 0
      %1406 = vmatpush1.bf16.msra.mxu0 0
      %1407 = vmatprep.subr.bf16.mxu0 0
      %1408 = vmatpush1.bf16.msra.mxu0 0
      %1409 = vmatprep.subr.bf16.mxu0 0
      %1410 = vmatpush1.bf16.msra.mxu0 0
      %1411 = vmatprep.subr.bf16.mxu0 0
      %1412 = vmatpush1.bf16.msra.mxu0 0
      %1413 = vmatprep.subr.bf16.mxu0 0
      %1414 = vmatpush1.bf16.msra.mxu0 0
      %1415 = vmatprep.subr.bf16.mxu0 0
      %1416 = vmatpush1.bf16.msra.mxu0 0
      %1417 = vmatprep.subr.bf16.mxu0 0
      %1418 = vmatpush1.bf16.msra.mxu0 0
      %1419 = vmatprep.subr.bf16.mxu0 0
      %1420 = vmatpush1.bf16.msra.mxu0 0
      %1421 = vmatprep.mubr.bf16.mxu0 0
      %1422 = vmatmul.mubr.bf16.gmra.mrb[0].mxu0 %v1333
      %v1423 = vpop.f32.mrb[0].mxu0
      %v1424 = vadd.f32 0.0, %v1423
      %v1425 = vpop.f32.mrb[0].mxu0
      %v1426 = vpop.f32.mrb[0].mxu0
      %v1427 = vadd.f32 0.0, %v1426
      %v1428 = vpop.f32.mrb[0].mxu0
      %1429 = vmatprep.mubr.bf16.mxu0 0
      %1430 = vmatmul.mubr.bf16.gmra.mrb[0].mxu0 %v1334
      %v1431 = vpop.f32.mrb[0].mxu0
      %v1432 = vadd.f32 0.0, %v1431
      %v1433 = vpop.f32.mrb[0].mxu0
      %v1434 = vpop.f32.mrb[0].mxu0
      %v1435 = vadd.f32 0.0, %v1434
      %v1436 = vpop.f32.mrb[0].mxu0
      %1437 = vmatprep.mubr.bf16.mxu0 0
      %1438 = vmatmul.mubr.bf16.gmra.mrb[0].mxu0 %v1335
      %v1439 = vpop.f32.mrb[0].mxu0
      %v1440 = vadd.f32 0.0, %v1439
      %v1441 = vpop.f32.mrb[0].mxu0
      %v1442 = vpop.f32.mrb[0].mxu0
      %v1443 = vadd.f32 0.0, %v1442
      %v1444 = vpop.f32.mrb[0].mxu0
      %1445 = vmatprep.mubr.bf16.mxu0 0
      %1446 = vmatmul.mubr.bf16.gmra.mrb[0].mxu0 %v1336
      %v1447 = vpop.f32.mrb[0].mxu0
      %v1448 = vadd.f32 0.0, %v1447
      %v1449 = vpop.f32.mrb[0].mxu0
      %v1450 = vpop.f32.mrb[0].mxu0
      %v1451 = vadd.f32 0.0, %v1450
      %v1452 = vpop.f32.mrb[0].mxu0
      %1453 = vdwg.mxu0
      %v1454 = vadd.f32 %v1172, %v1424
      %v1455 = vadd.f32 %v1173, %v1427
      %v1456 = vadd.f32 %v1174, %v1432
      %v1457 = vadd.f32 %v1175, %v1435
      %v1458 = vadd.f32 %v1176, %v1440
      %v1459 = vadd.f32 %v1177, %v1443
      %v1460 = vadd.f32 %v1178, %v1448
      %v1461 = vadd.f32 %v1179, %v1451
      %s1462 = scalar_lea.vmem %s210, 8
      %v1463 = vld [vmem:[%s1462] sm:$0xf]
      %v1464 = vld [vmem:[%s1462 + $0x8] sm:$0xf]
      %v1465 = vld [vmem:[%s1462 + $0x10] sm:$0xf]
      %v1466 = vld [vmem:[%s1462 + $0x18] sm:$0xf]
      %v1467 = vld [vmem:[%s1462 + $0x20] sm:$0xf]
      %v1468 = vld [vmem:[%s1462 + $0x28] sm:$0xf]
      %v1469 = vld [vmem:[%s1462 + $0x30] sm:$0xf]
      %v1470 = vld [vmem:[%s1462 + $0x38] sm:$0xf]
      %s1471 = scalar_lea.vmem %s215, 384
      %v1472 = vld [vmem:[%s1471] sm:$0xf]
      %v1473 = vld [vmem:[%s1471 + $0x4] sm:$0xf]
      %v1474 = vld [vmem:[%s1471 + $0x8] sm:$0xf]
      %v1475 = vld [vmem:[%s1471 + $0xc] sm:$0xf]
      %v1476 = vld [vmem:[%s1471 + $0x10] sm:$0xf]
      %v1477 = vld [vmem:[%s1471 + $0x14] sm:$0xf]
      %v1478 = vld [vmem:[%s1471 + $0x18] sm:$0xf]
      %v1479 = vld [vmem:[%s1471 + $0x1c] sm:$0xf]
      %v1480 = vld [vmem:[%s1471 + $0x20] sm:$0xf]
      %v1481 = vld [vmem:[%s1471 + $0x24] sm:$0xf]
      %v1482 = vld [vmem:[%s1471 + $0x28] sm:$0xf]
      %v1483 = vld [vmem:[%s1471 + $0x2c] sm:$0xf]
      %v1484 = vld [vmem:[%s1471 + $0x30] sm:$0xf]
      %v1485 = vld [vmem:[%s1471 + $0x34] sm:$0xf]
      %v1486 = vld [vmem:[%s1471 + $0x38] sm:$0xf]
      %v1487 = vld [vmem:[%s1471 + $0x3c] sm:$0xf]
      %v1496 = vunpack.c.l.b16 %v1463
      %v1497 = vunpack.c.l.b16 %v1464
      %v1498 = vunpack.c.l.b16 %v1465
      %v1499 = vunpack.c.l.b16 %v1466
      %v1500 = vunpack.c.l.b16 %v1467
      %v1501 = vunpack.c.l.b16 %v1468
      %v1502 = vunpack.c.l.b16 %v1469
      %v1503 = vunpack.c.l.b16 %v1470
      %v1504 = vpack.c.b16 %v1497, %v1496
      %v1505 = vpack.c.b16 %v1499, %v1498
      %v1506 = vpack.c.b16 %v1501, %v1500
      %v1507 = vpack.c.b16 %v1503, %v1502
      %v1528 = vunpack.c.l.b16 %v1472
      %v1529 = vunpack.c.l.b16 %v1473
      %v1530 = vunpack.c.l.b16 %v1474
      %v1531 = vunpack.c.l.b16 %v1475
      %v1532 = vunpack.c.l.b16 %v1476
      %v1533 = vunpack.c.l.b16 %v1477
      %v1534 = vunpack.c.l.b16 %v1478
      %v1535 = vunpack.c.l.b16 %v1479
      %v1536 = vunpack.c.l.b16 %v1480
      %v1537 = vunpack.c.l.b16 %v1481
      %v1538 = vunpack.c.l.b16 %v1482
      %v1539 = vunpack.c.l.b16 %v1483
      %v1540 = vunpack.c.l.b16 %v1484
      %v1541 = vunpack.c.l.b16 %v1485
      %v1542 = vunpack.c.l.b16 %v1486
      %v1543 = vunpack.c.l.b16 %v1487
      %v1544 = vpack.c.b16 %v1529, %v1528
      %v1545 = vpack.c.b16 %v1531, %v1530
      %v1546 = vpack.c.b16 %v1533, %v1532
      %v1547 = vpack.c.b16 %v1535, %v1534
      %v1548 = vpack.c.b16 %v1537, %v1536
      %v1549 = vpack.c.b16 %v1539, %v1538
      %v1550 = vpack.c.b16 %v1541, %v1540
      %v1551 = vpack.c.b16 %v1543, %v1542
      %1560 = vmatprep.subr.bf16.mxu0 0
      %1561 = vmatpush1.bf16.msra.mxu0 %v1544
      %1562 = vmatprep.subr.bf16.mxu0 0
      %1563 = vmatpush1.bf16.msra.mxu0 %v1545
      %1564 = vmatprep.subr.bf16.mxu0 0
      %1565 = vmatpush1.bf16.msra.mxu0 %v1546
      %1566 = vmatprep.subr.bf16.mxu0 0
      %1567 = vmatpush1.bf16.msra.mxu0 %v1547
      %1568 = vmatprep.subr.bf16.mxu0 0
      %1569 = vmatpush1.bf16.msra.mxu0 %v1548
      %1570 = vmatprep.subr.bf16.mxu0 0
      %1571 = vmatpush1.bf16.msra.mxu0 %v1549
      %1572 = vmatprep.subr.bf16.mxu0 0
      %1573 = vmatpush1.bf16.msra.mxu0 %v1550
      %1574 = vmatprep.subr.bf16.mxu0 0
      %1575 = vmatpush1.bf16.msra.mxu0 %v1551
      %1576 = vmatprep.subr.bf16.mxu0 0
      %1577 = vmatpush1.bf16.msra.mxu0 0
      %1578 = vmatprep.subr.bf16.mxu0 0
      %1579 = vmatpush1.bf16.msra.mxu0 0
      %1580 = vmatprep.subr.bf16.mxu0 0
      %1581 = vmatpush1.bf16.msra.mxu0 0
      %1582 = vmatprep.subr.bf16.mxu0 0
      %1583 = vmatpush1.bf16.msra.mxu0 0
      %1584 = vmatprep.subr.bf16.mxu0 0
      %1585 = vmatpush1.bf16.msra.mxu0 0
      %1586 = vmatprep.subr.bf16.mxu0 0
      %1587 = vmatpush1.bf16.msra.mxu0 0
      %1588 = vmatprep.subr.bf16.mxu0 0
      %1589 = vmatpush1.bf16.msra.mxu0 0
      %1590 = vmatprep.subr.bf16.mxu0 0
      %1591 = vmatpush1.bf16.msra.mxu0 0
      %1592 = vmatprep.mubr.bf16.mxu0 0
      %1593 = vmatmul.mubr.bf16.gmra.mrb[0].mxu0 %v1504
      %v1594 = vpop.f32.mrb[0].mxu0
      %v1595 = vadd.f32 0.0, %v1594
      %v1596 = vpop.f32.mrb[0].mxu0
      %v1597 = vpop.f32.mrb[0].mxu0
      %v1598 = vadd.f32 0.0, %v1597
      %v1599 = vpop.f32.mrb[0].mxu0
      %1600 = vmatprep.mubr.bf16.mxu0 0
      %1601 = vmatmul.mubr.bf16.gmra.mrb[0].mxu0 %v1505
      %v1602 = vpop.f32.mrb[0].mxu0
      %v1603 = vadd.f32 0.0, %v1602
      %v1604 = vpop.f32.mrb[0].mxu0
      %v1605 = vpop.f32.mrb[0].mxu0
      %v1606 = vadd.f32 0.0, %v1605
      %v1607 = vpop.f32.mrb[0].mxu0
      %1608 = vmatprep.mubr.bf16.mxu0 0
      %1609 = vmatmul.mubr.bf16.gmra.mrb[0].mxu0 %v1506
      %v1610 = vpop.f32.mrb[0].mxu0
      %v1611 = vadd.f32 0.0, %v1610
      %v1612 = vpop.f32.mrb[0].mxu0
      %v1613 = vpop.f32.mrb[0].mxu0
      %v1614 = vadd.f32 0.0, %v1613
      %v1615 = vpop.f32.mrb[0].mxu0
      %1616 = vmatprep.mubr.bf16.mxu0 0
      %1617 = vmatmul.mubr.bf16.gmra.mrb[0].mxu0 %v1507
      %v1618 = vpop.f32.mrb[0].mxu0
      %v1619 = vadd.f32 0.0, %v1618
      %v1620 = vpop.f32.mrb[0].mxu0
      %v1621 = vpop.f32.mrb[0].mxu0
      %v1622 = vadd.f32 0.0, %v1621
      %v1623 = vpop.f32.mrb[0].mxu0
      %1624 = vdwg.mxu0
      %v1625 = vadd.f32 %v1454, %v1595
      %v1626 = vadd.f32 %v1455, %v1598
      %v1627 = vadd.f32 %v1456, %v1603
      %v1628 = vadd.f32 %v1457, %v1606
      %v1629 = vadd.f32 %v1458, %v1611
      %v1630 = vadd.f32 %v1459, %v1614
      %v1631 = vadd.f32 %v1460, %v1619
      %v1632 = vadd.f32 %v1461, %v1622
      %s1633 = scalar_lea.vmem %s210, 88
      %v1634 = vld [vmem:[%s1633] sm:$0xf]
      %v1635 = vld [vmem:[%s1633 + $0x8] sm:$0xf]
      %v1636 = vld [vmem:[%s1633 + $0x10] sm:$0xf]
      %v1637 = vld [vmem:[%s1633 + $0x18] sm:$0xf]
      %v1638 = vld [vmem:[%s1633 + $0x20] sm:$0xf]
      %v1639 = vld [vmem:[%s1633 + $0x28] sm:$0xf]
      %v1640 = vld [vmem:[%s1633 + $0x30] sm:$0xf]
      %v1641 = vld [vmem:[%s1633 + $0x38] sm:$0xf]
      %s1642 = scalar_lea.vmem %s215, 448
      %v1643 = vld [vmem:[%s1642] sm:$0xf]
      %v1644 = vld [vmem:[%s1642 + $0x4] sm:$0xf]
      %v1645 = vld [vmem:[%s1642 + $0x8] sm:$0xf]
      %v1646 = vld [vmem:[%s1642 + $0xc] sm:$0xf]
      %v1647 = vld [vmem:[%s1642 + $0x10] sm:$0xf]
      %v1648 = vld [vmem:[%s1642 + $0x14] sm:$0xf]
      %v1649 = vld [vmem:[%s1642 + $0x18] sm:$0xf]
      %v1650 = vld [vmem:[%s1642 + $0x1c] sm:$0xf]
      %v1651 = vld [vmem:[%s1642 + $0x20] sm:$0xf]
      %v1652 = vld [vmem:[%s1642 + $0x24] sm:$0xf]
      %v1653 = vld [vmem:[%s1642 + $0x28] sm:$0xf]
      %v1654 = vld [vmem:[%s1642 + $0x2c] sm:$0xf]
      %v1655 = vld [vmem:[%s1642 + $0x30] sm:$0xf]
      %v1656 = vld [vmem:[%s1642 + $0x34] sm:$0xf]
      %v1657 = vld [vmem:[%s1642 + $0x38] sm:$0xf]
      %v1658 = vld [vmem:[%s1642 + $0x3c] sm:$0xf]
      %v1667 = vunpack.c.l.b16 %v1634
      %v1668 = vunpack.c.l.b16 %v1635
      %v1669 = vunpack.c.l.b16 %v1636
      %v1670 = vunpack.c.l.b16 %v1637
      %v1671 = vunpack.c.l.b16 %v1638
      %v1672 = vunpack.c.l.b16 %v1639
      %v1673 = vunpack.c.l.b16 %v1640
      %v1674 = vunpack.c.l.b16 %v1641
      %v1675 = vpack.c.b16 %v1668, %v1667
      %v1676 = vpack.c.b16 %v1670, %v1669
      %v1677 = vpack.c.b16 %v1672, %v1671
      %v1678 = vpack.c.b16 %v1674, %v1673
      %v1699 = vunpack.c.l.b16 %v1643
      %v1700 = vunpack.c.l.b16 %v1644
      %v1701 = vunpack.c.l.b16 %v1645
      %v1702 = vunpack.c.l.b16 %v1646
      %v1703 = vunpack.c.l.b16 %v1647
      %v1704 = vunpack.c.l.b16 %v1648
      %v1705 = vunpack.c.l.b16 %v1649
      %v1706 = vunpack.c.l.b16 %v1650
      %v1707 = vunpack.c.l.b16 %v1651
      %v1708 = vunpack.c.l.b16 %v1652
      %v1709 = vunpack.c.l.b16 %v1653
      %v1710 = vunpack.c.l.b16 %v1654
      %v1711 = vunpack.c.l.b16 %v1655
      %v1712 = vunpack.c.l.b16 %v1656
      %v1713 = vunpack.c.l.b16 %v1657
      %v1714 = vunpack.c.l.b16 %v1658
      %v1715 = vpack.c.b16 %v1700, %v1699
      %v1716 = vpack.c.b16 %v1702, %v1701
      %v1717 = vpack.c.b16 %v1704, %v1703
      %v1718 = vpack.c.b16 %v1706, %v1705
      %v1719 = vpack.c.b16 %v1708, %v1707
      %v1720 = vpack.c.b16 %v1710, %v1709
      %v1721 = vpack.c.b16 %v1712, %v1711
      %v1722 = vpack.c.b16 %v1714, %v1713
      %1731 = vmatprep.subr.bf16.mxu0 0
      %1732 = vmatpush1.bf16.msra.mxu0 %v1715
      %1733 = vmatprep.subr.bf16.mxu0 0
      %1734 = vmatpush1.bf16.msra.mxu0 %v1716
      %1735 = vmatprep.subr.bf16.mxu0 0
      %1736 = vmatpush1.bf16.msra.mxu0 %v1717
      %1737 = vmatprep.subr.bf16.mxu0 0
      %1738 = vmatpush1.bf16.msra.mxu0 %v1718
      %1739 = vmatprep.subr.bf16.mxu0 0
      %1740 = vmatpush1.bf16.msra.mxu0 %v1719
      %1741 = vmatprep.subr.bf16.mxu0 0
      %1742 = vmatpush1.bf16.msra.mxu0 %v1720
      %1743 = vmatprep.subr.bf16.mxu0 0
      %1744 = vmatpush1.bf16.msra.mxu0 %v1721
      %1745 = vmatprep.subr.bf16.mxu0 0
      %1746 = vmatpush1.bf16.msra.mxu0 %v1722
      %1747 = vmatprep.subr.bf16.mxu0 0
      %1748 = vmatpush1.bf16.msra.mxu0 0
      %1749 = vmatprep.subr.bf16.mxu0 0
      %1750 = vmatpush1.bf16.msra.mxu0 0
      %1751 = vmatprep.subr.bf16.mxu0 0
      %1752 = vmatpush1.bf16.msra.mxu0 0
      %1753 = vmatprep.subr.bf16.mxu0 0
      %1754 = vmatpush1.bf16.msra.mxu0 0
      %1755 = vmatprep.subr.bf16.mxu0 0
      %1756 = vmatpush1.bf16.msra.mxu0 0
      %1757 = vmatprep.subr.bf16.mxu0 0
      %1758 = vmatpush1.bf16.msra.mxu0 0
      %1759 = vmatprep.subr.bf16.mxu0 0
      %1760 = vmatpush1.bf16.msra.mxu0 0
      %1761 = vmatprep.subr.bf16.mxu0 0
      %1762 = vmatpush1.bf16.msra.mxu0 0
      %1763 = vmatprep.mubr.bf16.mxu0 0
      %1764 = vmatmul.mubr.bf16.gmra.mrb[0].mxu0 %v1675
      %v1765 = vpop.f32.mrb[0].mxu0
      %v1766 = vadd.f32 0.0, %v1765
      %v1767 = vpop.f32.mrb[0].mxu0
      %v1768 = vpop.f32.mrb[0].mxu0
      %v1769 = vadd.f32 0.0, %v1768
      %v1770 = vpop.f32.mrb[0].mxu0
      %1771 = vmatprep.mubr.bf16.mxu0 0
      %1772 = vmatmul.mubr.bf16.gmra.mrb[0].mxu0 %v1676
      %v1773 = vpop.f32.mrb[0].mxu0
      %v1774 = vadd.f32 0.0, %v1773
      %v1775 = vpop.f32.mrb[0].mxu0
      %v1776 = vpop.f32.mrb[0].mxu0
      %v1777 = vadd.f32 0.0, %v1776
      %v1778 = vpop.f32.mrb[0].mxu0
      %1779 = vmatprep.mubr.bf16.mxu0 0
      %1780 = vmatmul.mubr.bf16.gmra.mrb[0].mxu0 %v1677
      %v1781 = vpop.f32.mrb[0].mxu0
      %v1782 = vadd.f32 0.0, %v1781
      %v1783 = vpop.f32.mrb[0].mxu0
      %v1784 = vpop.f32.mrb[0].mxu0
      %v1785 = vadd.f32 0.0, %v1784
      %v1786 = vpop.f32.mrb[0].mxu0
      %1787 = vmatprep.mubr.bf16.mxu0 0
      %1788 = vmatmul.mubr.bf16.gmra.mrb[0].mxu0 %v1678
      %v1789 = vpop.f32.mrb[0].mxu0
      %v1790 = vadd.f32 0.0, %v1789
      %v1791 = vpop.f32.mrb[0].mxu0
      %v1792 = vpop.f32.mrb[0].mxu0
      %v1793 = vadd.f32 0.0, %v1792
      %v1794 = vpop.f32.mrb[0].mxu0
      %1795 = vdwg.mxu0
      %v1796 = vadd.f32 %v1625, %v1766
      %v1797 = vadd.f32 %v1626, %v1769
      %v1798 = vadd.f32 %v1627, %v1774
      %v1799 = vadd.f32 %v1628, %v1777
      %v1800 = vadd.f32 %v1629, %v1782
      %v1801 = vadd.f32 %v1630, %v1785
      %v1802 = vadd.f32 %v1631, %v1790
      %v1803 = vadd.f32 %v1632, %v1793
      %v1804 = vld [vmem:[%s1462] sm:$0xf]
      %v1805 = vld [vmem:[%s1462 + $0x4] sm:$0x1]
      %v1806 = vld [vmem:[%s1462 + $0x8] sm:$0xf]
      %v1807 = vld [vmem:[%s1462 + $0xc] sm:$0x1]
      %v1808 = vld [vmem:[%s1462 + $0x10] sm:$0xf]
      %v1809 = vld [vmem:[%s1462 + $0x14] sm:$0x1]
      %v1810 = vld [vmem:[%s1462 + $0x18] sm:$0xf]
      %v1811 = vld [vmem:[%s1462 + $0x1c] sm:$0x1]
      %v1812 = vld [vmem:[%s1462 + $0x20] sm:$0xf]
      %v1813 = vld [vmem:[%s1462 + $0x24] sm:$0x1]
      %v1814 = vld [vmem:[%s1462 + $0x28] sm:$0xf]
      %v1815 = vld [vmem:[%s1462 + $0x2c] sm:$0x1]
      %v1816 = vld [vmem:[%s1462 + $0x30] sm:$0xf]
      %v1817 = vld [vmem:[%s1462 + $0x34] sm:$0x1]
      %v1818 = vld [vmem:[%s1462 + $0x38] sm:$0xf]
      %v1819 = vld [vmem:[%s1462 + $0x3c] sm:$0x1]
      %v1821 = vshrl.u32 %v1804, 16
      %v1823 = vrot.slane %v1821, 4
      %v1824 = vshll.u32 %v1804, 16
      %v1826 = vrot.slane %v1824, 5
      %v1827 = vor.u32 %v1823, %v1826
      %v1828 = vrot.slane %v1827, 4
      %v1830 = vshll.u32 %v1805, 16
      %v1832 = vrot.slane %v1830, 5
      %v1833 = vsel %vm571, %v1828, %v1832
      %v1835 = vshrl.u32 %v1806, 16
      %v1837 = vrot.slane %v1835, 4
      %v1838 = vshll.u32 %v1806, 16
      %v1840 = vrot.slane %v1838, 5
      %v1841 = vor.u32 %v1837, %v1840
      %v1842 = vrot.slane %v1841, 4
      %v1844 = vshll.u32 %v1807, 16
      %v1846 = vrot.slane %v1844, 5
      %v1847 = vsel %vm571, %v1842, %v1846
      %v1849 = vshrl.u32 %v1808, 16
      %v1851 = vrot.slane %v1849, 4
      %v1852 = vshll.u32 %v1808, 16
      %v1854 = vrot.slane %v1852, 5
      %v1855 = vor.u32 %v1851, %v1854
      %v1856 = vrot.slane %v1855, 4
      %v1858 = vshll.u32 %v1809, 16
      %v1860 = vrot.slane %v1858, 5
      %v1861 = vsel %vm571, %v1856, %v1860
      %v1863 = vshrl.u32 %v1810, 16
      %v1865 = vrot.slane %v1863, 4
      %v1866 = vshll.u32 %v1810, 16
      %v1868 = vrot.slane %v1866, 5
      %v1869 = vor.u32 %v1865, %v1868
      %v1870 = vrot.slane %v1869, 4
      %v1872 = vshll.u32 %v1811, 16
      %v1874 = vrot.slane %v1872, 5
      %v1875 = vsel %vm571, %v1870, %v1874
      %v1877 = vshrl.u32 %v1812, 16
      %v1879 = vrot.slane %v1877, 4
      %v1880 = vshll.u32 %v1812, 16
      %v1882 = vrot.slane %v1880, 5
      %v1883 = vor.u32 %v1879, %v1882
      %v1884 = vrot.slane %v1883, 4
      %v1886 = vshll.u32 %v1813, 16
      %v1888 = vrot.slane %v1886, 5
      %v1889 = vsel %vm571, %v1884, %v1888
      %v1891 = vshrl.u32 %v1814, 16
      %v1893 = vrot.slane %v1891, 4
      %v1894 = vshll.u32 %v1814, 16
      %v1896 = vrot.slane %v1894, 5
      %v1897 = vor.u32 %v1893, %v1896
      %v1898 = vrot.slane %v1897, 4
      %v1900 = vshll.u32 %v1815, 16
      %v1902 = vrot.slane %v1900, 5
      %v1903 = vsel %vm571, %v1898, %v1902
      %v1905 = vshrl.u32 %v1816, 16
      %v1907 = vrot.slane %v1905, 4
      %v1908 = vshll.u32 %v1816, 16
      %v1910 = vrot.slane %v1908, 5
      %v1911 = vor.u32 %v1907, %v1910
      %v1912 = vrot.slane %v1911, 4
      %v1914 = vshll.u32 %v1817, 16
      %v1916 = vrot.slane %v1914, 5
      %v1917 = vsel %vm571, %v1912, %v1916
      %v1919 = vshrl.u32 %v1818, 16
      %v1921 = vrot.slane %v1919, 4
      %v1922 = vshll.u32 %v1818, 16
      %v1924 = vrot.slane %v1922, 5
      %v1925 = vor.u32 %v1921, %v1924
      %v1926 = vrot.slane %v1925, 4
      %v1928 = vshll.u32 %v1819, 16
      %v1930 = vrot.slane %v1928, 5
      %v1931 = vsel %vm571, %v1926, %v1930
      %s1932 = scalar_lea.vmem %s215, 512
      %v1933 = vld [vmem:[%s1932] sm:$0xf]
      %v1934 = vld [vmem:[%s1932 + $0x4] sm:$0xf]
      %v1935 = vld [vmem:[%s1932 + $0x8] sm:$0xf]
      %v1936 = vld [vmem:[%s1932 + $0xc] sm:$0xf]
      %v1937 = vld [vmem:[%s1932 + $0x10] sm:$0xf]
      %v1938 = vld [vmem:[%s1932 + $0x14] sm:$0xf]
      %v1939 = vld [vmem:[%s1932 + $0x18] sm:$0xf]
      %v1940 = vld [vmem:[%s1932 + $0x1c] sm:$0xf]
      %v1941 = vld [vmem:[%s1932 + $0x20] sm:$0xf]
      %v1942 = vld [vmem:[%s1932 + $0x24] sm:$0xf]
      %v1943 = vld [vmem:[%s1932 + $0x28] sm:$0xf]
      %v1944 = vld [vmem:[%s1932 + $0x2c] sm:$0xf]
      %v1945 = vld [vmem:[%s1932 + $0x30] sm:$0xf]
      %v1946 = vld [vmem:[%s1932 + $0x34] sm:$0xf]
      %v1947 = vld [vmem:[%s1932 + $0x38] sm:$0xf]
      %v1948 = vld [vmem:[%s1932 + $0x3c] sm:$0xf]
      %v1949 = vunpack.c.l.b16 %v1833
      %v1950 = vunpack.c.l.b16 %v1847
      %v1951 = vunpack.c.l.b16 %v1861
      %v1952 = vunpack.c.l.b16 %v1875
      %v1953 = vunpack.c.l.b16 %v1889
      %v1954 = vunpack.c.l.b16 %v1903
      %v1955 = vunpack.c.l.b16 %v1917
      %v1956 = vunpack.c.l.b16 %v1931
      %v1957 = vpack.c.b16 %v1950, %v1949
      %v1958 = vpack.c.b16 %v1952, %v1951
      %v1959 = vpack.c.b16 %v1954, %v1953
      %v1960 = vpack.c.b16 %v1956, %v1955
      %v1981 = vunpack.c.l.b16 %v1933
      %v1982 = vunpack.c.l.b16 %v1934
      %v1983 = vunpack.c.l.b16 %v1935
      %v1984 = vunpack.c.l.b16 %v1936
      %v1985 = vunpack.c.l.b16 %v1937
      %v1986 = vunpack.c.l.b16 %v1938
      %v1987 = vunpack.c.l.b16 %v1939
      %v1988 = vunpack.c.l.b16 %v1940
      %v1989 = vunpack.c.l.b16 %v1941
      %v1990 = vunpack.c.l.b16 %v1942
      %v1991 = vunpack.c.l.b16 %v1943
      %v1992 = vunpack.c.l.b16 %v1944
      %v1993 = vunpack.c.l.b16 %v1945
      %v1994 = vunpack.c.l.b16 %v1946
      %v1995 = vunpack.c.l.b16 %v1947
      %v1996 = vunpack.c.l.b16 %v1948
      %v1997 = vpack.c.b16 %v1982, %v1981
      %v1998 = vpack.c.b16 %v1984, %v1983
      %v1999 = vpack.c.b16 %v1986, %v1985
      %v2000 = vpack.c.b16 %v1988, %v1987
      %v2001 = vpack.c.b16 %v1990, %v1989
      %v2002 = vpack.c.b16 %v1992, %v1991
      %v2003 = vpack.c.b16 %v1994, %v1993
      %v2004 = vpack.c.b16 %v1996, %v1995
      %2013 = vmatprep.subr.bf16.mxu0 0
      %2014 = vmatpush1.bf16.msra.mxu0 %v1997
      %2015 = vmatprep.subr.bf16.mxu0 0
      %2016 = vmatpush1.bf16.msra.mxu0 %v1998
      %2017 = vmatprep.subr.bf16.mxu0 0
      %2018 = vmatpush1.bf16.msra.mxu0 %v1999
      %2019 = vmatprep.subr.bf16.mxu0 0
      %2020 = vmatpush1.bf16.msra.mxu0 %v2000
      %2021 = vmatprep.subr.bf16.mxu0 0
      %2022 = vmatpush1.bf16.msra.mxu0 %v2001
      %2023 = vmatprep.subr.bf16.mxu0 0
      %2024 = vmatpush1.bf16.msra.mxu0 %v2002
      %2025 = vmatprep.subr.bf16.mxu0 0
      %2026 = vmatpush1.bf16.msra.mxu0 %v2003
      %2027 = vmatprep.subr.bf16.mxu0 0
      %2028 = vmatpush1.bf16.msra.mxu0 %v2004
      %2029 = vmatprep.subr.bf16.mxu0 0
      %2030 = vmatpush1.bf16.msra.mxu0 0
      %2031 = vmatprep.subr.bf16.mxu0 0
      %2032 = vmatpush1.bf16.msra.mxu0 0
      %2033 = vmatprep.subr.bf16.mxu0 0
      %2034 = vmatpush1.bf16.msra.mxu0 0
      %2035 = vmatprep.subr.bf16.mxu0 0
      %2036 = vmatpush1.bf16.msra.mxu0 0
      %2037 = vmatprep.subr.bf16.mxu0 0
      %2038 = vmatpush1.bf16.msra.mxu0 0
      %2039 = vmatprep.subr.bf16.mxu0 0
      %2040 = vmatpush1.bf16.msra.mxu0 0
      %2041 = vmatprep.subr.bf16.mxu0 0
      %2042 = vmatpush1.bf16.msra.mxu0 0
      %2043 = vmatprep.subr.bf16.mxu0 0
      %2044 = vmatpush1.bf16.msra.mxu0 0
      %2045 = vmatprep.mubr.bf16.mxu0 0
      %2046 = vmatmul.mubr.bf16.gmra.mrb[0].mxu0 %v1957
      %v2047 = vpop.f32.mrb[0].mxu0
      %v2048 = vadd.f32 0.0, %v2047
      %v2049 = vpop.f32.mrb[0].mxu0
      %v2050 = vpop.f32.mrb[0].mxu0
      %v2051 = vadd.f32 0.0, %v2050
      %v2052 = vpop.f32.mrb[0].mxu0
      %2053 = vmatprep.mubr.bf16.mxu0 0
      %2054 = vmatmul.mubr.bf16.gmra.mrb[0].mxu0 %v1958
      %v2055 = vpop.f32.mrb[0].mxu0
      %v2056 = vadd.f32 0.0, %v2055
      %v2057 = vpop.f32.mrb[0].mxu0
      %v2058 = vpop.f32.mrb[0].mxu0
      %v2059 = vadd.f32 0.0, %v2058
      %v2060 = vpop.f32.mrb[0].mxu0
      %2061 = vmatprep.mubr.bf16.mxu0 0
      %2062 = vmatmul.mubr.bf16.gmra.mrb[0].mxu0 %v1959
      %v2063 = vpop.f32.mrb[0].mxu0
      %v2064 = vadd.f32 0.0, %v2063
      %v2065 = vpop.f32.mrb[0].mxu0
      %v2066 = vpop.f32.mrb[0].mxu0
      %v2067 = vadd.f32 0.0, %v2066
      %v2068 = vpop.f32.mrb[0].mxu0
      %2069 = vmatprep.mubr.bf16.mxu0 0
      %2070 = vmatmul.mubr.bf16.gmra.mrb[0].mxu0 %v1960
      %v2071 = vpop.f32.mrb[0].mxu0
      %v2072 = vadd.f32 0.0, %v2071
      %v2073 = vpop.f32.mrb[0].mxu0
      %v2074 = vpop.f32.mrb[0].mxu0
      %v2075 = vadd.f32 0.0, %v2074
      %v2076 = vpop.f32.mrb[0].mxu0
      %2077 = vdwg.mxu0
      %v2078 = vadd.f32 %v1796, %v2048
      %v2079 = vadd.f32 %v1797, %v2051
      %v2080 = vadd.f32 %v1798, %v2056
      %v2081 = vadd.f32 %v1799, %v2059
      %v2082 = vadd.f32 %v1800, %v2064
      %v2083 = vadd.f32 %v1801, %v2067
      %v2084 = vadd.f32 %v1802, %v2072
      %v2085 = vadd.f32 %v1803, %v2075
      %v2086 = vld [vmem:[%s218] sm:$0x1]
      %v2088 = vlaneseq
      %v2089 = vshrl.u32 %v2088, 7
      %v2090 = vsub.s32 0, %v2089
      %v2091 = vrot.slane %v2086, %v2090
      %v2093 = vadd.f32 %v2078, %v2091
      %v2094 = vadd.f32 %v2079, %v2091
      %v2095 = vadd.f32 %v2080, %v2091
      %v2096 = vadd.f32 %v2081, %v2091
      %v2097 = vadd.f32 %v2082, %v2091
      %v2098 = vadd.f32 %v2083, %v2091
      %v2099 = vadd.f32 %v2084, %v2091
      %v2100 = vadd.f32 %v2085, %v2091
      %v2101 = vmax.f32 %v2093, 0.0
      %v2102 = vmax.f32 %v2094, 0.0
      %v2103 = vmax.f32 %v2095, 0.0
      %v2104 = vmax.f32 %v2096, 0.0
      %v2105 = vmax.f32 %v2097, 0.0
      %v2106 = vmax.f32 %v2098, 0.0
      %v2107 = vmax.f32 %v2099, 0.0
      %v2108 = vmax.f32 %v2100, 0.0
      %v2109 = vpack.c.bf16 %v2102, %v2101
      %v2110 = vpack.c.bf16 %v2104, %v2103
      %v2111 = vpack.c.bf16 %v2106, %v2105
      %v2112 = vpack.c.bf16 %v2108, %v2107
      %v2117 = vunpack.c.l.b16 %v2109
      %v2118 = vunpack.c.h.b16 %v2109
      %v2119 = vunpack.c.l.b16 %v2110
      %v2120 = vunpack.c.h.b16 %v2110
      %v2121 = vunpack.c.l.b16 %v2111
      %v2122 = vunpack.c.h.b16 %v2111
      %v2123 = vunpack.c.l.b16 %v2112
      %v2124 = vunpack.c.h.b16 %v2112
      %v2125 = vpack.c.b16 %v2117, %v2117
      %v2126 = vpack.c.b16 %v2118, %v2118
      %v2127 = vpack.c.b16 %v2119, %v2119
      %v2128 = vpack.c.b16 %v2120, %v2120
      %v2129 = vpack.c.b16 %v2121, %v2121
      %v2130 = vpack.c.b16 %v2122, %v2122
      %v2131 = vpack.c.b16 %v2123, %v2123
      %v2132 = vpack.c.b16 %v2124, %v2124
      %2141 = vst [vmem:[%s226] sm:$0xf] %v2125
      %2142 = vst [vmem:[%s226 + $0x4] sm:$0xf] %v2126
      %2143 = vst [vmem:[%s226 + $0x8] sm:$0xf] %v2127
      %2144 = vst [vmem:[%s226 + $0xc] sm:$0xf] %v2128
      %2145 = vst [vmem:[%s226 + $0x10] sm:$0xf] %v2129
      %2146 = vst [vmem:[%s226 + $0x14] sm:$0xf] %v2130
      %2147 = vst [vmem:[%s226 + $0x18] sm:$0xf] %v2131
      %2148 = vst [vmem:[%s226 + $0x1c] sm:$0xf] %v2132
      %s2149 = smul.u32 8, %s18
      %p2150 = scmp.lt.s32.totalorder %s2149, 15
      %s2151 = scalar_select %p2150, %s2149, 15
      %p2152 = scmp.lt.s32.totalorder %s19, 0
      %s2153 = scalar_select %p2152, %s19, 0
      %s2154 = sadd.s32 %s2153, %s2151
      %s2155 = smul.addr %s2154, 4
      %s2156 = scalar_lea.vmem %s3, %s2155
      // Predicated region
      $region33: #{bottleneck_forward.5} parent=31 // pred_check
        %p2157 = pneg %p124
      $region34: #{bottleneck_forward.5} parent=31 // pred_check_branch
        %2159 = sbr.rel (%p2157) target = $region36
      $region35: #{bottleneck_forward.5} parent=31 // pred_region
        %s2160 = smul.u32 8, %s18
      $region36: #{bottleneck_forward.5} parent=31 // pred_fallthru
        _
    $region32: #{bottleneck_forward.5} parent=5 // pred_fallthru
      _
    %p2161 = scmp.le.s32.totalorder 2, %s9
    // Predicated region
    $region37: #{bottleneck_forward.5} parent=5 // pred_check
      %p2162 = pneg %p2161
    $region38: #{bottleneck_forward.5} parent=5 // pred_check_branch
      %2164 = sbr.rel (%p2162) target = $region40
    $region39: #{bottleneck_forward.5} parent=5 // pred_region
      %s2165 = ssub.s32 %s9, 2
      // Predicated region
      $region41: #{bottleneck_forward.5} parent=39 // pred_check
        %p2166 = pneg %p130
      $region42: #{bottleneck_forward.5} parent=39 // pred_check_branch
        %2168 = sbr.rel (%p2166) target = $region44
      $region43: #{bottleneck_forward.5} parent=39 // pred_region
        %s2169 = smul.u32 8, %s20
        %p2170 = scmp.lt.s32.totalorder %s2169, 15
        %s2171 = scalar_select %p2170, %s2169, 15
        %p2172 = scmp.lt.s32.totalorder %s21, 0
        %s2173 = scalar_select %p2172, %s21, 0
        %s2174 = sadd.s32 %s2173, %s2171
        %s2175 = smul.addr %s2174, 4
        %s2176 = scalar_lea.vmem %s3, %s2175
      $region44: #{bottleneck_forward.5} parent=39 // pred_fallthru
        _
    $region40: #{bottleneck_forward.5} parent=5 // pred_fallthru
      _
  $region6: #{bottleneck_forward.5} parent=0 // loop_footer
    %s13 = sadd.s32 1, %s9
  $region7: #{bottleneck_forward.5} parent=0 // loop_footer_branch
    %8 = sbr.rel target = $region3
  $region8: #{bottleneck_forward.5} parent=0 // loop_exit
    _

</llo_original>
